<compile_context>
chip_gen: v7x
topology: tpu7x:2x2x1
jax: 0.10.0
libtpu: 0.0.40
codegen_flags: <defaults>
</compile_context>

<pallas_src>
import numpy as np
import jax
import jax.numpy as jnp
from jax import lax
from jax.experimental import pallas as pl
from jax.experimental.pallas import tpu as pltpu

NEG_SLOPE = 0.01          # nn.LeakyReLU default
LAT = 16                  # latent_space_shape

# flattened activation widths (lane-padded to 128 multiples except the input,
# which is left at its natural width and handled as a full-extent block)
IN_RAW = 4 * 13 * 13                   # 676   input  (4, 13, 13)
L1_RAW, L1_PAD = 15 * 6 * 6, 640       # conv1 (15, 6, 6)
L2_RAW, L2_PAD = 20 * 4 * 4, 384       # conv2 (20, 4, 4)
L3_RAW, L3_PAD = 10 * 2 * 2, 128       # conv3 (10, 2, 2)
LAT_PAD = 128                          # mu / logvar / z (lane-padded)
HEAD_PAD = 2 * LAT_PAD                 # fused mu|logvar head width


def _round_up(n, m):
    return ((n + m - 1) // m) * m


def _ceil_div(a, b):
    return -(-a // b)


# ----------------------------- Pallas kernel -------------------------------

def _leaky(v):
    return jnp.where(v >= 0, v, NEG_SLOPE * v)


def _make_kernel(batch, tile_m):
    """Kernel closes over the real batch size (for in-kernel KLD row masking)
    and the tile row count."""

    def kernel(x_ref, m1_ref, b1_ref, m2_ref, b2_ref, m3_ref, b3_ref,
               wh_ref, bh_ref, noise_ref, z_ref, kld_ref):
        # Conv2d(4,15,k=3,s=2) + LeakyReLU  (dense matmul on flattened CHW)
        h = jnp.dot(x_ref[...], m1_ref[...],
                    preferred_element_type=jnp.float32) + b1_ref[...]
        h = _leaky(h).astype(jnp.bfloat16)
        # Conv2d(15,20,k=3,s=1) + LeakyReLU
        h = jnp.dot(h, m2_ref[...],
                    preferred_element_type=jnp.float32) + b2_ref[...]
        h = _leaky(h).astype(jnp.bfloat16)
        # Conv2d(20,10,k=2,s=2) + LeakyReLU
        h = jnp.dot(h, m3_ref[...],
                    preferred_element_type=jnp.float32) + b3_ref[...]
        h = _leaky(h).astype(jnp.bfloat16)
        # fused mu | logvar heads: one (128, 256) matmul, split by lane
        heads = jnp.dot(h, wh_ref[...],
                        preferred_element_type=jnp.float32) + bh_ref[...]
        mu = heads[:, :LAT_PAD]
        lv = heads[:, LAT_PAD:]
        sigma = jnp.exp(lv)                       # PyTorch: sigma = logvar.exp()
        z_ref[...] = mu + sigma * noise_ref[...]  # shared noise vector

        # in-kernel KLD partial reduction.
        # Padded latent lanes are exactly 0 (mu=lv=0, sigma=1 -> term 0);
        # padded batch rows (bias-driven, nonzero) are masked here.
        row = (pl.program_id(0) * tile_m
               + lax.broadcasted_iota(jnp.int32, (tile_m, LAT_PAD), 0))
        valid = (row < batch).astype(jnp.float32)
        lane_sums = jnp.sum((1.0 + lv - mu * mu - sigma) * valid,
                            axis=0, keepdims=True)           # (1, 128)
        # fill the (8,128) output block; wrapper reads row 0 of each block
        kld_ref[...] = jnp.broadcast_to(lane_sums, (8, LAT_PAD))

    return kernel


# ----------------------- parameter setup (plain glue) ----------------------

def conv2d_as_matrix(w, stride, hin, win):
    """Dense matrix M s.t. flat_out = M @ flat_in for a (valid) Conv2d.

    w: (Cout, Cin, kH, kW) -- PyTorch Conv2d weight layout.
    flat layout is (C, H, W) C-order on both sides (== PyTorch .view()).
    """
    cout, cin, kh_, kw_ = w.shape
    ho = (hin - kh_) // stride + 1
    wo = (win - kw_) // stride + 1
    m = np.zeros((cout * ho * wo, cin * hin * win), dtype=np.float32)
    for co in range(cout):
        for i in range(ho):
            for j in range(wo):
                row = (co * ho + i) * wo + j
                for ci in range(cin):
                    for kh in range(kh_):
                        for kw in range(kw_):
                            col = (ci * hin + (i * stride + kh)) * win \
                                  + (j * stride + kw)
                            m[row, col] += w[co, ci, kh, kw]
    return m, ho, wo


def _pad2(a, rows, cols):
    out = np.zeros((rows, cols), np.float32)
    out[:a.shape[0], :a.shape[1]] = a
    return out


def make_params():
    keys = jax.random.split(jax.random.PRNGKey(42), 10)

    def rnd(k, shape, scale=0.1):
        return np.asarray(jax.random.normal(k, shape, jnp.float32)) * scale

    def bf16_round(a):  # master weights live in bf16 -> keep reference exact
        return np.asarray(jnp.asarray(a, jnp.bfloat16).astype(jnp.float32))

    w1 = bf16_round(rnd(keys[0], (15, 4, 3, 3)))   # Conv2d(4, 15, 3, s=2)
    b1 = rnd(keys[1], (15,))
    w2 = bf16_round(rnd(keys[2], (20, 15, 3, 3)))  # Conv2d(15, 20, 3, s=1)
    b2 = rnd(keys[3], (20,))
    w3 = bf16_round(rnd(keys[4], (10, 20, 2, 2)))  # Conv2d(20, 10, 2, s=2)
    b3 = rnd(keys[5], (10,))
    wmu = bf16_round(rnd(keys[6], (LAT, L3_RAW)))  # Linear(40, 16)
    bmu = rnd(keys[7], (LAT,))
    wlv = bf16_round(rnd(keys[8], (LAT, L3_RAW)))  # Linear(40, 16)
    blv = rnd(keys[9], (LAT,))

    m1, h1, w1s = conv2d_as_matrix(w1, stride=2, hin=13, win=13)   # 13x13 -> 6x6
    m2, h2, w2s = conv2d_as_matrix(w2, stride=1, hin=h1, win=w1s)  # 6x6  -> 4x4
    m3, h3, w3s = conv2d_as_matrix(w3, stride=2, hin=h2, win=w2s)  # 4x4  -> 2x2

    # fused mu|logvar head: (128, 256) weight, (1, 256) bias
    whead = np.concatenate([_pad2(wmu.T, L3_PAD, LAT_PAD),
                            _pad2(wlv.T, L3_PAD, LAT_PAD)], axis=1)
    bhead = np.concatenate([_pad2(bmu[None, :], 1, LAT_PAD),
                            _pad2(blv[None, :], 1, LAT_PAD)], axis=1)

    kernel_args = dict(
        m1t=jnp.asarray(_pad2(m1.T, IN_RAW, L1_PAD), jnp.bfloat16),
        b1=jnp.asarray(_pad2(np.repeat(b1, h1 * w1s)[None, :], 1, L1_PAD)),
        m2t=jnp.asarray(_pad2(m2.T, L1_PAD, L2_PAD), jnp.bfloat16),
        b2=jnp.asarray(_pad2(np.repeat(b2, h2 * w2s)[None, :], 1, L2_PAD)),
        m3t=jnp.asarray(_pad2(m3.T, L2_PAD, L3_PAD), jnp.bfloat16),
        b3=jnp.asarray(_pad2(np.repeat(b3, h3 * w3s)[None, :], 1, L3_PAD)),
        whead=jnp.asarray(whead, jnp.bfloat16),
        bhead=jnp.asarray(bhead),
    )
    raw = dict(w1=w1, b1=b1, w2=w2, b2=b2, w3=w3, b3=b3,
               wmu=wmu, bmu=bmu, wlv=wlv, blv=blv)
    return kernel_args, raw


# ------------------------------- wrapper ------------------------------------

def _pick_tiling(B, max_tile_m=512):
    """Pick (tile_m, b_pad): tiles are multiples of 16 rows (bf16 packing),
    padding waste < 1 tile, and >= 2 grid steps whenever B > 16 so the
    'parallel' batch axis can shard over v7x's two TensorCores."""
    if B <= 16:
        t = max(8, _round_up(B, 8))
        return t, t
    min_steps = max(2, _ceil_div(B, max_tile_m))
    best = None
    for n_steps in range(min_steps, min_steps + 4):
        tile = min(max_tile_m, _round_up(_ceil_div(B, n_steps), 16))
        b_pad = _round_up(B, tile)
        cand = (b_pad - B, n_steps, tile, b_pad)   # minimize waste, then steps
        if best is None or cand < best:
            best = cand
        if cand[0] == 0:
            break
    return best[2], best[3]


def encoder_forward(x, p, noise, max_tile_m=512):
    """x: (B, 4, 13, 13), noise: (16,)  ->  (z: (B, 16), KLD scalar)."""
    B = x.shape[0]
    tile_m, b_pad = _pick_tiling(B, max_tile_m)
    n_steps = b_pad // tile_m

    # Stream activations as bf16; last dim stays at its natural 676 width
    # (full-extent block), so no separate lane-pad pass over x is needed.
    x_flat = x.reshape(B, IN_RAW).astype(jnp.bfloat16)
    x_in = jnp.pad(x_flat, ((0, b_pad - B), (0, 0))) if b_pad != B else x_flat
    noise_pad = jnp.pad(noise[None, :].astype(jnp.float32),
                        ((0, 0), (0, LAT_PAD - noise.shape[0])))

    def const(arr):  # DMA'd once, VMEM-resident across the grid, single-buffered
        return pl.BlockSpec(arr.shape, lambda i: (0, 0),
                            pipeline_mode=pl.Buffered(1))

    in_specs = [
        pl.BlockSpec((tile_m, IN_RAW), lambda i: (i, 0)),
        const(p["m1t"]), const(p["b1"]),
        const(p["m2t"]), const(p["b2"]),
        const(p["m3t"]), const(p["b3"]),
        const(p["whead"]), const(p["bhead"]),
        const(noise_pad),
    ]
    out_specs = (
        pl.BlockSpec((tile_m, LAT_PAD), lambda i: (i, 0)),   # z
        pl.BlockSpec((8, LAT_PAD), lambda i: (i, 0)),        # per-step KLD partial
    )

    weight_bytes = sum(int(v.size) * v.dtype.itemsize for v in p.values())
    flops = 2 * b_pad * (IN_RAW * L1_PAD + L1_PAD * L2_PAD
                         + L2_PAD * L3_PAD + L3_PAD * HEAD_PAD)
    bytes_accessed = (weight_bytes
                      + b_pad * IN_RAW * 2          # bf16 activations in
                      + b_pad * LAT_PAD * 4         # z out
                      + n_steps * 8 * LAT_PAD * 4)  # kld partials out
    cost = pl.CostEstimate(flops=int(flops),
                           transcendentals=int(b_pad * LAT_PAD),
                           bytes_accessed=int(bytes_accessed))

    z_pad, kld_parts = pl.pallas_call(
        _make_kernel(B, tile_m),
        out_shape=(jax.ShapeDtypeStruct((b_pad, LAT_PAD), jnp.float32),
                   jax.ShapeDtypeStruct((n_steps * 8, LAT_PAD), jnp.float32)),
        grid_spec=pltpu.PrefetchScalarGridSpec(
            num_scalar_prefetch=0,
            grid=(n_steps,),
            in_specs=in_specs,
            out_specs=out_specs),
        compiler_params=pltpu.CompilerParams(
            dimension_semantics=("parallel",)),
        cost_estimate=cost,
    )(x_in, p["m1t"], p["b1"], p["m2t"], p["b2"], p["m3t"], p["b3"],
      p["whead"], p["bhead"], noise_pad)

    z = z_pad[:B, :LAT]
    # row 0 of each (8,128) partial block holds the masked lane sums
    kld = -0.5 * jnp.sum(kld_parts.reshape(n_steps, 8, LAT_PAD)[:, 0, :])
    return z, kld


# ---------------------------- numpy reference --------------------------------

def _conv2d_np(x, w, b, stride):
    cout, cin, kh, kw = w.shape
    H, W = x.shape[1:]
    ho = (H - kh) // stride + 1
    wo = (W - kw) // stride + 1
    out = np.zeros((cout, ho, wo), dtype=np.float64)
    for i in range(ho):
        for j in range(wo):
            patch = x[:, i * stride:i * stride + kh, j * stride:j * stride + kw]
            out[:, i, j] = np.tensordot(w, patch, axes=([1, 2, 3], [0, 1, 2]))
    return out + b[:, None, None]


def encoder_reference_np(x, raw, noise):
    lr = lambda v: np.where(v >= 0, v, NEG_SLOPE * v)
    zs = []
    kld = 0.0
    for n in range(x.shape[0]):
        h = lr(_conv2d_np(x[n], raw["w1"], raw["b1"], 2))
        h = lr(_conv2d_np(h, raw["w2"], raw["b2"], 1))
        h = lr(_conv2d_np(h, raw["w3"], raw["b3"], 2))
        hf = h.reshape(-1)                                  # (40,) channel-major
        mu = hf @ raw["wmu"].T + raw["bmu"]
        lv = hf @ raw["wlv"].T + raw["blv"]
        sigma = np.exp(lv)
        kld += -0.5 * np.sum(1.0 + lv - mu ** 2 - sigma)
        zs.append(mu + sigma * noise)
    return np.stack(zs).astype(np.float32), np.float32(kld)


# --------------------------------- main --------------------------------------

if __name__ == "__main__":
    kernel_args, raw = make_params()

    key = jax.random.PRNGKey(0)
    kx, kn = jax.random.split(key)
    B = 48                                                   # -> 3 grid steps of 16 rows
    x = jax.random.normal(kx, (B, 4, 13, 13), jnp.float32)
    x = x.astype(jnp.bfloat16).astype(jnp.float32)           # bf16-exact inputs
    noise = jax.random.normal(kn, (LAT,), jnp.float32)       # torch.randn(16) equiv

    z, kld = encoder_forward(x, kernel_args, noise)
    z = jax.block_until_ready(z)
    kld = jax.block_until_ready(kld)

    z_ref, kld_ref = encoder_reference_np(np.asarray(x, np.float64), raw,
                                          np.asarray(noise, np.float64))
    assert z.shape == (B, LAT), z.shape
    # bf16 weights / bf16 activation streaming -> ~1e-2 level agreement
    np.testing.assert_allclose(np.asarray(z), z_ref, rtol=2e-2, atol=2e-2)
    np.testing.assert_allclose(float(kld), float(kld_ref), rtol=5e-2, atol=5e-2)

    print("KERNEL_OK")
</pallas_src>

<mosaic_0001>
module attributes {stable_mosaic.version = 11 : i64} {
  func.func @kernel(%arg0: i32, %arg1: memref<16x676xbf16, #tpu.memory_space<vmem>>, %arg2: memref<676x640xbf16, #tpu.memory_space<vmem>>, %arg3: memref<1x640xf32, #tpu.memory_space<vmem>>, %arg4: memref<640x384xbf16, #tpu.memory_space<vmem>>, %arg5: memref<1x384xf32, #tpu.memory_space<vmem>>, %arg6: memref<384x128xbf16, #tpu.memory_space<vmem>>, %arg7: memref<1x128xf32, #tpu.memory_space<vmem>>, %arg8: memref<128x256xbf16, #tpu.memory_space<vmem>>, %arg9: memref<1x256xf32, #tpu.memory_space<vmem>>, %arg10: memref<1x128xf32, #tpu.memory_space<vmem>>, %arg11: memref<16x128xf32, #tpu.memory_space<vmem>>, %arg12: memref<8x128xf32, #tpu.memory_space<vmem>>) attributes {dimension_semantics = [#tpu.dimension_semantics<parallel>], iteration_bounds = array<i64: 3>, scalar_prefetch = 0 : i64, scratch_operands = 0 : i64, tpu.core_type = #tpu.core_type<tc>, window_params = [{transform_indices = @transform_0, window_bounds = array<i64: 16, 676>}, {pipeline_mode = #tpu.pipeline_mode<synchronous>, transform_indices = @transform_1, window_bounds = array<i64: 676, 640>}, {pipeline_mode = #tpu.pipeline_mode<synchronous>, transform_indices = @transform_2, window_bounds = array<i64: 1, 640>}, {pipeline_mode = #tpu.pipeline_mode<synchronous>, transform_indices = @transform_3, window_bounds = array<i64: 640, 384>}, {pipeline_mode = #tpu.pipeline_mode<synchronous>, transform_indices = @transform_4, window_bounds = array<i64: 1, 384>}, {pipeline_mode = #tpu.pipeline_mode<synchronous>, transform_indices = @transform_5, window_bounds = array<i64: 384, 128>}, {pipeline_mode = #tpu.pipeline_mode<synchronous>, transform_indices = @transform_6, window_bounds = array<i64: 1, 128>}, {pipeline_mode = #tpu.pipeline_mode<synchronous>, transform_indices = @transform_7, window_bounds = array<i64: 128, 256>}, {pipeline_mode = #tpu.pipeline_mode<synchronous>, transform_indices = @transform_8, window_bounds = array<i64: 1, 256>}, {pipeline_mode = #tpu.pipeline_mode<synchronous>, transform_indices = @transform_9, window_bounds = array<i64: 1, 128>}, {transform_indices = @transform_10, window_bounds = array<i64: 16, 128>}, {transform_indices = @transform_11, window_bounds = array<i64: 8, 128>}]} {
    %c0 = arith.constant 0 : index
    %c0_0 = arith.constant 0 : index
    %0 = vector.load %arg1[%c0, %c0_0] : memref<16x676xbf16, #tpu.memory_space<vmem>>, vector<16x676xbf16>
    %c0_1 = arith.constant 0 : index
    %c0_2 = arith.constant 0 : index
    %1 = vector.load %arg2[%c0_1, %c0_2] : memref<676x640xbf16, #tpu.memory_space<vmem>>, vector<676x640xbf16>
    %cst = arith.constant dense<0.000000e+00> : vector<16x640xf32>
    %2 = tpu.matmul %0, %1, %cst {dimension_numbers = #tpu.dot_dimension_numbers<[1], [0], [0], [1], [0, 0, 1, 1], [], []>} : vector<16x676xbf16>, vector<676x640xbf16>, vector<16x640xf32> -> vector<16x640xf32>
    %c0_3 = arith.constant 0 : index
    %c0_4 = arith.constant 0 : index
    %3 = vector.load %arg3[%c0_3, %c0_4] : memref<1x640xf32, #tpu.memory_space<vmem>>, vector<1x640xf32>
    %4 = vector.broadcast %3 : vector<1x640xf32> to vector<16x640xf32>
    %5 = arith.addf %2, %4 : vector<16x640xf32>
    %cst_5 = arith.constant 0.000000e+00 : f32
    %6 = vector.broadcast %cst_5 : f32 to vector<16x640xf32>
    %7 = arith.cmpf oge, %5, %6 : vector<16x640xf32>
    %cst_6 = arith.constant 0.00999999977 : f32
    %8 = vector.broadcast %cst_6 : f32 to vector<16x640xf32>
    %9 = arith.mulf %8, %5 : vector<16x640xf32>
    %10 = arith.select %7, %5, %9 : vector<16x640xi1>, vector<16x640xf32>
    %11 = arith.truncf %10 : vector<16x640xf32> to vector<16x640xbf16>
    %c0_7 = arith.constant 0 : index
    %c0_8 = arith.constant 0 : index
    %12 = vector.load %arg4[%c0_7, %c0_8] : memref<640x384xbf16, #tpu.memory_space<vmem>>, vector<640x384xbf16>
    %cst_9 = arith.constant dense<0.000000e+00> : vector<16x384xf32>
    %13 = tpu.matmul %11, %12, %cst_9 {dimension_numbers = #tpu.dot_dimension_numbers<[1], [0], [0], [1], [0, 0, 1, 1], [], []>} : vector<16x640xbf16>, vector<640x384xbf16>, vector<16x384xf32> -> vector<16x384xf32>
    %c0_10 = arith.constant 0 : index
    %c0_11 = arith.constant 0 : index
    %14 = vector.load %arg5[%c0_10, %c0_11] : memref<1x384xf32, #tpu.memory_space<vmem>>, vector<1x384xf32>
    %15 = vector.broadcast %14 : vector<1x384xf32> to vector<16x384xf32>
    %16 = arith.addf %13, %15 : vector<16x384xf32>
    %cst_12 = arith.constant 0.000000e+00 : f32
    %17 = vector.broadcast %cst_12 : f32 to vector<16x384xf32>
    %18 = arith.cmpf oge, %16, %17 : vector<16x384xf32>
    %cst_13 = arith.constant 0.00999999977 : f32
    %19 = vector.broadcast %cst_13 : f32 to vector<16x384xf32>
    %20 = arith.mulf %19, %16 : vector<16x384xf32>
    %21 = arith.select %18, %16, %20 : vector<16x384xi1>, vector<16x384xf32>
    %22 = arith.truncf %21 : vector<16x384xf32> to vector<16x384xbf16>
    %c0_14 = arith.constant 0 : index
    %c0_15 = arith.constant 0 : index
    %23 = vector.load %arg6[%c0_14, %c0_15] : memref<384x128xbf16, #tpu.memory_space<vmem>>, vector<384x128xbf16>
    %cst_16 = arith.constant dense<0.000000e+00> : vector<16x128xf32>
    %24 = tpu.matmul %22, %23, %cst_16 {dimension_numbers = #tpu.dot_dimension_numbers<[1], [0], [0], [1], [0, 0, 1, 1], [], []>} : vector<16x384xbf16>, vector<384x128xbf16>, vector<16x128xf32> -> vector<16x128xf32>
    %c0_17 = arith.constant 0 : index
    %c0_18 = arith.constant 0 : index
    %25 = vector.load %arg7[%c0_17, %c0_18] : memref<1x128xf32, #tpu.memory_space<vmem>>, vector<1x128xf32>
    %26 = vector.broadcast %25 : vector<1x128xf32> to vector<16x128xf32>
    %27 = arith.addf %24, %26 : vector<16x128xf32>
    %cst_19 = arith.constant 0.000000e+00 : f32
    %28 = vector.broadcast %cst_19 : f32 to vector<16x128xf32>
    %29 = arith.cmpf oge, %27, %28 : vector<16x128xf32>
    %cst_20 = arith.constant 0.00999999977 : f32
    %30 = vector.broadcast %cst_20 : f32 to vector<16x128xf32>
    %31 = arith.mulf %30, %27 : vector<16x128xf32>
    %32 = arith.select %29, %27, %31 : vector<16x128xi1>, vector<16x128xf32>
    %33 = arith.truncf %32 : vector<16x128xf32> to vector<16x128xbf16>
    %c0_21 = arith.constant 0 : index
    %c0_22 = arith.constant 0 : index
    %34 = vector.load %arg8[%c0_21, %c0_22] : memref<128x256xbf16, #tpu.memory_space<vmem>>, vector<128x256xbf16>
    %cst_23 = arith.constant dense<0.000000e+00> : vector<16x256xf32>
    %35 = tpu.matmul %33, %34, %cst_23 {dimension_numbers = #tpu.dot_dimension_numbers<[1], [0], [0], [1], [0, 0, 1, 1], [], []>} : vector<16x128xbf16>, vector<128x256xbf16>, vector<16x256xf32> -> vector<16x256xf32>
    %c0_24 = arith.constant 0 : index
    %c0_25 = arith.constant 0 : index
    %36 = vector.load %arg9[%c0_24, %c0_25] : memref<1x256xf32, #tpu.memory_space<vmem>>, vector<1x256xf32>
    %37 = vector.broadcast %36 : vector<1x256xf32> to vector<16x256xf32>
    %38 = arith.addf %35, %37 : vector<16x256xf32>
    %39 = vector.extract_strided_slice %38 {offsets = [0, 0], sizes = [16, 128], strides = [1, 1]} : vector<16x256xf32> to vector<16x128xf32>
    %40 = vector.extract_strided_slice %38 {offsets = [0, 128], sizes = [16, 128], strides = [1, 1]} : vector<16x256xf32> to vector<16x128xf32>
    %41 = math.exp %40 : vector<16x128xf32>
    %c0_26 = arith.constant 0 : index
    %c0_27 = arith.constant 0 : index
    %42 = vector.load %arg10[%c0_26, %c0_27] : memref<1x128xf32, #tpu.memory_space<vmem>>, vector<1x128xf32>
    %43 = vector.broadcast %42 : vector<1x128xf32> to vector<16x128xf32>
    %44 = arith.mulf %41, %43 : vector<16x128xf32>
    %45 = arith.addf %39, %44 : vector<16x128xf32>
    %c0_28 = arith.constant 0 : index
    %c0_29 = arith.constant 0 : index
    %46 = vector.load %arg11[%c0_28, %c0_29] : memref<16x128xf32, #tpu.memory_space<vmem>>, vector<16x128xf32>
    tpu.vector_store %arg11[%c0_28, %c0_29], %45 {strides = array<i32>} : memref<16x128xf32, #tpu.memory_space<vmem>>, vector<16x128xf32>,
    %c16_i32 = arith.constant 16 : i32
    %47 = arith.muli %arg0, %c16_i32 : i32
    %48 = tpu.iota {dimensions = array<i32: 0>} : vector<16x128xi32>
    %49 = vector.broadcast %47 : i32 to vector<16x128xi32>
    %50 = arith.addi %49, %48 : vector<16x128xi32>
    %c48_i32 = arith.constant 48 : i32
    %51 = vector.broadcast %c48_i32 : i32 to vector<16x128xi32>
    %52 = arith.cmpi slt, %50, %51 : vector<16x128xi32>
    %53 = arith.extui %52 : vector<16x128xi1> to vector<16x128xi32>
    %54 = arith.sitofp %53 : vector<16x128xi32> to vector<16x128xf32>
    %cst_30 = arith.constant 1.000000e+00 : f32
    %55 = vector.broadcast %cst_30 : f32 to vector<16x128xf32>
    %56 = arith.addf %55, %40 : vector<16x128xf32>
    %57 = arith.mulf %39, %39 : vector<16x128xf32>
    %58 = arith.subf %56, %57 : vector<16x128xf32>
    %59 = arith.subf %58, %41 : vector<16x128xf32>
    %60 = arith.mulf %59, %54 : vector<16x128xf32>
    %cst_31 = arith.constant dense<0.000000e+00> : vector<128xf32>
    %61 = vector.multi_reduction <add>, %60, %cst_31 [0] : vector<16x128xf32> to vector<128xf32>
    %62 = vector.shape_cast %61 : vector<128xf32> to vector<1x128xf32>
    %63 = vector.shape_cast %62 : vector<1x128xf32> to vector<1x128xf32>
    %64 = vector.broadcast %63 : vector<1x128xf32> to vector<8x128xf32>
    %c0_32 = arith.constant 0 : index
    %c0_33 = arith.constant 0 : index
    %65 = vector.load %arg12[%c0_32, %c0_33] : memref<8x128xf32, #tpu.memory_space<vmem>>, vector<8x128xf32>
    tpu.vector_store %arg12[%c0_32, %c0_33], %64 {strides = array<i32>} : memref<8x128xf32, #tpu.memory_space<vmem>>, vector<8x128xf32>,
    return
  }
  func.func @transform_0(%arg0: i32) -> (i32, i32) {
    %c0_i32 = arith.constant 0 : i32
    %c0_i32_0 = arith.constant 0 : i32
    return %arg0, %c0_i32 : i32, i32
  }
  func.func @transform_1(%arg0: i32) -> (i32, i32) {
    %c0_i32 = arith.constant 0 : i32
    %c0_i32_0 = arith.constant 0 : i32
    %c0_i32_1 = arith.constant 0 : i32
    return %c0_i32, %c0_i32_0 : i32, i32
  }
  func.func @transform_2(%arg0: i32) -> (i32, i32) {
    %c0_i32 = arith.constant 0 : i32
    %c0_i32_0 = arith.constant 0 : i32
    %c0_i32_1 = arith.constant 0 : i32
    return %c0_i32, %c0_i32_0 : i32, i32
  }
  func.func @transform_3(%arg0: i32) -> (i32, i32) {
    %c0_i32 = arith.constant 0 : i32
    %c0_i32_0 = arith.constant 0 : i32
    %c0_i32_1 = arith.constant 0 : i32
    return %c0_i32, %c0_i32_0 : i32, i32
  }
  func.func @transform_4(%arg0: i32) -> (i32, i32) {
    %c0_i32 = arith.constant 0 : i32
    %c0_i32_0 = arith.constant 0 : i32
    %c0_i32_1 = arith.constant 0 : i32
    return %c0_i32, %c0_i32_0 : i32, i32
  }
  func.func @transform_5(%arg0: i32) -> (i32, i32) {
    %c0_i32 = arith.constant 0 : i32
    %c0_i32_0 = arith.constant 0 : i32
    %c0_i32_1 = arith.constant 0 : i32
    return %c0_i32, %c0_i32_0 : i32, i32
  }
  func.func @transform_6(%arg0: i32) -> (i32, i32) {
    %c0_i32 = arith.constant 0 : i32
    %c0_i32_0 = arith.constant 0 : i32
    %c0_i32_1 = arith.constant 0 : i32
    return %c0_i32, %c0_i32_0 : i32, i32
  }
  func.func @transform_7(%arg0: i32) -> (i32, i32) {
    %c0_i32 = arith.constant 0 : i32
    %c0_i32_0 = arith.constant 0 : i32
    %c0_i32_1 = arith.constant 0 : i32
    return %c0_i32, %c0_i32_0 : i32, i32
  }
  func.func @transform_8(%arg0: i32) -> (i32, i32) {
    %c0_i32 = arith.constant 0 : i32
    %c0_i32_0 = arith.constant 0 : i32
    %c0_i32_1 = arith.constant 0 : i32
    return %c0_i32, %c0_i32_0 : i32, i32
  }
  func.func @transform_9(%arg0: i32) -> (i32, i32) {
    %c0_i32 = arith.constant 0 : i32
    %c0_i32_0 = arith.constant 0 : i32
    %c0_i32_1 = arith.constant 0 : i32
    return %c0_i32, %c0_i32_0 : i32, i32
  }
  func.func @transform_10(%arg0: i32) -> (i32, i32) {
    %c0_i32 = arith.constant 0 : i32
    %c0_i32_0 = arith.constant 0 : i32
    return %arg0, %c0_i32 : i32, i32
  }
  func.func @transform_11(%arg0: i32) -> (i32, i32) {
    %c0_i32 = arith.constant 0 : i32
    %c0_i32_0 = arith.constant 0 : i32
    return %arg0, %c0_i32 : i32, i32
  }
}

</mosaic_0001>

<llo_original>
// kernel: tpu_custom_call.1
$region0: #{tpu_custom_call.1}
  #allocation0 [shape = 'u32[]', space=smem, size = 0x4, offset = 0x4, fixed_abs, tag = 'smem constant byte address 0x4 - core index']
  #allocation1 [shape = 'u32[144,128]{1,0:T(1,128)}', space=vmem, size = 0x12000, scoped, tag = 'internal scratch']
  %s0 = inlined_call_operand.hbm [shape: bf16[48,676], index: 0, kind: input, shape index: {}]
  %s1 = inlined_call_operand.hbm [shape: bf16[676,640], index: 1, kind: input, shape index: {}]
  %s2 = inlined_call_operand.vmem [shape: f32[1,640], index: 2, kind: input, shape index: {}]
  %s3 = inlined_call_operand.hbm [shape: bf16[640,384], index: 3, kind: input, shape index: {}]
  %s4 = inlined_call_operand.vmem [shape: f32[1,384], index: 4, kind: input, shape index: {}]
  %s5 = inlined_call_operand.hbm [shape: bf16[384,128], index: 5, kind: input, shape index: {}]
  %s6 = inlined_call_operand.vmem [shape: f32[1,128], index: 6, kind: input, shape index: {}]
  %s7 = inlined_call_operand.hbm [shape: bf16[128,256], index: 7, kind: input, shape index: {}]
  %s8 = inlined_call_operand.vmem [shape: f32[1,256], index: 8, kind: input, shape index: {}]
  %s9 = inlined_call_operand.vmem [shape: f32[1,128], index: 9, kind: input, shape index: {}]
  %s10 = inlined_call_operand.hbm [shape: f32[48,128], index: 10, kind: output, shape index: {0}]
  %s11 = inlined_call_operand.hbm [shape: f32[24,128], index: 11, kind: output, shape index: {1}]
  %12 = xla_tuple %s10, %s11
  %s13 = sld [smem:[#allocation0]]
  $region101: #{tpu_custom_call.1} parent=0
    _
  %s15 = ssub.s32 1, %s13
  %s16 = scalar_select 0, %s15, %s13
  $region1: #{tpu_custom_call.1} parent=0
    #allocation2 [shape = 'u8[49152]{0}', space=vmem, size = 0xc000, scoped, tag = 'input window, operand 0']
    #allocation3 [shape = 's32[2]{0}', space=sflag, size = 0x8, scoped, tag = 'scoped memory for tpu_custom_call.1']
    #allocation4 [shape = 's32[2]{0}', space=sflag, size = 0x8, scoped, tag = 'scoped memory for tpu_custom_call.1']
    #allocation5 [shape = 'u8[870400]{0}', space=vmem, size = 0xd4800, scoped, tag = 'input window, operand 1, single buffered']
    #allocation6 [shape = 's32[1]{0}', space=sflag, size = 0x4, scoped, tag = 'scoped memory for tpu_custom_call.1']
    #allocation7 [shape = 'u8[491520]{0}', space=vmem, size = 0x78000, scoped, tag = 'input window, operand 3, single buffered']
    #allocation8 [shape = 'u8[98304]{0}', space=vmem, size = 0x18000, scoped, tag = 'input window, operand 5, single buffered']
    #allocation9 [shape = 's32[1]{0}', space=sflag, size = 0x4, scoped, tag = 'scoped memory for tpu_custom_call.1']
    #allocation10 [shape = 'u8[65536]{0}', space=vmem, size = 0x10000, scoped, tag = 'input window, operand 7, single buffered']
    #allocation11 [shape = 'u8[16384]{0}', space=vmem, size = 0x4000, scoped, tag = 'output window, operand 0']
    #allocation12 [shape = 'u8[8192]{0}', space=vmem, size = 0x2000, scoped, tag = 'output window, operand 1']
    #allocation13 [shape = 's32[2]{0}', space=sflag, size = 0x8, scoped, tag = 'scoped memory for tpu_custom_call.1']
    %17 = vsyncpa [#allocation3], 0
    %s18 = scalar_lea.sflag [#allocation3], 1
    %19 = vsyncpa %s18, 0
    %20 = vsyncpa [#allocation6], 0
    %21 = vsyncpa [#allocation9], 0
    %22 = vsyncpa [#allocation4], 0
    %s23 = scalar_lea.sflag [#allocation4], 1
    %24 = vsyncpa %s23, 0
    %25 = vsyncpa [#allocation13], 0
    %s26 = scalar_lea.sflag [#allocation13], 1
    %27 = vsyncpa %s26, 0
    loop: start=0, step=1, limit=5
    $region2: #{tpu_custom_call.1} parent=1 // loop_pre_header
      _
    $region3: #{tpu_custom_call.1} parent=1 // loop_header
      %s29 = sphi 0, %s33
      %p30 = scmp.ge.s32.totalorder %s29, 5
      %s39 = sphi 0, %s41
      %s42 = sphi 0, %s39
      %s43 = sphi 0, %s42
      %s59 = sphi 0, %s43
      %s63 = sphi 0, %s63
      %s65 = sphi 0, %s63
      %s66 = sphi 0, %s65
      %s80 = sphi 0, %s66
      %s84 = sphi 0, %s84
      %s86 = sphi 0, %s84
      %s87 = sphi 0, %s86
      %s101 = sphi 0, %s87
      %s105 = sphi 0, %s105
      %s107 = sphi 0, %s105
      %s108 = sphi 0, %s107
      %s122 = sphi 0, %s108
      %s126 = sphi 0, %s126
      %s128 = sphi 0, %s126
      %s129 = sphi 0, %s128
      %s143 = sphi 0, %s129
      %s147 = sphi 0, %s147
      %s149 = sphi 0, %s147
      %s150 = sphi 0, %s149
      %s164 = sphi 0, %s150
      %s168 = sphi 0, %s168
      %s170 = sphi 0, %s168
      %s171 = sphi 0, %s170
      %s185 = sphi 0, %s171
      %s189 = sphi 0, %s189
      %s191 = sphi 0, %s189
      %s192 = sphi 0, %s191
      %s206 = sphi 0, %s192
      %s210 = sphi 0, %s210
      %s212 = sphi 0, %s210
      %s213 = sphi 0, %s212
      %s227 = sphi 0, %s213
      %s231 = sphi 0, %s231
      %s233 = sphi 0, %s231
      %s234 = sphi 0, %s233
      %s248 = sphi 0, %s234
      %s254 = sphi 0, %s256
      %s257 = sphi 0, %s254
      %s258 = sphi 0, %s257
      %s274 = sphi 0, %s258
      %s280 = sphi 0, %s282
      %s283 = sphi 0, %s280
      %s284 = sphi 0, %s283
      %s300 = sphi 0, %s284
    $region4: #{tpu_custom_call.1} parent=1 // loop_header_branch
      %32 = sbr.rel (%p30) target = $region8
    $region5: #{tpu_custom_call.1} parent=1 // loop_body
      %s34 = ssub.s32 %s29, 1
      %s35 = ssub.s32 %s29, 2
      %s36 = sadd.s32 %s29, 1
      %s37 = ssub.s32 %s29, %s36
      %p38 = scmp.eq.s32.totalorder %s37, 0
      %s40 = sadd.s32 %s39, 1
      %s41 = scalar_select %p38, %s39, %s40
      %p44 = pneg %p38
      %p45 = scmp.eq.s32.totalorder %s29, 2
      %p46 = por %p44, %p45
      %p47 = scmp.ne.s32.totalorder %s39, %s42
      %p48 = scmp.eq.s32.totalorder %s29, 0
      %p49 = por %p47, %p48
      %p50 = scmp.ne.s32.totalorder %s39, %s42
      %p51 = scmp.eq.s32.totalorder %s34, 2
      %p52 = por %p50, %p51
      %p53 = scmp.ne.s32.totalorder %s42, %s43
      %p54 = scmp.eq.s32.totalorder %s34, 0
      %p55 = por %p53, %p54
      %p56 = scmp.ne.s32.totalorder %s42, %s43
      %p57 = scmp.eq.s32.totalorder %s35, 2
      %p58 = por %p56, %p57
      %p60 = scmp.ne.s32.totalorder %s43, %s59
      %p61 = scmp.eq.s32.totalorder %s35, 0
      %p62 = por %p60, %p61
      %s64 = sadd.s32 %s63, 1
      %p67 = scmp.eq.s32.totalorder %s29, 2
      %p68 = scmp.ne.s32.totalorder %s63, %s65
      %p69 = scmp.eq.s32.totalorder %s29, 0
      %p70 = por %p68, %p69
      %p71 = scmp.ne.s32.totalorder %s63, %s65
      %p72 = scmp.eq.s32.totalorder %s34, 2
      %p73 = por %p71, %p72
      %p74 = scmp.ne.s32.totalorder %s65, %s66
      %p75 = scmp.eq.s32.totalorder %s34, 0
      %p76 = por %p74, %p75
      %p77 = scmp.ne.s32.totalorder %s65, %s66
      %p78 = scmp.eq.s32.totalorder %s35, 2
      %p79 = por %p77, %p78
      %p81 = scmp.ne.s32.totalorder %s66, %s80
      %p82 = scmp.eq.s32.totalorder %s35, 0
      %p83 = por %p81, %p82
      %s85 = sadd.s32 %s84, 1
      %p88 = scmp.eq.s32.totalorder %s29, 2
      %p89 = scmp.ne.s32.totalorder %s84, %s86
      %p90 = scmp.eq.s32.totalorder %s29, 0
      %p91 = por %p89, %p90
      %p92 = scmp.ne.s32.totalorder %s84, %s86
      %p93 = scmp.eq.s32.totalorder %s34, 2
      %p94 = por %p92, %p93
      %p95 = scmp.ne.s32.totalorder %s86, %s87
      %p96 = scmp.eq.s32.totalorder %s34, 0
      %p97 = por %p95, %p96
      %p98 = scmp.ne.s32.totalorder %s86, %s87
      %p99 = scmp.eq.s32.totalorder %s35, 2
      %p100 = por %p98, %p99
      %p102 = scmp.ne.s32.totalorder %s87, %s101
      %p103 = scmp.eq.s32.totalorder %s35, 0
      %p104 = por %p102, %p103
      %s106 = sadd.s32 %s105, 1
      %p109 = scmp.eq.s32.totalorder %s29, 2
      %p110 = scmp.ne.s32.totalorder %s105, %s107
      %p111 = scmp.eq.s32.totalorder %s29, 0
      %p112 = por %p110, %p111
      %p113 = scmp.ne.s32.totalorder %s105, %s107
      %p114 = scmp.eq.s32.totalorder %s34, 2
      %p115 = por %p113, %p114
      %p116 = scmp.ne.s32.totalorder %s107, %s108
      %p117 = scmp.eq.s32.totalorder %s34, 0
      %p118 = por %p116, %p117
      %p119 = scmp.ne.s32.totalorder %s107, %s108
      %p120 = scmp.eq.s32.totalorder %s35, 2
      %p121 = por %p119, %p120
      %p123 = scmp.ne.s32.totalorder %s108, %s122
      %p124 = scmp.eq.s32.totalorder %s35, 0
      %p125 = por %p123, %p124
      %s127 = sadd.s32 %s126, 1
      %p130 = scmp.eq.s32.totalorder %s29, 2
      %p131 = scmp.ne.s32.totalorder %s126, %s128
      %p132 = scmp.eq.s32.totalorder %s29, 0
      %p133 = por %p131, %p132
      %p134 = scmp.ne.s32.totalorder %s126, %s128
      %p135 = scmp.eq.s32.totalorder %s34, 2
      %p136 = por %p134, %p135
      %p137 = scmp.ne.s32.totalorder %s128, %s129
      %p138 = scmp.eq.s32.totalorder %s34, 0
      %p139 = por %p137, %p138
      %p140 = scmp.ne.s32.totalorder %s128, %s129
      %p141 = scmp.eq.s32.totalorder %s35, 2
      %p142 = por %p140, %p141
      %p144 = scmp.ne.s32.totalorder %s129, %s143
      %p145 = scmp.eq.s32.totalorder %s35, 0
      %p146 = por %p144, %p145
      %s148 = sadd.s32 %s147, 1
      %p151 = scmp.eq.s32.totalorder %s29, 2
      %p152 = scmp.ne.s32.totalorder %s147, %s149
      %p153 = scmp.eq.s32.totalorder %s29, 0
      %p154 = por %p152, %p153
      %p155 = scmp.ne.s32.totalorder %s147, %s149
      %p156 = scmp.eq.s32.totalorder %s34, 2
      %p157 = por %p155, %p156
      %p158 = scmp.ne.s32.totalorder %s149, %s150
      %p159 = scmp.eq.s32.totalorder %s34, 0
      %p160 = por %p158, %p159
      %p161 = scmp.ne.s32.totalorder %s149, %s150
      %p162 = scmp.eq.s32.totalorder %s35, 2
      %p163 = por %p161, %p162
      %p165 = scmp.ne.s32.totalorder %s150, %s164
      %p166 = scmp.eq.s32.totalorder %s35, 0
      %p167 = por %p165, %p166
      %s169 = sadd.s32 %s168, 1
      %p172 = scmp.eq.s32.totalorder %s29, 2
      %p173 = scmp.ne.s32.totalorder %s168, %s170
      %p174 = scmp.eq.s32.totalorder %s29, 0
      %p175 = por %p173, %p174
      %p176 = scmp.ne.s32.totalorder %s168, %s170
      %p177 = scmp.eq.s32.totalorder %s34, 2
      %p178 = por %p176, %p177
      %p179 = scmp.ne.s32.totalorder %s170, %s171
      %p180 = scmp.eq.s32.totalorder %s34, 0
      %p181 = por %p179, %p180
      %p182 = scmp.ne.s32.totalorder %s170, %s171
      %p183 = scmp.eq.s32.totalorder %s35, 2
      %p184 = por %p182, %p183
      %p186 = scmp.ne.s32.totalorder %s171, %s185
      %p187 = scmp.eq.s32.totalorder %s35, 0
      %p188 = por %p186, %p187
      %s190 = sadd.s32 %s189, 1
      %p193 = scmp.eq.s32.totalorder %s29, 2
      %p194 = scmp.ne.s32.totalorder %s189, %s191
      %p195 = scmp.eq.s32.totalorder %s29, 0
      %p196 = por %p194, %p195
      %p197 = scmp.ne.s32.totalorder %s189, %s191
      %p198 = scmp.eq.s32.totalorder %s34, 2
      %p199 = por %p197, %p198
      %p200 = scmp.ne.s32.totalorder %s191, %s192
      %p201 = scmp.eq.s32.totalorder %s34, 0
      %p202 = por %p200, %p201
      %p203 = scmp.ne.s32.totalorder %s191, %s192
      %p204 = scmp.eq.s32.totalorder %s35, 2
      %p205 = por %p203, %p204
      %p207 = scmp.ne.s32.totalorder %s192, %s206
      %p208 = scmp.eq.s32.totalorder %s35, 0
      %p209 = por %p207, %p208
      %s211 = sadd.s32 %s210, 1
      %p214 = scmp.eq.s32.totalorder %s29, 2
      %p215 = scmp.ne.s32.totalorder %s210, %s212
      %p216 = scmp.eq.s32.totalorder %s29, 0
      %p217 = por %p215, %p216
      %p218 = scmp.ne.s32.totalorder %s210, %s212
      %p219 = scmp.eq.s32.totalorder %s34, 2
      %p220 = por %p218, %p219
      %p221 = scmp.ne.s32.totalorder %s212, %s213
      %p222 = scmp.eq.s32.totalorder %s34, 0
      %p223 = por %p221, %p222
      %p224 = scmp.ne.s32.totalorder %s212, %s213
      %p225 = scmp.eq.s32.totalorder %s35, 2
      %p226 = por %p224, %p225
      %p228 = scmp.ne.s32.totalorder %s213, %s227
      %p229 = scmp.eq.s32.totalorder %s35, 0
      %p230 = por %p228, %p229
      %s232 = sadd.s32 %s231, 1
      %p235 = scmp.eq.s32.totalorder %s29, 2
      %p236 = scmp.ne.s32.totalorder %s231, %s233
      %p237 = scmp.eq.s32.totalorder %s29, 0
      %p238 = por %p236, %p237
      %p239 = scmp.ne.s32.totalorder %s231, %s233
      %p240 = scmp.eq.s32.totalorder %s34, 2
      %p241 = por %p239, %p240
      %p242 = scmp.ne.s32.totalorder %s233, %s234
      %p243 = scmp.eq.s32.totalorder %s34, 0
      %p244 = por %p242, %p243
      %p245 = scmp.ne.s32.totalorder %s233, %s234
      %p246 = scmp.eq.s32.totalorder %s35, 2
      %p247 = por %p245, %p246
      %p249 = scmp.ne.s32.totalorder %s234, %s248
      %p250 = scmp.eq.s32.totalorder %s35, 0
      %p251 = por %p249, %p250
      %s252 = ssub.s32 %s29, %s36
      %p253 = scmp.eq.s32.totalorder %s252, 0
      %s255 = sadd.s32 %s254, 1
      %s256 = scalar_select %p253, %s254, %s255
      %p259 = pneg %p253
      %p260 = scmp.eq.s32.totalorder %s29, 2
      %p261 = por %p259, %p260
      %p262 = scmp.ne.s32.totalorder %s254, %s257
      %p263 = scmp.eq.s32.totalorder %s29, 0
      %p264 = por %p262, %p263
      %p265 = scmp.ne.s32.totalorder %s254, %s257
      %p266 = scmp.eq.s32.totalorder %s34, 2
      %p267 = por %p265, %p266
      %p268 = scmp.ne.s32.totalorder %s257, %s258
      %p269 = scmp.eq.s32.totalorder %s34, 0
      %p270 = por %p268, %p269
      %p271 = scmp.ne.s32.totalorder %s257, %s258
      %p272 = scmp.eq.s32.totalorder %s35, 2
      %p273 = por %p271, %p272
      %p275 = scmp.ne.s32.totalorder %s258, %s274
      %p276 = scmp.eq.s32.totalorder %s35, 0
      %p277 = por %p275, %p276
      %s278 = ssub.s32 %s29, %s36
      %p279 = scmp.eq.s32.totalorder %s278, 0
      %s281 = sadd.s32 %s280, 1
      %s282 = scalar_select %p279, %s280, %s281
      %p285 = pneg %p279
      %p286 = scmp.eq.s32.totalorder %s29, 2
      %p287 = por %p285, %p286
      %p288 = scmp.ne.s32.totalorder %s280, %s283
      %p289 = scmp.eq.s32.totalorder %s29, 0
      %p290 = por %p288, %p289
      %p291 = scmp.ne.s32.totalorder %s280, %s283
      %p292 = scmp.eq.s32.totalorder %s34, 2
      %p293 = por %p291, %p292
      %p294 = scmp.ne.s32.totalorder %s283, %s284
      %p295 = scmp.eq.s32.totalorder %s34, 0
      %p296 = por %p294, %p295
      %p297 = scmp.ne.s32.totalorder %s283, %s284
      %p298 = scmp.eq.s32.totalorder %s35, 2
      %p299 = por %p297, %p298
      %p301 = scmp.ne.s32.totalorder %s284, %s300
      %p302 = scmp.eq.s32.totalorder %s35, 0
      %p303 = por %p301, %p302
      %p304 = scmp.le.s32.totalorder 1, %s29
      %p305 = scmp.lt.s32.totalorder %s29, 4
      %p306 = pnand %p304, %p305
      %p307 = pneg %p306
      // Predicated region
      $region9: #{tpu_custom_call.1} parent=5 // pred_check
        _
      $region10: #{tpu_custom_call.1} parent=5 // pred_check_branch
        %309 = sbr.rel (%p306) target = $region12
      $region11: #{tpu_custom_call.1} parent=5 // pred_region
        %s310 = ssub.s32 %s29, 1
        // Predicated region
        $region13: #{tpu_custom_call.1} parent=11 // pred_check
          %p311 = pneg %p76
        $region14: #{tpu_custom_call.1} parent=11 // pred_check_branch
          %313 = sbr.rel (%p311) target = $region16
        $region15: #{tpu_custom_call.1} parent=11 // pred_region
          %s315 = ssub.s32 27200, 27200
          %316 = vsyncadd [#allocation6], %s315
          %s317 = sshll.u32 [#allocation5], 4
          %s318 = int_to_ptr.vmem [resolvable:$true] %s317
          %323 = dma.hbm_to_vmem [thread:$0]  %s1, 27200, %s318, [#allocation6], 320, 320, 20
        $region16: #{tpu_custom_call.1} parent=11 // pred_fallthru
          _
        // Predicated region
        $region17: #{tpu_custom_call.1} parent=11 // pred_check
          %p324 = pneg %p97
        $region18: #{tpu_custom_call.1} parent=11 // pred_check_branch
          %326 = sbr.rel (%p324) target = $region20
        $region19: #{tpu_custom_call.1} parent=11 // pred_region
          _
        $region20: #{tpu_custom_call.1} parent=11 // pred_fallthru
          _
        // Predicated region
        $region21: #{tpu_custom_call.1} parent=11 // pred_check
          %p327 = pneg %p118
        $region22: #{tpu_custom_call.1} parent=11 // pred_check_branch
          %329 = sbr.rel (%p327) target = $region24
        $region23: #{tpu_custom_call.1} parent=11 // pred_region
          %s331 = ssub.s32 15360, 15360
          %332 = vsyncadd [#allocation6], %s331
          %s333 = sshll.u32 [#allocation7], 4
          %s334 = int_to_ptr.vmem [resolvable:$true] %s333
          %339 = dma.hbm_to_vmem [thread:$0]  %s3, 15360, %s334, [#allocation6], 192, 192, 12
        $region24: #{tpu_custom_call.1} parent=11 // pred_fallthru
          _
        // Predicated region
        $region25: #{tpu_custom_call.1} parent=11 // pred_check
          %p340 = pneg %p139
        $region26: #{tpu_custom_call.1} parent=11 // pred_check_branch
          %342 = sbr.rel (%p340) target = $region28
        $region27: #{tpu_custom_call.1} parent=11 // pred_region
          _
        $region28: #{tpu_custom_call.1} parent=11 // pred_fallthru
          _
        // Predicated region
        $region29: #{tpu_custom_call.1} parent=11 // pred_check
          %p343 = pneg %p160
        $region30: #{tpu_custom_call.1} parent=11 // pred_check_branch
          %345 = sbr.rel (%p343) target = $region32
        $region31: #{tpu_custom_call.1} parent=11 // pred_region
          %s347 = ssub.s32 3072, 3072
          %348 = vsyncadd [#allocation9], %s347
          %s349 = sshll.u32 [#allocation8], 4
          %s350 = int_to_ptr.vmem [resolvable:$true] %s349
          %355 = dma.hbm_to_vmem [thread:$0]  %s5, 3072, %s350, [#allocation9], 64, 64, 4
        $region32: #{tpu_custom_call.1} parent=11 // pred_fallthru
          _
        // Predicated region
        $region33: #{tpu_custom_call.1} parent=11 // pred_check
          %p356 = pneg %p181
        $region34: #{tpu_custom_call.1} parent=11 // pred_check_branch
          %358 = sbr.rel (%p356) target = $region36
        $region35: #{tpu_custom_call.1} parent=11 // pred_region
          _
        $region36: #{tpu_custom_call.1} parent=11 // pred_fallthru
          _
        // Predicated region
        $region37: #{tpu_custom_call.1} parent=11 // pred_check
          %p359 = pneg %p202
        $region38: #{tpu_custom_call.1} parent=11 // pred_check_branch
          %361 = sbr.rel (%p359) target = $region40
        $region39: #{tpu_custom_call.1} parent=11 // pred_region
          %s363 = ssub.s32 2048, 2048
          %364 = vsyncadd [#allocation9], %s363
          %s365 = sshll.u32 [#allocation10], 4
          %s366 = int_to_ptr.vmem [resolvable:$true] %s365
          %371 = dma.hbm_to_vmem [thread:$0]  %s7, 2048, %s366, [#allocation9], 128, 128, 8
        $region40: #{tpu_custom_call.1} parent=11 // pred_fallthru
          _
        // Predicated region
        $region41: #{tpu_custom_call.1} parent=11 // pred_check
          %p372 = pneg %p223
        $region42: #{tpu_custom_call.1} parent=11 // pred_check_branch
          %374 = sbr.rel (%p372) target = $region44
        $region43: #{tpu_custom_call.1} parent=11 // pred_region
          _
        $region44: #{tpu_custom_call.1} parent=11 // pred_fallthru
          _
        // Predicated region
        $region45: #{tpu_custom_call.1} parent=11 // pred_check
          %p375 = pneg %p244
        $region46: #{tpu_custom_call.1} parent=11 // pred_check_branch
          %377 = sbr.rel (%p375) target = $region48
        $region47: #{tpu_custom_call.1} parent=11 // pred_region
          _
        $region48: #{tpu_custom_call.1} parent=11 // pred_fallthru
          _
      $region12: #{tpu_custom_call.1} parent=5 // pred_fallthru
        _
      %p378 = scmp.lt.s32.totalorder %s29, 3
      // Predicated region
      $region49: #{tpu_custom_call.1} parent=5 // pred_check
        %p379 = pneg %p378
      $region50: #{tpu_custom_call.1} parent=5 // pred_check_branch
        %381 = sbr.rel (%p379) target = $region52
      $region51: #{tpu_custom_call.1} parent=5 // pred_region
        // Predicated region
        $region53: #{tpu_custom_call.1} parent=51 // pred_check
          %p382 = pneg %p49
        $region54: #{tpu_custom_call.1} parent=51 // pred_check_branch
          %384 = sbr.rel (%p382) target = $region56
        $region55: #{tpu_custom_call.1} parent=51 // pred_region
          %s385 = sand.u32 %s39, 1
          %s386 = scalar_lea.sflag [#allocation3], %s385
          %s387 = sand.u32 %s39, 1
          %s388 = smul.addr %s387, 48
          %s389 = scalar_lea.vmem [#allocation2], %s388
          %s390 = smul.u32 2, %s29
          %s392 = ssub.s32 768, 768
          %393 = vsyncadd %s386, %s392
          %s394 = smul.addr %s390, 6
          %s395 = smul.addr %s394, 64
          %s396 = scalar_lea.hbm %s0, %s395
          %s397 = sshll.u32 %s389, 4
          %s398 = int_to_ptr.vmem [resolvable:$true] %s397
          %403 = dma.hbm_to_vmem [thread:$0]  %s396, 768, %s398, %s386, 384, 384, 24
        $region56: #{tpu_custom_call.1} parent=51 // pred_fallthru
          _
      $region52: #{tpu_custom_call.1} parent=5 // pred_fallthru
        _
      %p404 = scmp.le.s32.totalorder 1, %s29
      %p405 = scmp.lt.s32.totalorder %s29, 4
      %p406 = pnand %p404, %p405
      %p407 = pneg %p406
      // Predicated region
      $region57: #{tpu_custom_call.1} parent=5 // pred_check
        _
      $region58: #{tpu_custom_call.1} parent=5 // pred_check_branch
        %409 = sbr.rel (%p406) target = $region60
      $region59: #{tpu_custom_call.1} parent=5 // pred_region
        %s410 = ssub.s32 %s29, 1
        %s411 = sand.u32 %s42, 1
        %s412 = scalar_lea.sflag [#allocation3], %s411
        %s413 = sand.u32 %s42, 1
        %s414 = smul.addr %s413, 48
        %s415 = scalar_lea.vmem [#allocation2], %s414
        // Predicated region
        $region61: #{tpu_custom_call.1} parent=59 // pred_check
          %p416 = pneg %p55
        $region62: #{tpu_custom_call.1} parent=59 // pred_check_branch
          %418 = sbr.rel (%p416) target = $region64
        $region63: #{tpu_custom_call.1} parent=59 // pred_region
          %419 = dma.done %s412, 768
        $region64: #{tpu_custom_call.1} parent=59 // pred_fallthru
          _
        // Predicated region
        $region65: #{tpu_custom_call.1} parent=59 // pred_check
          %p420 = pneg %p76
        $region66: #{tpu_custom_call.1} parent=59 // pred_check_branch
          %422 = sbr.rel (%p420) target = $region68
        $region67: #{tpu_custom_call.1} parent=59 // pred_region
          %423 = dma.done [#allocation6], 27200
        $region68: #{tpu_custom_call.1} parent=59 // pred_fallthru
          _
        // Predicated region
        $region69: #{tpu_custom_call.1} parent=59 // pred_check
          %p424 = pneg %p118
        $region70: #{tpu_custom_call.1} parent=59 // pred_check_branch
          %426 = sbr.rel (%p424) target = $region72
        $region71: #{tpu_custom_call.1} parent=59 // pred_region
          %427 = dma.done [#allocation6], 15360
        $region72: #{tpu_custom_call.1} parent=59 // pred_fallthru
          _
        // Predicated region
        $region73: #{tpu_custom_call.1} parent=59 // pred_check
          %p428 = pneg %p160
        $region74: #{tpu_custom_call.1} parent=59 // pred_check_branch
          %430 = sbr.rel (%p428) target = $region76
        $region75: #{tpu_custom_call.1} parent=59 // pred_region
          %431 = dma.done [#allocation9], 3072
        $region76: #{tpu_custom_call.1} parent=59 // pred_fallthru
          _
        // Predicated region
        $region77: #{tpu_custom_call.1} parent=59 // pred_check
          %p432 = pneg %p202
        $region78: #{tpu_custom_call.1} parent=59 // pred_check_branch
          %434 = sbr.rel (%p432) target = $region80
        $region79: #{tpu_custom_call.1} parent=59 // pred_region
          %435 = dma.done [#allocation9], 2048
        $region80: #{tpu_custom_call.1} parent=59 // pred_fallthru
          _
        %s436 = sand.u32 %s42, 1
        %s437 = scalar_lea.sflag [#allocation3], %s436
        %s438 = sand.u32 %s42, 1
        %s439 = smul.addr %s438, 48
        %s440 = scalar_lea.vmem [#allocation2], %s439
        %p441 = pneg %p55
        %p442 = pneg %p52
        %p443 = pneg %p76
        %p444 = pneg %p73
        %p445 = pneg %p97
        %p446 = pneg %p94
        %p447 = pneg %p118
        %p448 = pneg %p115
        %p449 = pneg %p139
        %p450 = pneg %p136
        %p451 = pneg %p160
        %p452 = pneg %p157
        %p453 = pneg %p181
        %p454 = pneg %p178
        %p455 = pneg %p202
        %p456 = pneg %p199
        %p457 = pneg %p223
        %p458 = pneg %p220
        %p459 = pneg %p244
        %p460 = pneg %p241
        %p461 = pneg %p270
        %p462 = pneg %p267
        %s463 = sand.u32 %s257, 1
        %s464 = scalar_lea.sflag [#allocation4], %s463
        %s465 = sand.u32 %s257, 1
        %s466 = smul.addr %s465, 16
        %s467 = scalar_lea.vmem [#allocation11], %s466
        %p468 = pneg %p296
        %p469 = pneg %p293
        %s470 = sand.u32 %s283, 1
        %s471 = scalar_lea.sflag [#allocation13], %s470
        %s472 = sand.u32 %s283, 1
        %s473 = smul.addr %s472, 8
        %s474 = scalar_lea.vmem [#allocation12], %s473
        %s475 = smul.u32 2, %s34
        %s476 = smul.u32 2, %s34
        %v478 = vld [vmem:[%s415] sm:$0xff]
        %v479 = vld [vmem:[%s415 + $0x8] sm:$0xff]
        %v480 = vld [vmem:[%s415 + $0x10] sm:$0xff]
        %v481 = vld [vmem:[%s415 + $0x18] sm:$0xff]
        %v482 = vld [vmem:[%s415 + $0x20] sm:$0xff]
        %v483 = vld [vmem:[%s415 + $0x28] sm:$0xff]
        %v484 = vld [vmem:[#allocation5] sm:$0xff]
        %v485 = vld [vmem:[#allocation5 + $0x8] sm:$0xff]
        %v486 = vld [vmem:[#allocation5 + $0x10] sm:$0xf]
        %v487 = vld [vmem:[#allocation5 + $0x14] sm:$0xff]
        %v488 = vld [vmem:[#allocation5 + $0x1c] sm:$0xff]
        %v489 = vld [vmem:[#allocation5 + $0x24] sm:$0xf]
        %v490 = vld [vmem:[#allocation5 + $0x28] sm:$0xff]
        %v491 = vld [vmem:[#allocation5 + $0x30] sm:$0xff]
        %v492 = vld [vmem:[#allocation5 + $0x38] sm:$0xf]
        %v493 = vld [vmem:[#allocation5 + $0x3c] sm:$0xff]
        %v494 = vld [vmem:[#allocation5 + $0x44] sm:$0xff]
        %v495 = vld [vmem:[#allocation5 + $0x4c] sm:$0xf]
        %v496 = vld [vmem:[#allocation5 + $0x50] sm:$0xff]
        %v497 = vld [vmem:[#allocation5 + $0x58] sm:$0xff]
        %v498 = vld [vmem:[#allocation5 + $0x60] sm:$0xf]
        %v499 = vld [vmem:[#allocation5 + $0x64] sm:$0xff]
        %v500 = vld [vmem:[#allocation5 + $0x6c] sm:$0xff]
        %v501 = vld [vmem:[#allocation5 + $0x74] sm:$0xf]
        %v502 = vld [vmem:[#allocation5 + $0x78] sm:$0xff]
        %v503 = vld [vmem:[#allocation5 + $0x80] sm:$0xff]
        %v504 = vld [vmem:[#allocation5 + $0x88] sm:$0xf]
        %v505 = vld [vmem:[#allocation5 + $0x8c] sm:$0xff]
        %v506 = vld [vmem:[#allocation5 + $0x94] sm:$0xff]
        %v507 = vld [vmem:[#allocation5 + $0x9c] sm:$0xf]
        %v508 = vld [vmem:[#allocation5 + $0xa0] sm:$0xff]
        %v509 = vld [vmem:[#allocation5 + $0xa8] sm:$0xff]
        %v510 = vld [vmem:[#allocation5 + $0xb0] sm:$0xf]
        %v511 = vld [vmem:[#allocation5 + $0xb4] sm:$0xff]
        %v512 = vld [vmem:[#allocation5 + $0xbc] sm:$0xff]
        %v513 = vld [vmem:[#allocation5 + $0xc4] sm:$0xf]
        %v514 = vld [vmem:[#allocation5 + $0xc8] sm:$0xff]
        %v515 = vld [vmem:[#allocation5 + $0xd0] sm:$0xff]
        %v516 = vld [vmem:[#allocation5 + $0xd8] sm:$0xf]
        %v517 = vld [vmem:[#allocation5 + $0xdc] sm:$0xff]
        %v518 = vld [vmem:[#allocation5 + $0xe4] sm:$0xff]
        %v519 = vld [vmem:[#allocation5 + $0xec] sm:$0xf]
        %v520 = vld [vmem:[#allocation5 + $0xf0] sm:$0xff]
        %v521 = vld [vmem:[#allocation5 + $0xf8] sm:$0xff]
        %v522 = vld [vmem:[#allocation5 + $0x100] sm:$0xf]
        %v523 = vld [vmem:[#allocation5 + $0x104] sm:$0xff]
        %v524 = vld [vmem:[#allocation5 + $0x10c] sm:$0xff]
        %v525 = vld [vmem:[#allocation5 + $0x114] sm:$0xf]
        %v526 = vld [vmem:[#allocation5 + $0x118] sm:$0xff]
        %v527 = vld [vmem:[#allocation5 + $0x120] sm:$0xff]
        %v528 = vld [vmem:[#allocation5 + $0x128] sm:$0xf]
        %v529 = vld [vmem:[#allocation5 + $0x12c] sm:$0xff]
        %v530 = vld [vmem:[#allocation5 + $0x134] sm:$0xff]
        %v531 = vld [vmem:[#allocation5 + $0x13c] sm:$0xf]
        %v532 = vld [vmem:[#allocation5 + $0x140] sm:$0xff]
        %v533 = vld [vmem:[#allocation5 + $0x148] sm:$0xff]
        %v534 = vld [vmem:[#allocation5 + $0x150] sm:$0xf]
        %v535 = vld [vmem:[#allocation5 + $0x154] sm:$0xff]
        %v536 = vld [vmem:[#allocation5 + $0x15c] sm:$0xff]
        %v537 = vld [vmem:[#allocation5 + $0x164] sm:$0xf]
        %v538 = vld [vmem:[#allocation5 + $0x168] sm:$0xff]
        %v539 = vld [vmem:[#allocation5 + $0x170] sm:$0xff]
        %v540 = vld [vmem:[#allocation5 + $0x178] sm:$0xf]
        %v541 = vld [vmem:[#allocation5 + $0x17c] sm:$0xff]
        %v542 = vld [vmem:[#allocation5 + $0x184] sm:$0xff]
        %v543 = vld [vmem:[#allocation5 + $0x18c] sm:$0xf]
        %v544 = vld [vmem:[#allocation5 + $0x190] sm:$0xff]
        %v545 = vld [vmem:[#allocation5 + $0x198] sm:$0xff]
        %v546 = vld [vmem:[#allocation5 + $0x1a0] sm:$0xf]
        %v547 = vld [vmem:[#allocation5 + $0x1a4] sm:$0xff]
        %v548 = vld [vmem:[#allocation5 + $0x1ac] sm:$0xff]
        %v549 = vld [vmem:[#allocation5 + $0x1b4] sm:$0xf]
        %v550 = vld [vmem:[#allocation5 + $0x1b8] sm:$0xff]
        %v551 = vld [vmem:[#allocation5 + $0x1c0] sm:$0xff]
        %v552 = vld [vmem:[#allocation5 + $0x1c8] sm:$0xf]
        %v553 = vld [vmem:[#allocation5 + $0x1cc] sm:$0xff]
        %v554 = vld [vmem:[#allocation5 + $0x1d4] sm:$0xff]
        %v555 = vld [vmem:[#allocation5 + $0x1dc] sm:$0xf]
        %v556 = vld [vmem:[#allocation5 + $0x1e0] sm:$0xff]
        %v557 = vld [vmem:[#allocation5 + $0x1e8] sm:$0xff]
        %v558 = vld [vmem:[#allocation5 + $0x1f0] sm:$0xf]
        %v559 = vld [vmem:[#allocation5 + $0x1f4] sm:$0xff]
        %v560 = vld [vmem:[#allocation5 + $0x1fc] sm:$0xff]
        %v561 = vld [vmem:[#allocation5 + $0x204] sm:$0xf]
        %v562 = vld [vmem:[#allocation5 + $0x208] sm:$0xff]
        %v563 = vld [vmem:[#allocation5 + $0x210] sm:$0xff]
        %v564 = vld [vmem:[#allocation5 + $0x218] sm:$0xf]
        %v565 = vld [vmem:[#allocation5 + $0x21c] sm:$0xff]
        %v566 = vld [vmem:[#allocation5 + $0x224] sm:$0xff]
        %v567 = vld [vmem:[#allocation5 + $0x22c] sm:$0xf]
        %v568 = vld [vmem:[#allocation5 + $0x230] sm:$0xff]
        %v569 = vld [vmem:[#allocation5 + $0x238] sm:$0xff]
        %v570 = vld [vmem:[#allocation5 + $0x240] sm:$0xf]
        %v571 = vld [vmem:[#allocation5 + $0x244] sm:$0xff]
        %v572 = vld [vmem:[#allocation5 + $0x24c] sm:$0xff]
        %v573 = vld [vmem:[#allocation5 + $0x254] sm:$0xf]
        %v574 = vld [vmem:[#allocation5 + $0x258] sm:$0xff]
        %v575 = vld [vmem:[#allocation5 + $0x260] sm:$0xff]
        %v576 = vld [vmem:[#allocation5 + $0x268] sm:$0xf]
        %v577 = vld [vmem:[#allocation5 + $0x26c] sm:$0xff]
        %v578 = vld [vmem:[#allocation5 + $0x274] sm:$0xff]
        %v579 = vld [vmem:[#allocation5 + $0x27c] sm:$0xf]
        %v580 = vld [vmem:[#allocation5 + $0x280] sm:$0xff]
        %v581 = vld [vmem:[#allocation5 + $0x288] sm:$0xff]
        %v582 = vld [vmem:[#allocation5 + $0x290] sm:$0xf]
        %v583 = vld [vmem:[#allocation5 + $0x294] sm:$0xff]
        %v584 = vld [vmem:[#allocation5 + $0x29c] sm:$0xff]
        %v585 = vld [vmem:[#allocation5 + $0x2a4] sm:$0xf]
        %v586 = vld [vmem:[#allocation5 + $0x2a8] sm:$0xff]
        %v587 = vld [vmem:[#allocation5 + $0x2b0] sm:$0xff]
        %v588 = vld [vmem:[#allocation5 + $0x2b8] sm:$0xf]
        %v589 = vld [vmem:[#allocation5 + $0x2bc] sm:$0xff]
        %v590 = vld [vmem:[#allocation5 + $0x2c4] sm:$0xff]
        %v591 = vld [vmem:[#allocation5 + $0x2cc] sm:$0xf]
        %v592 = vld [vmem:[#allocation5 + $0x2d0] sm:$0xff]
        %v593 = vld [vmem:[#allocation5 + $0x2d8] sm:$0xff]
        %v594 = vld [vmem:[#allocation5 + $0x2e0] sm:$0xf]
        %v595 = vld [vmem:[#allocation5 + $0x2e4] sm:$0xff]
        %v596 = vld [vmem:[#allocation5 + $0x2ec] sm:$0xff]
        %v597 = vld [vmem:[#allocation5 + $0x2f4] sm:$0xf]
        %v598 = vld [vmem:[#allocation5 + $0x2f8] sm:$0xff]
        %v599 = vld [vmem:[#allocation5 + $0x300] sm:$0xff]
        %v600 = vld [vmem:[#allocation5 + $0x308] sm:$0xf]
        %v601 = vld [vmem:[#allocation5 + $0x30c] sm:$0xff]
        %v602 = vld [vmem:[#allocation5 + $0x314] sm:$0xff]
        %v603 = vld [vmem:[#allocation5 + $0x31c] sm:$0xf]
        %v604 = vld [vmem:[#allocation5 + $0x320] sm:$0xff]
        %v605 = vld [vmem:[#allocation5 + $0x328] sm:$0xff]
        %v606 = vld [vmem:[#allocation5 + $0x330] sm:$0xf]
        %v607 = vld [vmem:[#allocation5 + $0x334] sm:$0xff]
        %v608 = vld [vmem:[#allocation5 + $0x33c] sm:$0xff]
        %v609 = vld [vmem:[#allocation5 + $0x344] sm:$0xf]
        %v610 = vld [vmem:[#allocation5 + $0x348] sm:$0xff]
        %v611 = vld [vmem:[#allocation5 + $0x350] sm:$0xff]
        %v612 = vld [vmem:[#allocation5 + $0x358] sm:$0xf]
        %v613 = vld [vmem:[#allocation5 + $0x35c] sm:$0xff]
        %v614 = vld [vmem:[#allocation5 + $0x364] sm:$0xff]
        %v615 = vld [vmem:[#allocation5 + $0x36c] sm:$0xf]
        %v616 = vld [vmem:[#allocation5 + $0x370] sm:$0xff]
        %v617 = vld [vmem:[#allocation5 + $0x378] sm:$0xff]
        %v618 = vld [vmem:[#allocation5 + $0x380] sm:$0xf]
        %v619 = vld [vmem:[#allocation5 + $0x384] sm:$0xff]
        %v620 = vld [vmem:[#allocation5 + $0x38c] sm:$0xff]
        %v621 = vld [vmem:[#allocation5 + $0x394] sm:$0xf]
        %v622 = vld [vmem:[#allocation5 + $0x398] sm:$0xff]
        %v623 = vld [vmem:[#allocation5 + $0x3a0] sm:$0xff]
        %v624 = vld [vmem:[#allocation5 + $0x3a8] sm:$0xf]
        %v625 = vld [vmem:[#allocation5 + $0x3ac] sm:$0xff]
        %v626 = vld [vmem:[#allocation5 + $0x3b4] sm:$0xff]
        %v627 = vld [vmem:[#allocation5 + $0x3bc] sm:$0xf]
        %v628 = vld [vmem:[#allocation5 + $0x3c0] sm:$0xff]
        %v629 = vld [vmem:[#allocation5 + $0x3c8] sm:$0xff]
        %v630 = vld [vmem:[#allocation5 + $0x3d0] sm:$0xf]
        %v631 = vld [vmem:[#allocation5 + $0x3d4] sm:$0xff]
        %v632 = vld [vmem:[#allocation5 + $0x3dc] sm:$0xff]
        %v633 = vld [vmem:[#allocation5 + $0x3e4] sm:$0xf]
        %v634 = vld [vmem:[#allocation5 + $0x3e8] sm:$0xff]
        %v635 = vld [vmem:[#allocation5 + $0x3f0] sm:$0xff]
        %v636 = vld [vmem:[#allocation5 + $0x3f8] sm:$0xf]
        %v637 = vld [vmem:[#allocation5 + $0x3fc] sm:$0xff]
        %v638 = vld [vmem:[#allocation5 + $0x404] sm:$0xff]
        %v639 = vld [vmem:[#allocation5 + $0x40c] sm:$0xf]
        %v640 = vld [vmem:[#allocation5 + $0x410] sm:$0xff]
        %v641 = vld [vmem:[#allocation5 + $0x418] sm:$0xff]
        %v642 = vld [vmem:[#allocation5 + $0x420] sm:$0xf]
        %v643 = vld [vmem:[#allocation5 + $0x424] sm:$0xff]
        %v644 = vld [vmem:[#allocation5 + $0x42c] sm:$0xff]
        %v645 = vld [vmem:[#allocation5 + $0x434] sm:$0xf]
        %v646 = vld [vmem:[#allocation5 + $0x438] sm:$0xff]
        %v647 = vld [vmem:[#allocation5 + $0x440] sm:$0xff]
        %v648 = vld [vmem:[#allocation5 + $0x448] sm:$0xf]
        %v649 = vld [vmem:[#allocation5 + $0x44c] sm:$0xff]
        %v650 = vld [vmem:[#allocation5 + $0x454] sm:$0xff]
        %v651 = vld [vmem:[#allocation5 + $0x45c] sm:$0xf]
        %v652 = vld [vmem:[#allocation5 + $0x460] sm:$0xff]
        %v653 = vld [vmem:[#allocation5 + $0x468] sm:$0xff]
        %v654 = vld [vmem:[#allocation5 + $0x470] sm:$0xf]
        %v655 = vld [vmem:[#allocation5 + $0x474] sm:$0xff]
        %v656 = vld [vmem:[#allocation5 + $0x47c] sm:$0xff]
        %v657 = vld [vmem:[#allocation5 + $0x484] sm:$0xf]
        %v658 = vld [vmem:[#allocation5 + $0x488] sm:$0xff]
        %v659 = vld [vmem:[#allocation5 + $0x490] sm:$0xff]
        %v660 = vld [vmem:[#allocation5 + $0x498] sm:$0xf]
        %v661 = vld [vmem:[#allocation5 + $0x49c] sm:$0xff]
        %v662 = vld [vmem:[#allocation5 + $0x4a4] sm:$0xff]
        %v663 = vld [vmem:[#allocation5 + $0x4ac] sm:$0xf]
        %v664 = vld [vmem:[#allocation5 + $0x4b0] sm:$0xff]
        %v665 = vld [vmem:[#allocation5 + $0x4b8] sm:$0xff]
        %v666 = vld [vmem:[#allocation5 + $0x4c0] sm:$0xf]
        %v667 = vld [vmem:[#allocation5 + $0x4c4] sm:$0xff]
        %v668 = vld [vmem:[#allocation5 + $0x4cc] sm:$0xff]
        %v669 = vld [vmem:[#allocation5 + $0x4d4] sm:$0xf]
        %v670 = vld [vmem:[#allocation5 + $0x4d8] sm:$0xff]
        %v671 = vld [vmem:[#allocation5 + $0x4e0] sm:$0xff]
        %v672 = vld [vmem:[#allocation5 + $0x4e8] sm:$0xf]
        %v673 = vld [vmem:[#allocation5 + $0x4ec] sm:$0xff]
        %v674 = vld [vmem:[#allocation5 + $0x4f4] sm:$0xff]
        %v675 = vld [vmem:[#allocation5 + $0x4fc] sm:$0xf]
        %v676 = vld [vmem:[#allocation5 + $0x500] sm:$0xff]
        %v677 = vld [vmem:[#allocation5 + $0x508] sm:$0xff]
        %v678 = vld [vmem:[#allocation5 + $0x510] sm:$0xf]
        %v679 = vld [vmem:[#allocation5 + $0x514] sm:$0xff]
        %v680 = vld [vmem:[#allocation5 + $0x51c] sm:$0xff]
        %v681 = vld [vmem:[#allocation5 + $0x524] sm:$0xf]
        %v682 = vld [vmem:[#allocation5 + $0x528] sm:$0xff]
        %v683 = vld [vmem:[#allocation5 + $0x530] sm:$0xff]
        %v684 = vld [vmem:[#allocation5 + $0x538] sm:$0xf]
        %v685 = vld [vmem:[#allocation5 + $0x53c] sm:$0xff]
        %v686 = vld [vmem:[#allocation5 + $0x544] sm:$0xff]
        %v687 = vld [vmem:[#allocation5 + $0x54c] sm:$0xf]
        %v688 = vld [vmem:[#allocation5 + $0x550] sm:$0xff]
        %v689 = vld [vmem:[#allocation5 + $0x558] sm:$0xff]
        %v690 = vld [vmem:[#allocation5 + $0x560] sm:$0xf]
        %v691 = vld [vmem:[#allocation5 + $0x564] sm:$0xff]
        %v692 = vld [vmem:[#allocation5 + $0x56c] sm:$0xff]
        %v693 = vld [vmem:[#allocation5 + $0x574] sm:$0xf]
        %v694 = vld [vmem:[#allocation5 + $0x578] sm:$0xff]
        %v695 = vld [vmem:[#allocation5 + $0x580] sm:$0xff]
        %v696 = vld [vmem:[#allocation5 + $0x588] sm:$0xf]
        %v697 = vld [vmem:[#allocation5 + $0x58c] sm:$0xff]
        %v698 = vld [vmem:[#allocation5 + $0x594] sm:$0xff]
        %v699 = vld [vmem:[#allocation5 + $0x59c] sm:$0xf]
        %v700 = vld [vmem:[#allocation5 + $0x5a0] sm:$0xff]
        %v701 = vld [vmem:[#allocation5 + $0x5a8] sm:$0xff]
        %v702 = vld [vmem:[#allocation5 + $0x5b0] sm:$0xf]
        %v703 = vld [vmem:[#allocation5 + $0x5b4] sm:$0xff]
        %v704 = vld [vmem:[#allocation5 + $0x5bc] sm:$0xff]
        %v705 = vld [vmem:[#allocation5 + $0x5c4] sm:$0xf]
        %v706 = vld [vmem:[#allocation5 + $0x5c8] sm:$0xff]
        %v707 = vld [vmem:[#allocation5 + $0x5d0] sm:$0xff]
        %v708 = vld [vmem:[#allocation5 + $0x5d8] sm:$0xf]
        %v709 = vld [vmem:[#allocation5 + $0x5dc] sm:$0xff]
        %v710 = vld [vmem:[#allocation5 + $0x5e4] sm:$0xff]
        %v711 = vld [vmem:[#allocation5 + $0x5ec] sm:$0xf]
        %v712 = vld [vmem:[#allocation5 + $0x5f0] sm:$0xff]
        %v713 = vld [vmem:[#allocation5 + $0x5f8] sm:$0xff]
        %v714 = vld [vmem:[#allocation5 + $0x600] sm:$0xf]
        %v715 = vld [vmem:[#allocation5 + $0x604] sm:$0xff]
        %v716 = vld [vmem:[#allocation5 + $0x60c] sm:$0xff]
        %v717 = vld [vmem:[#allocation5 + $0x614] sm:$0xf]
        %v718 = vld [vmem:[#allocation5 + $0x618] sm:$0xff]
        %v719 = vld [vmem:[#allocation5 + $0x620] sm:$0xff]
        %v720 = vld [vmem:[#allocation5 + $0x628] sm:$0xf]
        %v721 = vld [vmem:[#allocation5 + $0x62c] sm:$0xff]
        %v722 = vld [vmem:[#allocation5 + $0x634] sm:$0xff]
        %v723 = vld [vmem:[#allocation5 + $0x63c] sm:$0xf]
        %v724 = vld [vmem:[#allocation5 + $0x640] sm:$0xff]
        %v725 = vld [vmem:[#allocation5 + $0x648] sm:$0xff]
        %v726 = vld [vmem:[#allocation5 + $0x650] sm:$0xf]
        %v727 = vld [vmem:[#allocation5 + $0x654] sm:$0xff]
        %v728 = vld [vmem:[#allocation5 + $0x65c] sm:$0xff]
        %v729 = vld [vmem:[#allocation5 + $0x664] sm:$0xf]
        %v730 = vld [vmem:[#allocation5 + $0x668] sm:$0xff]
        %v731 = vld [vmem:[#allocation5 + $0x670] sm:$0xff]
        %v732 = vld [vmem:[#allocation5 + $0x678] sm:$0xf]
        %v733 = vld [vmem:[#allocation5 + $0x67c] sm:$0xff]
        %v734 = vld [vmem:[#allocation5 + $0x684] sm:$0xff]
        %v735 = vld [vmem:[#allocation5 + $0x68c] sm:$0xf]
        %v736 = vld [vmem:[#allocation5 + $0x690] sm:$0x33]
        %v737 = vld [vmem:[#allocation5 + $0x698] sm:$0x33]
        %v738 = vld [vmem:[#allocation5 + $0x6a0] sm:$0x3]
        %v739 = vld [vmem:[%s2] sm:$0x1f]
        %v741 = vlaneseq
        %v742 = vshrl.u32 %v741, 7
        %v743 = vsub.s32 0, %v742
        %v744 = vrot.slane %v739, %v743
        %v745 = vlaneseq
        %v746 = vshrl.u32 %v745, 7
        %v747 = vsub.s32 1, %v746
        %v748 = vrot.slane %v739, %v747
        %v749 = vlaneseq
        %v750 = vshrl.u32 %v749, 7
        %v751 = vsub.s32 2, %v750
        %v752 = vrot.slane %v739, %v751
        %v753 = vlaneseq
        %v754 = vshrl.u32 %v753, 7
        %v755 = vsub.s32 3, %v754
        %v756 = vrot.slane %v739, %v755
        %v757 = vlaneseq
        %v758 = vshrl.u32 %v757, 7
        %v759 = vsub.s32 4, %v758
        %v760 = vrot.slane %v739, %v759
        %v772 = vunpack.c.l.b16 %v478
        %v773 = vunpack.c.h.b16 %v478
        %v774 = vunpack.c.l.b16 %v479
        %v775 = vunpack.c.h.b16 %v479
        %v776 = vunpack.c.l.b16 %v480
        %v777 = vunpack.c.h.b16 %v480
        %v778 = vunpack.c.l.b16 %v481
        %v779 = vunpack.c.h.b16 %v481
        %v780 = vunpack.c.l.b16 %v482
        %v781 = vunpack.c.h.b16 %v482
        %v782 = vunpack.c.l.b16 %v483
        %v783 = vunpack.c.h.b16 %v483
        %v784 = vpack.c.b16 %v778, %v772
        %v785 = vpack.c.b16 %v779, %v773
        %v786 = vpack.c.b16 %v780, %v774
        %v787 = vpack.c.b16 %v781, %v775
        %v788 = vpack.c.b16 %v782, %v776
        %v789 = vpack.c.b16 %v783, %v777
        %v1050 = vunpack.c.l.b16 %v484
        %v1051 = vunpack.c.h.b16 %v484
        %v1052 = vunpack.c.l.b16 %v485
        %v1053 = vunpack.c.h.b16 %v485
        %v1054 = vunpack.c.l.b16 %v486
        %v1055 = vunpack.c.l.b16 %v487
        %v1056 = vunpack.c.h.b16 %v487
        %v1057 = vunpack.c.l.b16 %v488
        %v1058 = vunpack.c.h.b16 %v488
        %v1059 = vunpack.c.l.b16 %v489
        %v1060 = vunpack.c.l.b16 %v490
        %v1061 = vunpack.c.h.b16 %v490
        %v1062 = vunpack.c.l.b16 %v491
        %v1063 = vunpack.c.h.b16 %v491
        %v1064 = vunpack.c.l.b16 %v492
        %v1065 = vunpack.c.l.b16 %v493
        %v1066 = vunpack.c.h.b16 %v493
        %v1067 = vunpack.c.l.b16 %v494
        %v1068 = vunpack.c.h.b16 %v494
        %v1069 = vunpack.c.l.b16 %v495
        %v1070 = vunpack.c.l.b16 %v496
        %v1071 = vunpack.c.h.b16 %v496
        %v1072 = vunpack.c.l.b16 %v497
        %v1073 = vunpack.c.h.b16 %v497
        %v1074 = vunpack.c.l.b16 %v498
        %v1075 = vunpack.c.l.b16 %v499
        %v1076 = vunpack.c.h.b16 %v499
        %v1077 = vunpack.c.l.b16 %v500
        %v1078 = vunpack.c.h.b16 %v500
        %v1079 = vunpack.c.l.b16 %v501
        %v1080 = vunpack.c.l.b16 %v502
        %v1081 = vunpack.c.h.b16 %v502
        %v1082 = vunpack.c.l.b16 %v503
        %v1083 = vunpack.c.h.b16 %v503
        %v1084 = vunpack.c.l.b16 %v504
        %v1085 = vunpack.c.l.b16 %v505
        %v1086 = vunpack.c.h.b16 %v505
        %v1087 = vunpack.c.l.b16 %v506
        %v1088 = vunpack.c.h.b16 %v506
        %v1089 = vunpack.c.l.b16 %v507
        %v1090 = vunpack.c.l.b16 %v508
        %v1091 = vunpack.c.h.b16 %v508
        %v1092 = vunpack.c.l.b16 %v509
        %v1093 = vunpack.c.h.b16 %v509
        %v1094 = vunpack.c.l.b16 %v510
        %v1095 = vunpack.c.l.b16 %v511
        %v1096 = vunpack.c.h.b16 %v511
        %v1097 = vunpack.c.l.b16 %v512
        %v1098 = vunpack.c.h.b16 %v512
        %v1099 = vunpack.c.l.b16 %v513
        %v1100 = vunpack.c.l.b16 %v514
        %v1101 = vunpack.c.h.b16 %v514
        %v1102 = vunpack.c.l.b16 %v515
        %v1103 = vunpack.c.h.b16 %v515
        %v1104 = vunpack.c.l.b16 %v516
        %v1105 = vunpack.c.l.b16 %v517
        %v1106 = vunpack.c.h.b16 %v517
        %v1107 = vunpack.c.l.b16 %v518
        %v1108 = vunpack.c.h.b16 %v518
        %v1109 = vunpack.c.l.b16 %v519
        %v1110 = vunpack.c.l.b16 %v520
        %v1111 = vunpack.c.h.b16 %v520
        %v1112 = vunpack.c.l.b16 %v521
        %v1113 = vunpack.c.h.b16 %v521
        %v1114 = vunpack.c.l.b16 %v522
        %v1115 = vunpack.c.l.b16 %v523
        %v1116 = vunpack.c.h.b16 %v523
        %v1117 = vunpack.c.l.b16 %v524
        %v1118 = vunpack.c.h.b16 %v524
        %v1119 = vunpack.c.l.b16 %v525
        %v1120 = vunpack.c.l.b16 %v526
        %v1121 = vunpack.c.h.b16 %v526
        %v1122 = vunpack.c.l.b16 %v527
        %v1123 = vunpack.c.h.b16 %v527
        %v1124 = vunpack.c.l.b16 %v528
        %v1125 = vunpack.c.l.b16 %v529
        %v1126 = vunpack.c.h.b16 %v529
        %v1127 = vunpack.c.l.b16 %v530
        %v1128 = vunpack.c.h.b16 %v530
        %v1129 = vunpack.c.l.b16 %v531
        %v1130 = vunpack.c.l.b16 %v532
        %v1131 = vunpack.c.h.b16 %v532
        %v1132 = vunpack.c.l.b16 %v533
        %v1133 = vunpack.c.h.b16 %v533
        %v1134 = vunpack.c.l.b16 %v534
        %v1135 = vunpack.c.l.b16 %v535
        %v1136 = vunpack.c.h.b16 %v535
        %v1137 = vunpack.c.l.b16 %v536
        %v1138 = vunpack.c.h.b16 %v536
        %v1139 = vunpack.c.l.b16 %v537
        %v1140 = vunpack.c.l.b16 %v538
        %v1141 = vunpack.c.h.b16 %v538
        %v1142 = vunpack.c.l.b16 %v539
        %v1143 = vunpack.c.h.b16 %v539
        %v1144 = vunpack.c.l.b16 %v540
        %v1145 = vunpack.c.l.b16 %v541
        %v1146 = vunpack.c.h.b16 %v541
        %v1147 = vunpack.c.l.b16 %v542
        %v1148 = vunpack.c.h.b16 %v542
        %v1149 = vunpack.c.l.b16 %v543
        %v1150 = vunpack.c.l.b16 %v544
        %v1151 = vunpack.c.h.b16 %v544
        %v1152 = vunpack.c.l.b16 %v545
        %v1153 = vunpack.c.h.b16 %v545
        %v1154 = vunpack.c.l.b16 %v546
        %v1155 = vunpack.c.l.b16 %v547
        %v1156 = vunpack.c.h.b16 %v547
        %v1157 = vunpack.c.l.b16 %v548
        %v1158 = vunpack.c.h.b16 %v548
        %v1159 = vunpack.c.l.b16 %v549
        %v1160 = vunpack.c.l.b16 %v550
        %v1161 = vunpack.c.h.b16 %v550
        %v1162 = vunpack.c.l.b16 %v551
        %v1163 = vunpack.c.h.b16 %v551
        %v1164 = vunpack.c.l.b16 %v552
        %v1165 = vunpack.c.l.b16 %v553
        %v1166 = vunpack.c.h.b16 %v553
        %v1167 = vunpack.c.l.b16 %v554
        %v1168 = vunpack.c.h.b16 %v554
        %v1169 = vunpack.c.l.b16 %v555
        %v1170 = vunpack.c.l.b16 %v556
        %v1171 = vunpack.c.h.b16 %v556
        %v1172 = vunpack.c.l.b16 %v557
        %v1173 = vunpack.c.h.b16 %v557
        %v1174 = vunpack.c.l.b16 %v558
        %v1175 = vunpack.c.l.b16 %v559
        %v1176 = vunpack.c.h.b16 %v559
        %v1177 = vunpack.c.l.b16 %v560
        %v1178 = vunpack.c.h.b16 %v560
        %v1179 = vunpack.c.l.b16 %v561
        %v1180 = vunpack.c.l.b16 %v562
        %v1181 = vunpack.c.h.b16 %v562
        %v1182 = vunpack.c.l.b16 %v563
        %v1183 = vunpack.c.h.b16 %v563
        %v1184 = vunpack.c.l.b16 %v564
        %v1185 = vunpack.c.l.b16 %v565
        %v1186 = vunpack.c.h.b16 %v565
        %v1187 = vunpack.c.l.b16 %v566
        %v1188 = vunpack.c.h.b16 %v566
        %v1189 = vunpack.c.l.b16 %v567
        %v1190 = vunpack.c.l.b16 %v568
        %v1191 = vunpack.c.h.b16 %v568
        %v1192 = vunpack.c.l.b16 %v569
        %v1193 = vunpack.c.h.b16 %v569
        %v1194 = vunpack.c.l.b16 %v570
        %v1195 = vunpack.c.l.b16 %v571
        %v1196 = vunpack.c.h.b16 %v571
        %v1197 = vunpack.c.l.b16 %v572
        %v1198 = vunpack.c.h.b16 %v572
        %v1199 = vunpack.c.l.b16 %v573
        %v1200 = vunpack.c.l.b16 %v574
        %v1201 = vunpack.c.h.b16 %v574
        %v1202 = vunpack.c.l.b16 %v575
        %v1203 = vunpack.c.h.b16 %v575
        %v1204 = vunpack.c.l.b16 %v576
        %v1205 = vunpack.c.l.b16 %v577
        %v1206 = vunpack.c.h.b16 %v577
        %v1207 = vunpack.c.l.b16 %v578
        %v1208 = vunpack.c.h.b16 %v578
        %v1209 = vunpack.c.l.b16 %v579
        %v1210 = vunpack.c.l.b16 %v580
        %v1211 = vunpack.c.h.b16 %v580
        %v1212 = vunpack.c.l.b16 %v581
        %v1213 = vunpack.c.h.b16 %v581
        %v1214 = vunpack.c.l.b16 %v582
        %v1215 = vunpack.c.l.b16 %v583
        %v1216 = vunpack.c.h.b16 %v583
        %v1217 = vunpack.c.l.b16 %v584
        %v1218 = vunpack.c.h.b16 %v584
        %v1219 = vunpack.c.l.b16 %v585
        %v1220 = vunpack.c.l.b16 %v586
        %v1221 = vunpack.c.h.b16 %v586
        %v1222 = vunpack.c.l.b16 %v587
        %v1223 = vunpack.c.h.b16 %v587
        %v1224 = vunpack.c.l.b16 %v588
        %v1225 = vunpack.c.l.b16 %v589
        %v1226 = vunpack.c.h.b16 %v589
        %v1227 = vunpack.c.l.b16 %v590
        %v1228 = vunpack.c.h.b16 %v590
        %v1229 = vunpack.c.l.b16 %v591
        %v1230 = vunpack.c.l.b16 %v592
        %v1231 = vunpack.c.h.b16 %v592
        %v1232 = vunpack.c.l.b16 %v593
        %v1233 = vunpack.c.h.b16 %v593
        %v1234 = vunpack.c.l.b16 %v594
        %v1235 = vunpack.c.l.b16 %v595
        %v1236 = vunpack.c.h.b16 %v595
        %v1237 = vunpack.c.l.b16 %v596
        %v1238 = vunpack.c.h.b16 %v596
        %v1239 = vunpack.c.l.b16 %v597
        %v1240 = vunpack.c.l.b16 %v598
        %v1241 = vunpack.c.h.b16 %v598
        %v1242 = vunpack.c.l.b16 %v599
        %v1243 = vunpack.c.h.b16 %v599
        %v1244 = vunpack.c.l.b16 %v600
        %v1245 = vunpack.c.l.b16 %v601
        %v1246 = vunpack.c.h.b16 %v601
        %v1247 = vunpack.c.l.b16 %v602
        %v1248 = vunpack.c.h.b16 %v602
        %v1249 = vunpack.c.l.b16 %v603
        %v1250 = vunpack.c.l.b16 %v604
        %v1251 = vunpack.c.h.b16 %v604
        %v1252 = vunpack.c.l.b16 %v605
        %v1253 = vunpack.c.h.b16 %v605
        %v1254 = vunpack.c.l.b16 %v606
        %v1255 = vunpack.c.l.b16 %v607
        %v1256 = vunpack.c.h.b16 %v607
        %v1257 = vunpack.c.l.b16 %v608
        %v1258 = vunpack.c.h.b16 %v608
        %v1259 = vunpack.c.l.b16 %v609
        %v1260 = vunpack.c.l.b16 %v610
        %v1261 = vunpack.c.h.b16 %v610
        %v1262 = vunpack.c.l.b16 %v611
        %v1263 = vunpack.c.h.b16 %v611
        %v1264 = vunpack.c.l.b16 %v612
        %v1265 = vunpack.c.l.b16 %v613
        %v1266 = vunpack.c.h.b16 %v613
        %v1267 = vunpack.c.l.b16 %v614
        %v1268 = vunpack.c.h.b16 %v614
        %v1269 = vunpack.c.l.b16 %v615
        %v1270 = vunpack.c.l.b16 %v616
        %v1271 = vunpack.c.h.b16 %v616
        %v1272 = vunpack.c.l.b16 %v617
        %v1273 = vunpack.c.h.b16 %v617
        %v1274 = vunpack.c.l.b16 %v618
        %v1275 = vunpack.c.l.b16 %v619
        %v1276 = vunpack.c.h.b16 %v619
        %v1277 = vunpack.c.l.b16 %v620
        %v1278 = vunpack.c.h.b16 %v620
        %v1279 = vunpack.c.l.b16 %v621
        %v1280 = vunpack.c.l.b16 %v622
        %v1281 = vunpack.c.h.b16 %v622
        %v1282 = vunpack.c.l.b16 %v623
        %v1283 = vunpack.c.h.b16 %v623
        %v1284 = vunpack.c.l.b16 %v624
        %v1285 = vunpack.c.l.b16 %v625
        %v1286 = vunpack.c.h.b16 %v625
        %v1287 = vunpack.c.l.b16 %v626
        %v1288 = vunpack.c.h.b16 %v626
        %v1289 = vunpack.c.l.b16 %v627
        %v1290 = vunpack.c.l.b16 %v628
        %v1291 = vunpack.c.h.b16 %v628
        %v1292 = vunpack.c.l.b16 %v629
        %v1293 = vunpack.c.h.b16 %v629
        %v1294 = vunpack.c.l.b16 %v630
        %v1295 = vunpack.c.l.b16 %v631
        %v1296 = vunpack.c.h.b16 %v631
        %v1297 = vunpack.c.l.b16 %v632
        %v1298 = vunpack.c.h.b16 %v632
        %v1299 = vunpack.c.l.b16 %v633
        %v1300 = vunpack.c.l.b16 %v634
        %v1301 = vunpack.c.h.b16 %v634
        %v1302 = vunpack.c.l.b16 %v635
        %v1303 = vunpack.c.h.b16 %v635
        %v1304 = vunpack.c.l.b16 %v636
        %v1305 = vunpack.c.l.b16 %v637
        %v1306 = vunpack.c.h.b16 %v637
        %v1307 = vunpack.c.l.b16 %v638
        %v1308 = vunpack.c.h.b16 %v638
        %v1309 = vunpack.c.l.b16 %v639
        %v1310 = vunpack.c.l.b16 %v640
        %v1311 = vunpack.c.h.b16 %v640
        %v1312 = vunpack.c.l.b16 %v641
        %v1313 = vunpack.c.h.b16 %v641
        %v1314 = vunpack.c.l.b16 %v642
        %v1315 = vunpack.c.l.b16 %v643
        %v1316 = vunpack.c.h.b16 %v643
        %v1317 = vunpack.c.l.b16 %v644
        %v1318 = vunpack.c.h.b16 %v644
        %v1319 = vunpack.c.l.b16 %v645
        %v1320 = vunpack.c.l.b16 %v646
        %v1321 = vunpack.c.h.b16 %v646
        %v1322 = vunpack.c.l.b16 %v647
        %v1323 = vunpack.c.h.b16 %v647
        %v1324 = vunpack.c.l.b16 %v648
        %v1325 = vunpack.c.l.b16 %v649
        %v1326 = vunpack.c.h.b16 %v649
        %v1327 = vunpack.c.l.b16 %v650
        %v1328 = vunpack.c.h.b16 %v650
        %v1329 = vunpack.c.l.b16 %v651
        %v1330 = vunpack.c.l.b16 %v652
        %v1331 = vunpack.c.h.b16 %v652
        %v1332 = vunpack.c.l.b16 %v653
        %v1333 = vunpack.c.h.b16 %v653
        %v1334 = vunpack.c.l.b16 %v654
        %v1335 = vunpack.c.l.b16 %v655
        %v1336 = vunpack.c.h.b16 %v655
        %v1337 = vunpack.c.l.b16 %v656
        %v1338 = vunpack.c.h.b16 %v656
        %v1339 = vunpack.c.l.b16 %v657
        %v1340 = vunpack.c.l.b16 %v658
        %v1341 = vunpack.c.h.b16 %v658
        %v1342 = vunpack.c.l.b16 %v659
        %v1343 = vunpack.c.h.b16 %v659
        %v1344 = vunpack.c.l.b16 %v660
        %v1345 = vunpack.c.l.b16 %v661
        %v1346 = vunpack.c.h.b16 %v661
        %v1347 = vunpack.c.l.b16 %v662
        %v1348 = vunpack.c.h.b16 %v662
        %v1349 = vunpack.c.l.b16 %v663
        %v1350 = vunpack.c.l.b16 %v664
        %v1351 = vunpack.c.h.b16 %v664
        %v1352 = vunpack.c.l.b16 %v665
        %v1353 = vunpack.c.h.b16 %v665
        %v1354 = vunpack.c.l.b16 %v666
        %v1355 = vunpack.c.l.b16 %v667
        %v1356 = vunpack.c.h.b16 %v667
        %v1357 = vunpack.c.l.b16 %v668
        %v1358 = vunpack.c.h.b16 %v668
        %v1359 = vunpack.c.l.b16 %v669
        %v1360 = vunpack.c.l.b16 %v670
        %v1361 = vunpack.c.h.b16 %v670
        %v1362 = vunpack.c.l.b16 %v671
        %v1363 = vunpack.c.h.b16 %v671
        %v1364 = vunpack.c.l.b16 %v672
        %v1365 = vunpack.c.l.b16 %v673
        %v1366 = vunpack.c.h.b16 %v673
        %v1367 = vunpack.c.l.b16 %v674
        %v1368 = vunpack.c.h.b16 %v674
        %v1369 = vunpack.c.l.b16 %v675
        %v1370 = vunpack.c.l.b16 %v676
        %v1371 = vunpack.c.h.b16 %v676
        %v1372 = vunpack.c.l.b16 %v677
        %v1373 = vunpack.c.h.b16 %v677
        %v1374 = vunpack.c.l.b16 %v678
        %v1375 = vunpack.c.l.b16 %v679
        %v1376 = vunpack.c.h.b16 %v679
        %v1377 = vunpack.c.l.b16 %v680
        %v1378 = vunpack.c.h.b16 %v680
        %v1379 = vunpack.c.l.b16 %v681
        %v1380 = vunpack.c.l.b16 %v682
        %v1381 = vunpack.c.h.b16 %v682
        %v1382 = vunpack.c.l.b16 %v683
        %v1383 = vunpack.c.h.b16 %v683
        %v1384 = vunpack.c.l.b16 %v684
        %v1385 = vunpack.c.l.b16 %v685
        %v1386 = vunpack.c.h.b16 %v685
        %v1387 = vunpack.c.l.b16 %v686
        %v1388 = vunpack.c.h.b16 %v686
        %v1389 = vunpack.c.l.b16 %v687
        %v1390 = vunpack.c.l.b16 %v688
        %v1391 = vunpack.c.h.b16 %v688
        %v1392 = vunpack.c.l.b16 %v689
        %v1393 = vunpack.c.h.b16 %v689
        %v1394 = vunpack.c.l.b16 %v690
        %v1395 = vunpack.c.l.b16 %v691
        %v1396 = vunpack.c.h.b16 %v691
        %v1397 = vunpack.c.l.b16 %v692
        %v1398 = vunpack.c.h.b16 %v692
        %v1399 = vunpack.c.l.b16 %v693
        %v1400 = vunpack.c.l.b16 %v694
        %v1401 = vunpack.c.h.b16 %v694
        %v1402 = vunpack.c.l.b16 %v695
        %v1403 = vunpack.c.h.b16 %v695
        %v1404 = vunpack.c.l.b16 %v696
        %v1405 = vunpack.c.l.b16 %v697
        %v1406 = vunpack.c.h.b16 %v697
        %v1407 = vunpack.c.l.b16 %v698
        %v1408 = vunpack.c.h.b16 %v698
        %v1409 = vunpack.c.l.b16 %v699
        %v1410 = vunpack.c.l.b16 %v700
        %v1411 = vunpack.c.h.b16 %v700
        %v1412 = vunpack.c.l.b16 %v701
        %v1413 = vunpack.c.h.b16 %v701
        %v1414 = vunpack.c.l.b16 %v702
        %v1415 = vunpack.c.l.b16 %v703
        %v1416 = vunpack.c.h.b16 %v703
        %v1417 = vunpack.c.l.b16 %v704
        %v1418 = vunpack.c.h.b16 %v704
        %v1419 = vunpack.c.l.b16 %v705
        %v1420 = vunpack.c.l.b16 %v706
        %v1421 = vunpack.c.h.b16 %v706
        %v1422 = vunpack.c.l.b16 %v707
        %v1423 = vunpack.c.h.b16 %v707
        %v1424 = vunpack.c.l.b16 %v708
        %v1425 = vunpack.c.l.b16 %v709
        %v1426 = vunpack.c.h.b16 %v709
        %v1427 = vunpack.c.l.b16 %v710
        %v1428 = vunpack.c.h.b16 %v710
        %v1429 = vunpack.c.l.b16 %v711
        %v1430 = vunpack.c.l.b16 %v712
        %v1431 = vunpack.c.h.b16 %v712
        %v1432 = vunpack.c.l.b16 %v713
        %v1433 = vunpack.c.h.b16 %v713
        %v1434 = vunpack.c.l.b16 %v714
        %v1435 = vunpack.c.l.b16 %v715
        %v1436 = vunpack.c.h.b16 %v715
        %v1437 = vunpack.c.l.b16 %v716
        %v1438 = vunpack.c.h.b16 %v716
        %v1439 = vunpack.c.l.b16 %v717
        %v1440 = vunpack.c.l.b16 %v718
        %v1441 = vunpack.c.h.b16 %v718
        %v1442 = vunpack.c.l.b16 %v719
        %v1443 = vunpack.c.h.b16 %v719
        %v1444 = vunpack.c.l.b16 %v720
        %v1445 = vunpack.c.l.b16 %v721
        %v1446 = vunpack.c.h.b16 %v721
        %v1447 = vunpack.c.l.b16 %v722
        %v1448 = vunpack.c.h.b16 %v722
        %v1449 = vunpack.c.l.b16 %v723
        %v1450 = vunpack.c.l.b16 %v724
        %v1451 = vunpack.c.h.b16 %v724
        %v1452 = vunpack.c.l.b16 %v725
        %v1453 = vunpack.c.h.b16 %v725
        %v1454 = vunpack.c.l.b16 %v726
        %v1455 = vunpack.c.l.b16 %v727
        %v1456 = vunpack.c.h.b16 %v727
        %v1457 = vunpack.c.l.b16 %v728
        %v1458 = vunpack.c.h.b16 %v728
        %v1459 = vunpack.c.l.b16 %v729
        %v1460 = vunpack.c.l.b16 %v730
        %v1461 = vunpack.c.h.b16 %v730
        %v1462 = vunpack.c.l.b16 %v731
        %v1463 = vunpack.c.h.b16 %v731
        %v1464 = vunpack.c.l.b16 %v732
        %v1465 = vunpack.c.l.b16 %v733
        %v1466 = vunpack.c.h.b16 %v733
        %v1467 = vunpack.c.l.b16 %v734
        %v1468 = vunpack.c.h.b16 %v734
        %v1469 = vunpack.c.l.b16 %v735
        %v1470 = vunpack.c.l.b16 %v736
        %v1471 = vunpack.c.h.b16 %v736
        %v1472 = vunpack.c.l.b16 %v737
        %v1473 = vunpack.c.h.b16 %v737
        %v1474 = vunpack.c.l.b16 %v738
        %v1475 = vpack.c.b16 %v1055, %v1050
        %v1476 = vpack.c.b16 %v1056, %v1051
        %v1477 = vpack.c.b16 %v1057, %v1052
        %v1478 = vpack.c.b16 %v1058, %v1053
        %v1479 = vpack.c.b16 %v1059, %v1054
        %v1480 = vpack.c.b16 %v1065, %v1060
        %v1481 = vpack.c.b16 %v1066, %v1061
        %v1482 = vpack.c.b16 %v1067, %v1062
        %v1483 = vpack.c.b16 %v1068, %v1063
        %v1484 = vpack.c.b16 %v1069, %v1064
        %v1485 = vpack.c.b16 %v1075, %v1070
        %v1486 = vpack.c.b16 %v1076, %v1071
        %v1487 = vpack.c.b16 %v1077, %v1072
        %v1488 = vpack.c.b16 %v1078, %v1073
        %v1489 = vpack.c.b16 %v1079, %v1074
        %v1490 = vpack.c.b16 %v1085, %v1080
        %v1491 = vpack.c.b16 %v1086, %v1081
        %v1492 = vpack.c.b16 %v1087, %v1082
        %v1493 = vpack.c.b16 %v1088, %v1083
        %v1494 = vpack.c.b16 %v1089, %v1084
        %v1495 = vpack.c.b16 %v1095, %v1090
        %v1496 = vpack.c.b16 %v1096, %v1091
        %v1497 = vpack.c.b16 %v1097, %v1092
        %v1498 = vpack.c.b16 %v1098, %v1093
        %v1499 = vpack.c.b16 %v1099, %v1094
        %v1500 = vpack.c.b16 %v1105, %v1100
        %v1501 = vpack.c.b16 %v1106, %v1101
        %v1502 = vpack.c.b16 %v1107, %v1102
        %v1503 = vpack.c.b16 %v1108, %v1103
        %v1504 = vpack.c.b16 %v1109, %v1104
        %v1505 = vpack.c.b16 %v1115, %v1110
        %v1506 = vpack.c.b16 %v1116, %v1111
        %v1507 = vpack.c.b16 %v1117, %v1112
        %v1508 = vpack.c.b16 %v1118, %v1113
        %v1509 = vpack.c.b16 %v1119, %v1114
        %v1510 = vpack.c.b16 %v1125, %v1120
        %v1511 = vpack.c.b16 %v1126, %v1121
        %v1512 = vpack.c.b16 %v1127, %v1122
        %v1513 = vpack.c.b16 %v1128, %v1123
        %v1514 = vpack.c.b16 %v1129, %v1124
        %v1515 = vpack.c.b16 %v1135, %v1130
        %v1516 = vpack.c.b16 %v1136, %v1131
        %v1517 = vpack.c.b16 %v1137, %v1132
        %v1518 = vpack.c.b16 %v1138, %v1133
        %v1519 = vpack.c.b16 %v1139, %v1134
        %v1520 = vpack.c.b16 %v1145, %v1140
        %v1521 = vpack.c.b16 %v1146, %v1141
        %v1522 = vpack.c.b16 %v1147, %v1142
        %v1523 = vpack.c.b16 %v1148, %v1143
        %v1524 = vpack.c.b16 %v1149, %v1144
        %v1525 = vpack.c.b16 %v1155, %v1150
        %v1526 = vpack.c.b16 %v1156, %v1151
        %v1527 = vpack.c.b16 %v1157, %v1152
        %v1528 = vpack.c.b16 %v1158, %v1153
        %v1529 = vpack.c.b16 %v1159, %v1154
        %v1530 = vpack.c.b16 %v1165, %v1160
        %v1531 = vpack.c.b16 %v1166, %v1161
        %v1532 = vpack.c.b16 %v1167, %v1162
        %v1533 = vpack.c.b16 %v1168, %v1163
        %v1534 = vpack.c.b16 %v1169, %v1164
        %v1535 = vpack.c.b16 %v1175, %v1170
        %v1536 = vpack.c.b16 %v1176, %v1171
        %v1537 = vpack.c.b16 %v1177, %v1172
        %v1538 = vpack.c.b16 %v1178, %v1173
        %v1539 = vpack.c.b16 %v1179, %v1174
        %v1540 = vpack.c.b16 %v1185, %v1180
        %v1541 = vpack.c.b16 %v1186, %v1181
        %v1542 = vpack.c.b16 %v1187, %v1182
        %v1543 = vpack.c.b16 %v1188, %v1183
        %v1544 = vpack.c.b16 %v1189, %v1184
        %v1545 = vpack.c.b16 %v1195, %v1190
        %v1546 = vpack.c.b16 %v1196, %v1191
        %v1547 = vpack.c.b16 %v1197, %v1192
        %v1548 = vpack.c.b16 %v1198, %v1193
        %v1549 = vpack.c.b16 %v1199, %v1194
        %v1550 = vpack.c.b16 %v1205, %v1200
        %v1551 = vpack.c.b16 %v1206, %v1201
        %v1552 = vpack.c.b16 %v1207, %v1202
        %v1553 = vpack.c.b16 %v1208, %v1203
        %v1554 = vpack.c.b16 %v1209, %v1204
        %v1555 = vpack.c.b16 %v1215, %v1210
        %v1556 = vpack.c.b16 %v1216, %v1211
        %v1557 = vpack.c.b16 %v1217, %v1212
        %v1558 = vpack.c.b16 %v1218, %v1213
        %v1559 = vpack.c.b16 %v1219, %v1214
        %v1560 = vpack.c.b16 %v1225, %v1220
        %v1561 = vpack.c.b16 %v1226, %v1221
        %v1562 = vpack.c.b16 %v1227, %v1222
        %v1563 = vpack.c.b16 %v1228, %v1223
        %v1564 = vpack.c.b16 %v1229, %v1224
        %v1565 = vpack.c.b16 %v1235, %v1230
        %v1566 = vpack.c.b16 %v1236, %v1231
        %v1567 = vpack.c.b16 %v1237, %v1232
        %v1568 = vpack.c.b16 %v1238, %v1233
        %v1569 = vpack.c.b16 %v1239, %v1234
        %v1570 = vpack.c.b16 %v1245, %v1240
        %v1571 = vpack.c.b16 %v1246, %v1241
        %v1572 = vpack.c.b16 %v1247, %v1242
        %v1573 = vpack.c.b16 %v1248, %v1243
        %v1574 = vpack.c.b16 %v1249, %v1244
        %v1575 = vpack.c.b16 %v1255, %v1250
        %v1576 = vpack.c.b16 %v1256, %v1251
        %v1577 = vpack.c.b16 %v1257, %v1252
        %v1578 = vpack.c.b16 %v1258, %v1253
        %v1579 = vpack.c.b16 %v1259, %v1254
        %v1580 = vpack.c.b16 %v1265, %v1260
        %v1581 = vpack.c.b16 %v1266, %v1261
        %v1582 = vpack.c.b16 %v1267, %v1262
        %v1583 = vpack.c.b16 %v1268, %v1263
        %v1584 = vpack.c.b16 %v1269, %v1264
        %v1585 = vpack.c.b16 %v1275, %v1270
        %v1586 = vpack.c.b16 %v1276, %v1271
        %v1587 = vpack.c.b16 %v1277, %v1272
        %v1588 = vpack.c.b16 %v1278, %v1273
        %v1589 = vpack.c.b16 %v1279, %v1274
        %v1590 = vpack.c.b16 %v1285, %v1280
        %v1591 = vpack.c.b16 %v1286, %v1281
        %v1592 = vpack.c.b16 %v1287, %v1282
        %v1593 = vpack.c.b16 %v1288, %v1283
        %v1594 = vpack.c.b16 %v1289, %v1284
        %v1595 = vpack.c.b16 %v1295, %v1290
        %v1596 = vpack.c.b16 %v1296, %v1291
        %v1597 = vpack.c.b16 %v1297, %v1292
        %v1598 = vpack.c.b16 %v1298, %v1293
        %v1599 = vpack.c.b16 %v1299, %v1294
        %v1600 = vpack.c.b16 %v1305, %v1300
        %v1601 = vpack.c.b16 %v1306, %v1301
        %v1602 = vpack.c.b16 %v1307, %v1302
        %v1603 = vpack.c.b16 %v1308, %v1303
        %v1604 = vpack.c.b16 %v1309, %v1304
        %v1605 = vpack.c.b16 %v1315, %v1310
        %v1606 = vpack.c.b16 %v1316, %v1311
        %v1607 = vpack.c.b16 %v1317, %v1312
        %v1608 = vpack.c.b16 %v1318, %v1313
        %v1609 = vpack.c.b16 %v1319, %v1314
        %v1610 = vpack.c.b16 %v1325, %v1320
        %v1611 = vpack.c.b16 %v1326, %v1321
        %v1612 = vpack.c.b16 %v1327, %v1322
        %v1613 = vpack.c.b16 %v1328, %v1323
        %v1614 = vpack.c.b16 %v1329, %v1324
        %v1615 = vpack.c.b16 %v1335, %v1330
        %v1616 = vpack.c.b16 %v1336, %v1331
        %v1617 = vpack.c.b16 %v1337, %v1332
        %v1618 = vpack.c.b16 %v1338, %v1333
        %v1619 = vpack.c.b16 %v1339, %v1334
        %v1620 = vpack.c.b16 %v1345, %v1340
        %v1621 = vpack.c.b16 %v1346, %v1341
        %v1622 = vpack.c.b16 %v1347, %v1342
        %v1623 = vpack.c.b16 %v1348, %v1343
        %v1624 = vpack.c.b16 %v1349, %v1344
        %v1625 = vpack.c.b16 %v1355, %v1350
        %v1626 = vpack.c.b16 %v1356, %v1351
        %v1627 = vpack.c.b16 %v1357, %v1352
        %v1628 = vpack.c.b16 %v1358, %v1353
        %v1629 = vpack.c.b16 %v1359, %v1354
        %v1630 = vpack.c.b16 %v1365, %v1360
        %v1631 = vpack.c.b16 %v1366, %v1361
        %v1632 = vpack.c.b16 %v1367, %v1362
        %v1633 = vpack.c.b16 %v1368, %v1363
        %v1634 = vpack.c.b16 %v1369, %v1364
        %v1635 = vpack.c.b16 %v1375, %v1370
        %v1636 = vpack.c.b16 %v1376, %v1371
        %v1637 = vpack.c.b16 %v1377, %v1372
        %v1638 = vpack.c.b16 %v1378, %v1373
        %v1639 = vpack.c.b16 %v1379, %v1374
        %v1640 = vpack.c.b16 %v1385, %v1380
        %v1641 = vpack.c.b16 %v1386, %v1381
        %v1642 = vpack.c.b16 %v1387, %v1382
        %v1643 = vpack.c.b16 %v1388, %v1383
        %v1644 = vpack.c.b16 %v1389, %v1384
        %v1645 = vpack.c.b16 %v1395, %v1390
        %v1646 = vpack.c.b16 %v1396, %v1391
        %v1647 = vpack.c.b16 %v1397, %v1392
        %v1648 = vpack.c.b16 %v1398, %v1393
        %v1649 = vpack.c.b16 %v1399, %v1394
        %v1650 = vpack.c.b16 %v1405, %v1400
        %v1651 = vpack.c.b16 %v1406, %v1401
        %v1652 = vpack.c.b16 %v1407, %v1402
        %v1653 = vpack.c.b16 %v1408, %v1403
        %v1654 = vpack.c.b16 %v1409, %v1404
        %v1655 = vpack.c.b16 %v1415, %v1410
        %v1656 = vpack.c.b16 %v1416, %v1411
        %v1657 = vpack.c.b16 %v1417, %v1412
        %v1658 = vpack.c.b16 %v1418, %v1413
        %v1659 = vpack.c.b16 %v1419, %v1414
        %v1660 = vpack.c.b16 %v1425, %v1420
        %v1661 = vpack.c.b16 %v1426, %v1421
        %v1662 = vpack.c.b16 %v1427, %v1422
        %v1663 = vpack.c.b16 %v1428, %v1423
        %v1664 = vpack.c.b16 %v1429, %v1424
        %v1665 = vpack.c.b16 %v1435, %v1430
        %v1666 = vpack.c.b16 %v1436, %v1431
        %v1667 = vpack.c.b16 %v1437, %v1432
        %v1668 = vpack.c.b16 %v1438, %v1433
        %v1669 = vpack.c.b16 %v1439, %v1434
        %v1670 = vpack.c.b16 %v1445, %v1440
        %v1671 = vpack.c.b16 %v1446, %v1441
        %v1672 = vpack.c.b16 %v1447, %v1442
        %v1673 = vpack.c.b16 %v1448, %v1443
        %v1674 = vpack.c.b16 %v1449, %v1444
        %v1675 = vpack.c.b16 %v1455, %v1450
        %v1676 = vpack.c.b16 %v1456, %v1451
        %v1677 = vpack.c.b16 %v1457, %v1452
        %v1678 = vpack.c.b16 %v1458, %v1453
        %v1679 = vpack.c.b16 %v1459, %v1454
        %v1680 = vpack.c.b16 %v1465, %v1460
        %v1681 = vpack.c.b16 %v1466, %v1461
        %v1682 = vpack.c.b16 %v1467, %v1462
        %v1683 = vpack.c.b16 %v1468, %v1463
        %v1684 = vpack.c.b16 %v1469, %v1464
        %v1685 = vpack.c.b16 %v1470, %v1470
        %v1686 = vpack.c.b16 %v1471, %v1471
        %v1687 = vpack.c.b16 %v1472, %v1472
        %v1688 = vpack.c.b16 %v1473, %v1473
        %v1689 = vpack.c.b16 %v1474, %v1474
        %vm1900 = vcmask 293888
        %v1902 = vsel %vm1900, %v789, 0
        %vm1904 = vcmask 1041408
        %v1906 = vsel %vm1904, %v1685, 0
        %v1909 = vsel %vm1904, %v1686, 0
        %v1912 = vsel %vm1904, %v1687, 0
        %v1915 = vsel %vm1904, %v1688, 0
        %v1918 = vsel %vm1904, %v1689, 0
        %1920 = vmatprep.subr.bf16.mxu0 %v1476
        %1921 = vmatpush1.bf16.msra.mxu0 %v1475
        %1922 = vmatprep.subr.bf16.mxu0 %v1481
        %1923 = vmatpush1.bf16.msra.mxu0 %v1480
        %1924 = vmatprep.subr.bf16.mxu0 %v1486
        %1925 = vmatpush1.bf16.msra.mxu0 %v1485
        %1926 = vmatprep.subr.bf16.mxu0 %v1491
        %1927 = vmatpush1.bf16.msra.mxu0 %v1490
        %1928 = vmatprep.subr.bf16.mxu0 %v1496
        %1929 = vmatpush1.bf16.msra.mxu0 %v1495
        %1930 = vmatprep.subr.bf16.mxu0 %v1501
        %1931 = vmatpush1.bf16.msra.mxu0 %v1500
        %1932 = vmatprep.subr.bf16.mxu0 %v1506
        %1933 = vmatpush1.bf16.msra.mxu0 %v1505
        %1934 = vmatprep.subr.bf16.mxu0 %v1511
        %1935 = vmatpush1.bf16.msra.mxu0 %v1510
        %1936 = vmatprep.subr.bf16.mxu0 %v1516
        %1937 = vmatpush1.bf16.msra.mxu0 %v1515
        %1938 = vmatprep.subr.bf16.mxu0 %v1521
        %1939 = vmatpush1.bf16.msra.mxu0 %v1520
        %1940 = vmatprep.subr.bf16.mxu0 %v1526
        %1941 = vmatpush1.bf16.msra.mxu0 %v1525
        %1942 = vmatprep.subr.bf16.mxu0 %v1531
        %1943 = vmatpush1.bf16.msra.mxu0 %v1530
        %1944 = vmatprep.subr.bf16.mxu0 %v1536
        %1945 = vmatpush1.bf16.msra.mxu0 %v1535
        %1946 = vmatprep.subr.bf16.mxu0 %v1541
        %1947 = vmatpush1.bf16.msra.mxu0 %v1540
        %1948 = vmatprep.subr.bf16.mxu0 %v1546
        %1949 = vmatpush1.bf16.msra.mxu0 %v1545
        %1950 = vmatprep.subr.bf16.mxu0 %v1551
        %1951 = vmatpush1.bf16.msra.mxu0 %v1550
        %1952 = vmatprep.mubr.bf16.mxu0 %v785
        %1953 = vmatmul.mubr.bf16.gmra.mrb[0].mxu0 %v784
        %v1954 = vpop.f32.mrb[0].mxu0
        %v1955 = vadd.f32 %v744, %v1954
        %v1956 = vpop.f32.mrb[0].mxu0
        %v1957 = vadd.f32 %v748, %v1956
        %v1958 = vpop.f32.mrb[0].mxu0
        %v1959 = vadd.f32 %v744, %v1958
        %v1960 = vpop.f32.mrb[0].mxu0
        %v1961 = vadd.f32 %v748, %v1960
        %1962 = vdwg.mxu0
        %1963 = vmatprep.subr.bf16.mxu0 %v1556
        %1964 = vmatpush1.bf16.msra.mxu0 %v1555
        %1965 = vmatprep.subr.bf16.mxu0 %v1561
        %1966 = vmatpush1.bf16.msra.mxu0 %v1560
        %1967 = vmatprep.subr.bf16.mxu0 %v1566
        %1968 = vmatpush1.bf16.msra.mxu0 %v1565
        %1969 = vmatprep.subr.bf16.mxu0 %v1571
        %1970 = vmatpush1.bf16.msra.mxu0 %v1570
        %1971 = vmatprep.subr.bf16.mxu0 %v1576
        %1972 = vmatpush1.bf16.msra.mxu0 %v1575
        %1973 = vmatprep.subr.bf16.mxu0 %v1581
        %1974 = vmatpush1.bf16.msra.mxu0 %v1580
        %1975 = vmatprep.subr.bf16.mxu0 %v1586
        %1976 = vmatpush1.bf16.msra.mxu0 %v1585
        %1977 = vmatprep.subr.bf16.mxu0 %v1591
        %1978 = vmatpush1.bf16.msra.mxu0 %v1590
        %1979 = vmatprep.subr.bf16.mxu0 %v1596
        %1980 = vmatpush1.bf16.msra.mxu0 %v1595
        %1981 = vmatprep.subr.bf16.mxu0 %v1601
        %1982 = vmatpush1.bf16.msra.mxu0 %v1600
        %1983 = vmatprep.subr.bf16.mxu0 %v1606
        %1984 = vmatpush1.bf16.msra.mxu0 %v1605
        %1985 = vmatprep.subr.bf16.mxu0 %v1611
        %1986 = vmatpush1.bf16.msra.mxu0 %v1610
        %1987 = vmatprep.subr.bf16.mxu0 %v1616
        %1988 = vmatpush1.bf16.msra.mxu0 %v1615
        %1989 = vmatprep.subr.bf16.mxu0 %v1621
        %1990 = vmatpush1.bf16.msra.mxu0 %v1620
        %1991 = vmatprep.subr.bf16.mxu0 %v1626
        %1992 = vmatpush1.bf16.msra.mxu0 %v1625
        %1993 = vmatprep.subr.bf16.mxu0 %v1631
        %1994 = vmatpush1.bf16.msra.mxu0 %v1630
        %1995 = vmatprep.mubr.bf16.mxu0 %v787
        %1996 = vmatmul.mubr.bf16.gmra.mrb[0].mxu0 %v786
        %v1997 = vpop.f32.mrb[0].mxu0
        %v1998 = vadd.f32 %v1955, %v1997
        %v1999 = vpop.f32.mrb[0].mxu0
        %v2000 = vadd.f32 %v1957, %v1999
        %v2001 = vpop.f32.mrb[0].mxu0
        %v2002 = vadd.f32 %v1959, %v2001
        %v2003 = vpop.f32.mrb[0].mxu0
        %v2004 = vadd.f32 %v1961, %v2003
        %2005 = vdwg.mxu0
        %2006 = vmatprep.subr.bf16.mxu0 %v1636
        %2007 = vmatpush1.bf16.msra.mxu0 %v1635
        %2008 = vmatprep.subr.bf16.mxu0 %v1641
        %2009 = vmatpush1.bf16.msra.mxu0 %v1640
        %2010 = vmatprep.subr.bf16.mxu0 %v1646
        %2011 = vmatpush1.bf16.msra.mxu0 %v1645
        %2012 = vmatprep.subr.bf16.mxu0 %v1651
        %2013 = vmatpush1.bf16.msra.mxu0 %v1650
        %2014 = vmatprep.subr.bf16.mxu0 %v1656
        %2015 = vmatpush1.bf16.msra.mxu0 %v1655
        %2016 = vmatprep.subr.bf16.mxu0 %v1661
        %2017 = vmatpush1.bf16.msra.mxu0 %v1660
        %2018 = vmatprep.subr.bf16.mxu0 %v1666
        %2019 = vmatpush1.bf16.msra.mxu0 %v1665
        %2020 = vmatprep.subr.bf16.mxu0 %v1671
        %2021 = vmatpush1.bf16.msra.mxu0 %v1670
        %2022 = vmatprep.subr.bf16.mxu0 %v1676
        %2023 = vmatpush1.bf16.msra.mxu0 %v1675
        %2024 = vmatprep.subr.bf16.mxu0 %v1681
        %2025 = vmatpush1.bf16.msra.mxu0 %v1680
        %2026 = vmatprep.subr.bf16.mxu0 %v1909
        %2027 = vmatpush1.bf16.msra.mxu0 %v1906
        %2028 = vmatprep.subr.bf16.mxu0 0
        %2029 = vmatpush1.bf16.msra.mxu0 0
        %2030 = vmatprep.subr.bf16.mxu0 0
        %2031 = vmatpush1.bf16.msra.mxu0 0
        %2032 = vmatprep.subr.bf16.mxu0 0
        %2033 = vmatpush1.bf16.msra.mxu0 0
        %2034 = vmatprep.subr.bf16.mxu0 0
        %2035 = vmatpush1.bf16.msra.mxu0 0
        %2036 = vmatprep.subr.bf16.mxu0 0
        %2037 = vmatpush1.bf16.msra.mxu0 0
        %2038 = vmatprep.mubr.bf16.mxu0 %v1902
        %2039 = vmatmul.mubr.bf16.gmra.mrb[0].mxu0 %v788
        %v2040 = vpop.f32.mrb[0].mxu0
        %v2041 = vadd.f32 %v1998, %v2040
        %v2042 = vpop.f32.mrb[0].mxu0
        %v2043 = vadd.f32 %v2000, %v2042
        %v2044 = vpop.f32.mrb[0].mxu0
        %v2045 = vadd.f32 %v2002, %v2044
        %v2046 = vpop.f32.mrb[0].mxu0
        %v2047 = vadd.f32 %v2004, %v2046
        %2048 = vdwg.mxu0
        %2049 = vmatprep.subr.bf16.mxu0 %v1478
        %2050 = vmatpush1.bf16.msra.mxu0 %v1477
        %2051 = vmatprep.subr.bf16.mxu0 %v1483
        %2052 = vmatpush1.bf16.msra.mxu0 %v1482
        %2053 = vmatprep.subr.bf16.mxu0 %v1488
        %2054 = vmatpush1.bf16.msra.mxu0 %v1487
        %2055 = vmatprep.subr.bf16.mxu0 %v1493
        %2056 = vmatpush1.bf16.msra.mxu0 %v1492
        %2057 = vmatprep.subr.bf16.mxu0 %v1498
        %2058 = vmatpush1.bf16.msra.mxu0 %v1497
        %2059 = vmatprep.subr.bf16.mxu0 %v1503
        %2060 = vmatpush1.bf16.msra.mxu0 %v1502
        %2061 = vmatprep.subr.bf16.mxu0 %v1508
        %2062 = vmatpush1.bf16.msra.mxu0 %v1507
        %2063 = vmatprep.subr.bf16.mxu0 %v1513
        %2064 = vmatpush1.bf16.msra.mxu0 %v1512
        %2065 = vmatprep.subr.bf16.mxu0 %v1518
        %2066 = vmatpush1.bf16.msra.mxu0 %v1517
        %2067 = vmatprep.subr.bf16.mxu0 %v1523
        %2068 = vmatpush1.bf16.msra.mxu0 %v1522
        %2069 = vmatprep.subr.bf16.mxu0 %v1528
        %2070 = vmatpush1.bf16.msra.mxu0 %v1527
        %2071 = vmatprep.subr.bf16.mxu0 %v1533
        %2072 = vmatpush1.bf16.msra.mxu0 %v1532
        %2073 = vmatprep.subr.bf16.mxu0 %v1538
        %2074 = vmatpush1.bf16.msra.mxu0 %v1537
        %2075 = vmatprep.subr.bf16.mxu0 %v1543
        %2076 = vmatpush1.bf16.msra.mxu0 %v1542
        %2077 = vmatprep.subr.bf16.mxu0 %v1548
        %2078 = vmatpush1.bf16.msra.mxu0 %v1547
        %2079 = vmatprep.subr.bf16.mxu0 %v1553
        %2080 = vmatpush1.bf16.msra.mxu0 %v1552
        %2081 = vmatprep.mubr.bf16.mxu0 %v785
        %2082 = vmatmul.mubr.bf16.gmra.mrb[0].mxu0 %v784
        %v2083 = vpop.f32.mrb[0].mxu0
        %v2084 = vadd.f32 %v752, %v2083
        %v2085 = vpop.f32.mrb[0].mxu0
        %v2086 = vadd.f32 %v756, %v2085
        %v2087 = vpop.f32.mrb[0].mxu0
        %v2088 = vadd.f32 %v752, %v2087
        %v2089 = vpop.f32.mrb[0].mxu0
        %v2090 = vadd.f32 %v756, %v2089
        %2091 = vdwg.mxu0
        %2092 = vmatprep.subr.bf16.mxu0 %v1558
        %2093 = vmatpush1.bf16.msra.mxu0 %v1557
        %2094 = vmatprep.subr.bf16.mxu0 %v1563
        %2095 = vmatpush1.bf16.msra.mxu0 %v1562
        %2096 = vmatprep.subr.bf16.mxu0 %v1568
        %2097 = vmatpush1.bf16.msra.mxu0 %v1567
        %2098 = vmatprep.subr.bf16.mxu0 %v1573
        %2099 = vmatpush1.bf16.msra.mxu0 %v1572
        %2100 = vmatprep.subr.bf16.mxu0 %v1578
        %2101 = vmatpush1.bf16.msra.mxu0 %v1577
        %2102 = vmatprep.subr.bf16.mxu0 %v1583
        %2103 = vmatpush1.bf16.msra.mxu0 %v1582
        %2104 = vmatprep.subr.bf16.mxu0 %v1588
        %2105 = vmatpush1.bf16.msra.mxu0 %v1587
        %2106 = vmatprep.subr.bf16.mxu0 %v1593
        %2107 = vmatpush1.bf16.msra.mxu0 %v1592
        %2108 = vmatprep.subr.bf16.mxu0 %v1598
        %2109 = vmatpush1.bf16.msra.mxu0 %v1597
        %2110 = vmatprep.subr.bf16.mxu0 %v1603
        %2111 = vmatpush1.bf16.msra.mxu0 %v1602
        %2112 = vmatprep.subr.bf16.mxu0 %v1608
        %2113 = vmatpush1.bf16.msra.mxu0 %v1607
        %2114 = vmatprep.subr.bf16.mxu0 %v1613
        %2115 = vmatpush1.bf16.msra.mxu0 %v1612
        %2116 = vmatprep.subr.bf16.mxu0 %v1618
        %2117 = vmatpush1.bf16.msra.mxu0 %v1617
        %2118 = vmatprep.subr.bf16.mxu0 %v1623
        %2119 = vmatpush1.bf16.msra.mxu0 %v1622
        %2120 = vmatprep.subr.bf16.mxu0 %v1628
        %2121 = vmatpush1.bf16.msra.mxu0 %v1627
        %2122 = vmatprep.subr.bf16.mxu0 %v1633
        %2123 = vmatpush1.bf16.msra.mxu0 %v1632
        %2124 = vmatprep.mubr.bf16.mxu0 %v787
        %2125 = vmatmul.mubr.bf16.gmra.mrb[0].mxu0 %v786
        %v2126 = vpop.f32.mrb[0].mxu0
        %v2127 = vadd.f32 %v2084, %v2126
        %v2128 = vpop.f32.mrb[0].mxu0
        %v2129 = vadd.f32 %v2086, %v2128
        %v2130 = vpop.f32.mrb[0].mxu0
        %v2131 = vadd.f32 %v2088, %v2130
        %v2132 = vpop.f32.mrb[0].mxu0
        %v2133 = vadd.f32 %v2090, %v2132
        %2134 = vdwg.mxu0
        %2135 = vmatprep.subr.bf16.mxu0 %v1638
        %2136 = vmatpush1.bf16.msra.mxu0 %v1637
        %2137 = vmatprep.subr.bf16.mxu0 %v1643
        %2138 = vmatpush1.bf16.msra.mxu0 %v1642
        %2139 = vmatprep.subr.bf16.mxu0 %v1648
        %2140 = vmatpush1.bf16.msra.mxu0 %v1647
        %2141 = vmatprep.subr.bf16.mxu0 %v1653
        %2142 = vmatpush1.bf16.msra.mxu0 %v1652
        %2143 = vmatprep.subr.bf16.mxu0 %v1658
        %2144 = vmatpush1.bf16.msra.mxu0 %v1657
        %2145 = vmatprep.subr.bf16.mxu0 %v1663
        %2146 = vmatpush1.bf16.msra.mxu0 %v1662
        %2147 = vmatprep.subr.bf16.mxu0 %v1668
        %2148 = vmatpush1.bf16.msra.mxu0 %v1667
        %2149 = vmatprep.subr.bf16.mxu0 %v1673
        %2150 = vmatpush1.bf16.msra.mxu0 %v1672
        %2151 = vmatprep.subr.bf16.mxu0 %v1678
        %2152 = vmatpush1.bf16.msra.mxu0 %v1677
        %2153 = vmatprep.subr.bf16.mxu0 %v1683
        %2154 = vmatpush1.bf16.msra.mxu0 %v1682
        %2155 = vmatprep.subr.bf16.mxu0 %v1915
        %2156 = vmatpush1.bf16.msra.mxu0 %v1912
        %2157 = vmatprep.subr.bf16.mxu0 0
        %2158 = vmatpush1.bf16.msra.mxu0 0
        %2159 = vmatprep.subr.bf16.mxu0 0
        %2160 = vmatpush1.bf16.msra.mxu0 0
        %2161 = vmatprep.subr.bf16.mxu0 0
        %2162 = vmatpush1.bf16.msra.mxu0 0
        %2163 = vmatprep.subr.bf16.mxu0 0
        %2164 = vmatpush1.bf16.msra.mxu0 0
        %2165 = vmatprep.subr.bf16.mxu0 0
        %2166 = vmatpush1.bf16.msra.mxu0 0
        %2167 = vmatprep.mubr.bf16.mxu0 %v1902
        %2168 = vmatmul.mubr.bf16.gmra.mrb[0].mxu0 %v788
        %v2169 = vpop.f32.mrb[0].mxu0
        %v2170 = vadd.f32 %v2127, %v2169
        %v2171 = vpop.f32.mrb[0].mxu0
        %v2172 = vadd.f32 %v2129, %v2171
        %v2173 = vpop.f32.mrb[0].mxu0
        %v2174 = vadd.f32 %v2131, %v2173
        %v2175 = vpop.f32.mrb[0].mxu0
        %v2176 = vadd.f32 %v2133, %v2175
        %2177 = vdwg.mxu0
        %2178 = vmatprep.subr.bf16.mxu0 0
        %2179 = vmatpush1.bf16.msra.mxu0 %v1479
        %2180 = vmatprep.subr.bf16.mxu0 0
        %2181 = vmatpush1.bf16.msra.mxu0 %v1484
        %2182 = vmatprep.subr.bf16.mxu0 0
        %2183 = vmatpush1.bf16.msra.mxu0 %v1489
        %2184 = vmatprep.subr.bf16.mxu0 0
        %2185 = vmatpush1.bf16.msra.mxu0 %v1494
        %2186 = vmatprep.subr.bf16.mxu0 0
        %2187 = vmatpush1.bf16.msra.mxu0 %v1499
        %2188 = vmatprep.subr.bf16.mxu0 0
        %2189 = vmatpush1.bf16.msra.mxu0 %v1504
        %2190 = vmatprep.subr.bf16.mxu0 0
        %2191 = vmatpush1.bf16.msra.mxu0 %v1509
        %2192 = vmatprep.subr.bf16.mxu0 0
        %2193 = vmatpush1.bf16.msra.mxu0 %v1514
        %2194 = vmatprep.subr.bf16.mxu0 0
        %2195 = vmatpush1.bf16.msra.mxu0 %v1519
        %2196 = vmatprep.subr.bf16.mxu0 0
        %2197 = vmatpush1.bf16.msra.mxu0 %v1524
        %2198 = vmatprep.subr.bf16.mxu0 0
        %2199 = vmatpush1.bf16.msra.mxu0 %v1529
        %2200 = vmatprep.subr.bf16.mxu0 0
        %2201 = vmatpush1.bf16.msra.mxu0 %v1534
        %2202 = vmatprep.subr.bf16.mxu0 0
        %2203 = vmatpush1.bf16.msra.mxu0 %v1539
        %2204 = vmatprep.subr.bf16.mxu0 0
        %2205 = vmatpush1.bf16.msra.mxu0 %v1544
        %2206 = vmatprep.subr.bf16.mxu0 0
        %2207 = vmatpush1.bf16.msra.mxu0 %v1549
        %2208 = vmatprep.subr.bf16.mxu0 0
        %2209 = vmatpush1.bf16.msra.mxu0 %v1554
        %2210 = vmatprep.mubr.bf16.mxu0 %v785
        %2211 = vmatmul.mubr.bf16.gmra.mrb[0].mxu0 %v784
        %v2212 = vpop.f32.mrb[0].mxu0
        %v2213 = vadd.f32 %v760, %v2212
        %v2214 = vpop.f32.mrb[0].mxu0
        %v2215 = vpop.f32.mrb[0].mxu0
        %v2216 = vadd.f32 %v760, %v2215
        %v2217 = vpop.f32.mrb[0].mxu0
        %2218 = vdwg.mxu0
        %2219 = vmatprep.subr.bf16.mxu0 0
        %2220 = vmatpush1.bf16.msra.mxu0 %v1559
        %2221 = vmatprep.subr.bf16.mxu0 0
        %2222 = vmatpush1.bf16.msra.mxu0 %v1564
        %2223 = vmatprep.subr.bf16.mxu0 0
        %2224 = vmatpush1.bf16.msra.mxu0 %v1569
        %2225 = vmatprep.subr.bf16.mxu0 0
        %2226 = vmatpush1.bf16.msra.mxu0 %v1574
        %2227 = vmatprep.subr.bf16.mxu0 0
        %2228 = vmatpush1.bf16.msra.mxu0 %v1579
        %2229 = vmatprep.subr.bf16.mxu0 0
        %2230 = vmatpush1.bf16.msra.mxu0 %v1584
        %2231 = vmatprep.subr.bf16.mxu0 0
        %2232 = vmatpush1.bf16.msra.mxu0 %v1589
        %2233 = vmatprep.subr.bf16.mxu0 0
        %2234 = vmatpush1.bf16.msra.mxu0 %v1594
        %2235 = vmatprep.subr.bf16.mxu0 0
        %2236 = vmatpush1.bf16.msra.mxu0 %v1599
        %2237 = vmatprep.subr.bf16.mxu0 0
        %2238 = vmatpush1.bf16.msra.mxu0 %v1604
        %2239 = vmatprep.subr.bf16.mxu0 0
        %2240 = vmatpush1.bf16.msra.mxu0 %v1609
        %2241 = vmatprep.subr.bf16.mxu0 0
        %2242 = vmatpush1.bf16.msra.mxu0 %v1614
        %2243 = vmatprep.subr.bf16.mxu0 0
        %2244 = vmatpush1.bf16.msra.mxu0 %v1619
        %2245 = vmatprep.subr.bf16.mxu0 0
        %2246 = vmatpush1.bf16.msra.mxu0 %v1624
        %2247 = vmatprep.subr.bf16.mxu0 0
        %2248 = vmatpush1.bf16.msra.mxu0 %v1629
        %2249 = vmatprep.subr.bf16.mxu0 0
        %2250 = vmatpush1.bf16.msra.mxu0 %v1634
        %2251 = vmatprep.mubr.bf16.mxu0 %v787
        %2252 = vmatmul.mubr.bf16.gmra.mrb[0].mxu0 %v786
        %v2253 = vpop.f32.mrb[0].mxu0
        %v2254 = vadd.f32 %v2213, %v2253
        %v2255 = vpop.f32.mrb[0].mxu0
        %v2256 = vpop.f32.mrb[0].mxu0
        %v2257 = vadd.f32 %v2216, %v2256
        %v2258 = vpop.f32.mrb[0].mxu0
        %2259 = vdwg.mxu0
        %2260 = vmatprep.subr.bf16.mxu0 0
        %2261 = vmatpush1.bf16.msra.mxu0 %v1639
        %2262 = vmatprep.subr.bf16.mxu0 0
        %2263 = vmatpush1.bf16.msra.mxu0 %v1644
        %2264 = vmatprep.subr.bf16.mxu0 0
        %2265 = vmatpush1.bf16.msra.mxu0 %v1649
        %2266 = vmatprep.subr.bf16.mxu0 0
        %2267 = vmatpush1.bf16.msra.mxu0 %v1654
        %2268 = vmatprep.subr.bf16.mxu0 0
        %2269 = vmatpush1.bf16.msra.mxu0 %v1659
        %2270 = vmatprep.subr.bf16.mxu0 0
        %2271 = vmatpush1.bf16.msra.mxu0 %v1664
        %2272 = vmatprep.subr.bf16.mxu0 0
        %2273 = vmatpush1.bf16.msra.mxu0 %v1669
        %2274 = vmatprep.subr.bf16.mxu0 0
        %2275 = vmatpush1.bf16.msra.mxu0 %v1674
        %2276 = vmatprep.subr.bf16.mxu0 0
        %2277 = vmatpush1.bf16.msra.mxu0 %v1679
        %2278 = vmatprep.subr.bf16.mxu0 0
        %2279 = vmatpush1.bf16.msra.mxu0 %v1684
        %2280 = vmatprep.subr.bf16.mxu0 0
        %2281 = vmatpush1.bf16.msra.mxu0 %v1918
        %2282 = vmatprep.subr.bf16.mxu0 0
        %2283 = vmatpush1.bf16.msra.mxu0 0
        %2284 = vmatprep.subr.bf16.mxu0 0
        %2285 = vmatpush1.bf16.msra.mxu0 0
        %2286 = vmatprep.subr.bf16.mxu0 0
        %2287 = vmatpush1.bf16.msra.mxu0 0
        %2288 = vmatprep.subr.bf16.mxu0 0
        %2289 = vmatpush1.bf16.msra.mxu0 0
        %2290 = vmatprep.subr.bf16.mxu0 0
        %2291 = vmatpush1.bf16.msra.mxu0 0
        %2292 = vmatprep.mubr.bf16.mxu0 %v1902
        %2293 = vmatmul.mubr.bf16.gmra.mrb[0].mxu0 %v788
        %v2294 = vpop.f32.mrb[0].mxu0
        %v2295 = vadd.f32 %v2254, %v2294
        %v2296 = vpop.f32.mrb[0].mxu0
        %v2297 = vpop.f32.mrb[0].mxu0
        %v2298 = vadd.f32 %v2257, %v2297
        %v2299 = vpop.f32.mrb[0].mxu0
        %2300 = vdwg.mxu0
        %vm2301 = vcmp.ge.f32.partialorder %v2041, 0.0
        %vm2302 = vcmp.ge.f32.partialorder %v2043, 0.0
        %vm2303 = vcmp.ge.f32.partialorder %v2170, 0.0
        %vm2304 = vcmp.ge.f32.partialorder %v2172, 0.0
        %vm2305 = vcmp.ge.f32.partialorder %v2295, 0.0
        %vm2306 = vcmp.ge.f32.partialorder %v2045, 0.0
        %vm2307 = vcmp.ge.f32.partialorder %v2047, 0.0
        %vm2308 = vcmp.ge.f32.partialorder %v2174, 0.0
        %vm2309 = vcmp.ge.f32.partialorder %v2176, 0.0
        %vm2310 = vcmp.ge.f32.partialorder %v2298, 0.0
        %v2311 = vmul.f32 %v2041, 0.01
        %v2312 = vmul.f32 %v2043, 0.01
        %v2313 = vmul.f32 %v2170, 0.01
        %v2314 = vmul.f32 %v2172, 0.01
        %v2315 = vmul.f32 %v2295, 0.01
        %v2316 = vmul.f32 %v2045, 0.01
        %v2317 = vmul.f32 %v2047, 0.01
        %v2318 = vmul.f32 %v2174, 0.01
        %v2319 = vmul.f32 %v2176, 0.01
        %v2320 = vmul.f32 %v2298, 0.01
        %v2321 = vsel %vm2301, %v2041, %v2311
        %v2322 = vsel %vm2302, %v2043, %v2312
        %v2323 = vsel %vm2303, %v2170, %v2313
        %v2324 = vsel %vm2304, %v2172, %v2314
        %v2325 = vsel %vm2305, %v2295, %v2315
        %v2326 = vsel %vm2306, %v2045, %v2316
        %v2327 = vsel %vm2307, %v2047, %v2317
        %v2328 = vsel %vm2308, %v2174, %v2318
        %v2329 = vsel %vm2309, %v2176, %v2319
        %v2330 = vsel %vm2310, %v2298, %v2320
        %v2331 = vpack.c.bf16 %v2326, %v2321
        %v2332 = vpack.c.bf16 %v2327, %v2322
        %v2333 = vpack.c.bf16 %v2328, %v2323
        %v2334 = vpack.c.bf16 %v2329, %v2324
        %v2335 = vpack.c.bf16 %v2330, %v2325
        %v2336 = vld [vmem:[#allocation7] sm:$0xff]
        %v2337 = vld [vmem:[#allocation7 + $0x8] sm:$0xf]
        %v2338 = vld [vmem:[#allocation7 + $0xc] sm:$0xff]
        %v2339 = vld [vmem:[#allocation7 + $0x14] sm:$0xf]
        %v2340 = vld [vmem:[#allocation7 + $0x18] sm:$0xff]
        %v2341 = vld [vmem:[#allocation7 + $0x20] sm:$0xf]
        %v2342 = vld [vmem:[#allocation7 + $0x24] sm:$0xff]
        %v2343 = vld [vmem:[#allocation7 + $0x2c] sm:$0xf]
        %v2344 = vld [vmem:[#allocation7 + $0x30] sm:$0xff]
        %v2345 = vld [vmem:[#allocation7 + $0x38] sm:$0xf]
        %v2346 = vld [vmem:[#allocation7 + $0x3c] sm:$0xff]
        %v2347 = vld [vmem:[#allocation7 + $0x44] sm:$0xf]
        %v2348 = vld [vmem:[#allocation7 + $0x48] sm:$0xff]
        %v2349 = vld [vmem:[#allocation7 + $0x50] sm:$0xf]
        %v2350 = vld [vmem:[#allocation7 + $0x54] sm:$0xff]
        %v2351 = vld [vmem:[#allocation7 + $0x5c] sm:$0xf]
        %v2352 = vld [vmem:[#allocation7 + $0x60] sm:$0xff]
        %v2353 = vld [vmem:[#allocation7 + $0x68] sm:$0xf]
        %v2354 = vld [vmem:[#allocation7 + $0x6c] sm:$0xff]
        %v2355 = vld [vmem:[#allocation7 + $0x74] sm:$0xf]
        %v2356 = vld [vmem:[#allocation7 + $0x78] sm:$0xff]
        %v2357 = vld [vmem:[#allocation7 + $0x80] sm:$0xf]
        %v2358 = vld [vmem:[#allocation7 + $0x84] sm:$0xff]
        %v2359 = vld [vmem:[#allocation7 + $0x8c] sm:$0xf]
        %v2360 = vld [vmem:[#allocation7 + $0x90] sm:$0xff]
        %v2361 = vld [vmem:[#allocation7 + $0x98] sm:$0xf]
        %v2362 = vld [vmem:[#allocation7 + $0x9c] sm:$0xff]
        %v2363 = vld [vmem:[#allocation7 + $0xa4] sm:$0xf]
        %v2364 = vld [vmem:[#allocation7 + $0xa8] sm:$0xff]
        %v2365 = vld [vmem:[#allocation7 + $0xb0] sm:$0xf]
        %v2366 = vld [vmem:[#allocation7 + $0xb4] sm:$0xff]
        %v2367 = vld [vmem:[#allocation7 + $0xbc] sm:$0xf]
        %v2368 = vld [vmem:[#allocation7 + $0xc0] sm:$0xff]
        %v2369 = vld [vmem:[#allocation7 + $0xc8] sm:$0xf]
        %v2370 = vld [vmem:[#allocation7 + $0xcc] sm:$0xff]
        %v2371 = vld [vmem:[#allocation7 + $0xd4] sm:$0xf]
        %v2372 = vld [vmem:[#allocation7 + $0xd8] sm:$0xff]
        %v2373 = vld [vmem:[#allocation7 + $0xe0] sm:$0xf]
        %v2374 = vld [vmem:[#allocation7 + $0xe4] sm:$0xff]
        %v2375 = vld [vmem:[#allocation7 + $0xec] sm:$0xf]
        %v2376 = vld [vmem:[#allocation7 + $0xf0] sm:$0xff]
        %v2377 = vld [vmem:[#allocation7 + $0xf8] sm:$0xf]
        %v2378 = vld [vmem:[#allocation7 + $0xfc] sm:$0xff]
        %v2379 = vld [vmem:[#allocation7 + $0x104] sm:$0xf]
        %v2380 = vld [vmem:[#allocation7 + $0x108] sm:$0xff]
        %v2381 = vld [vmem:[#allocation7 + $0x110] sm:$0xf]
        %v2382 = vld [vmem:[#allocation7 + $0x114] sm:$0xff]
        %v2383 = vld [vmem:[#allocation7 + $0x11c] sm:$0xf]
        %v2384 = vld [vmem:[#allocation7 + $0x120] sm:$0xff]
        %v2385 = vld [vmem:[#allocation7 + $0x128] sm:$0xf]
        %v2386 = vld [vmem:[#allocation7 + $0x12c] sm:$0xff]
        %v2387 = vld [vmem:[#allocation7 + $0x134] sm:$0xf]
        %v2388 = vld [vmem:[#allocation7 + $0x138] sm:$0xff]
        %v2389 = vld [vmem:[#allocation7 + $0x140] sm:$0xf]
        %v2390 = vld [vmem:[#allocation7 + $0x144] sm:$0xff]
        %v2391 = vld [vmem:[#allocation7 + $0x14c] sm:$0xf]
        %v2392 = vld [vmem:[#allocation7 + $0x150] sm:$0xff]
        %v2393 = vld [vmem:[#allocation7 + $0x158] sm:$0xf]
        %v2394 = vld [vmem:[#allocation7 + $0x15c] sm:$0xff]
        %v2395 = vld [vmem:[#allocation7 + $0x164] sm:$0xf]
        %v2396 = vld [vmem:[#allocation7 + $0x168] sm:$0xff]
        %v2397 = vld [vmem:[#allocation7 + $0x170] sm:$0xf]
        %v2398 = vld [vmem:[#allocation7 + $0x174] sm:$0xff]
        %v2399 = vld [vmem:[#allocation7 + $0x17c] sm:$0xf]
        %v2400 = vld [vmem:[#allocation7 + $0x180] sm:$0xff]
        %v2401 = vld [vmem:[#allocation7 + $0x188] sm:$0xf]
        %v2402 = vld [vmem:[#allocation7 + $0x18c] sm:$0xff]
        %v2403 = vld [vmem:[#allocation7 + $0x194] sm:$0xf]
        %v2404 = vld [vmem:[#allocation7 + $0x198] sm:$0xff]
        %v2405 = vld [vmem:[#allocation7 + $0x1a0] sm:$0xf]
        %v2406 = vld [vmem:[#allocation7 + $0x1a4] sm:$0xff]
        %v2407 = vld [vmem:[#allocation7 + $0x1ac] sm:$0xf]
        %v2408 = vld [vmem:[#allocation7 + $0x1b0] sm:$0xff]
        %v2409 = vld [vmem:[#allocation7 + $0x1b8] sm:$0xf]
        %v2410 = vld [vmem:[#allocation7 + $0x1bc] sm:$0xff]
        %v2411 = vld [vmem:[#allocation7 + $0x1c4] sm:$0xf]
        %v2412 = vld [vmem:[#allocation7 + $0x1c8] sm:$0xff]
        %v2413 = vld [vmem:[#allocation7 + $0x1d0] sm:$0xf]
        %v2414 = vld [vmem:[#allocation7 + $0x1d4] sm:$0xff]
        %v2415 = vld [vmem:[#allocation7 + $0x1dc] sm:$0xf]
        %v2416 = vld [vmem:[#allocation7 + $0x1e0] sm:$0xff]
        %v2417 = vld [vmem:[#allocation7 + $0x1e8] sm:$0xf]
        %v2418 = vld [vmem:[#allocation7 + $0x1ec] sm:$0xff]
        %v2419 = vld [vmem:[#allocation7 + $0x1f4] sm:$0xf]
        %v2420 = vld [vmem:[#allocation7 + $0x1f8] sm:$0xff]
        %v2421 = vld [vmem:[#allocation7 + $0x200] sm:$0xf]
        %v2422 = vld [vmem:[#allocation7 + $0x204] sm:$0xff]
        %v2423 = vld [vmem:[#allocation7 + $0x20c] sm:$0xf]
        %v2424 = vld [vmem:[#allocation7 + $0x210] sm:$0xff]
        %v2425 = vld [vmem:[#allocation7 + $0x218] sm:$0xf]
        %v2426 = vld [vmem:[#allocation7 + $0x21c] sm:$0xff]
        %v2427 = vld [vmem:[#allocation7 + $0x224] sm:$0xf]
        %v2428 = vld [vmem:[#allocation7 + $0x228] sm:$0xff]
        %v2429 = vld [vmem:[#allocation7 + $0x230] sm:$0xf]
        %v2430 = vld [vmem:[#allocation7 + $0x234] sm:$0xff]
        %v2431 = vld [vmem:[#allocation7 + $0x23c] sm:$0xf]
        %v2432 = vld [vmem:[#allocation7 + $0x240] sm:$0xff]
        %v2433 = vld [vmem:[#allocation7 + $0x248] sm:$0xf]
        %v2434 = vld [vmem:[#allocation7 + $0x24c] sm:$0xff]
        %v2435 = vld [vmem:[#allocation7 + $0x254] sm:$0xf]
        %v2436 = vld [vmem:[#allocation7 + $0x258] sm:$0xff]
        %v2437 = vld [vmem:[#allocation7 + $0x260] sm:$0xf]
        %v2438 = vld [vmem:[#allocation7 + $0x264] sm:$0xff]
        %v2439 = vld [vmem:[#allocation7 + $0x26c] sm:$0xf]
        %v2440 = vld [vmem:[#allocation7 + $0x270] sm:$0xff]
        %v2441 = vld [vmem:[#allocation7 + $0x278] sm:$0xf]
        %v2442 = vld [vmem:[#allocation7 + $0x27c] sm:$0xff]
        %v2443 = vld [vmem:[#allocation7 + $0x284] sm:$0xf]
        %v2444 = vld [vmem:[#allocation7 + $0x288] sm:$0xff]
        %v2445 = vld [vmem:[#allocation7 + $0x290] sm:$0xf]
        %v2446 = vld [vmem:[#allocation7 + $0x294] sm:$0xff]
        %v2447 = vld [vmem:[#allocation7 + $0x29c] sm:$0xf]
        %v2448 = vld [vmem:[#allocation7 + $0x2a0] sm:$0xff]
        %v2449 = vld [vmem:[#allocation7 + $0x2a8] sm:$0xf]
        %v2450 = vld [vmem:[#allocation7 + $0x2ac] sm:$0xff]
        %v2451 = vld [vmem:[#allocation7 + $0x2b4] sm:$0xf]
        %v2452 = vld [vmem:[#allocation7 + $0x2b8] sm:$0xff]
        %v2453 = vld [vmem:[#allocation7 + $0x2c0] sm:$0xf]
        %v2454 = vld [vmem:[#allocation7 + $0x2c4] sm:$0xff]
        %v2455 = vld [vmem:[#allocation7 + $0x2cc] sm:$0xf]
        %v2456 = vld [vmem:[#allocation7 + $0x2d0] sm:$0xff]
        %v2457 = vld [vmem:[#allocation7 + $0x2d8] sm:$0xf]
        %v2458 = vld [vmem:[#allocation7 + $0x2dc] sm:$0xff]
        %v2459 = vld [vmem:[#allocation7 + $0x2e4] sm:$0xf]
        %v2460 = vld [vmem:[#allocation7 + $0x2e8] sm:$0xff]
        %v2461 = vld [vmem:[#allocation7 + $0x2f0] sm:$0xf]
        %v2462 = vld [vmem:[#allocation7 + $0x2f4] sm:$0xff]
        %v2463 = vld [vmem:[#allocation7 + $0x2fc] sm:$0xf]
        %v2464 = vld [vmem:[#allocation7 + $0x300] sm:$0xff]
        %v2465 = vld [vmem:[#allocation7 + $0x308] sm:$0xf]
        %v2466 = vld [vmem:[#allocation7 + $0x30c] sm:$0xff]
        %v2467 = vld [vmem:[#allocation7 + $0x314] sm:$0xf]
        %v2468 = vld [vmem:[#allocation7 + $0x318] sm:$0xff]
        %v2469 = vld [vmem:[#allocation7 + $0x320] sm:$0xf]
        %v2470 = vld [vmem:[#allocation7 + $0x324] sm:$0xff]
        %v2471 = vld [vmem:[#allocation7 + $0x32c] sm:$0xf]
        %v2472 = vld [vmem:[#allocation7 + $0x330] sm:$0xff]
        %v2473 = vld [vmem:[#allocation7 + $0x338] sm:$0xf]
        %v2474 = vld [vmem:[#allocation7 + $0x33c] sm:$0xff]
        %v2475 = vld [vmem:[#allocation7 + $0x344] sm:$0xf]
        %v2476 = vld [vmem:[#allocation7 + $0x348] sm:$0xff]
        %v2477 = vld [vmem:[#allocation7 + $0x350] sm:$0xf]
        %v2478 = vld [vmem:[#allocation7 + $0x354] sm:$0xff]
        %v2479 = vld [vmem:[#allocation7 + $0x35c] sm:$0xf]
        %v2480 = vld [vmem:[#allocation7 + $0x360] sm:$0xff]
        %v2481 = vld [vmem:[#allocation7 + $0x368] sm:$0xf]
        %v2482 = vld [vmem:[#allocation7 + $0x36c] sm:$0xff]
        %v2483 = vld [vmem:[#allocation7 + $0x374] sm:$0xf]
        %v2484 = vld [vmem:[#allocation7 + $0x378] sm:$0xff]
        %v2485 = vld [vmem:[#allocation7 + $0x380] sm:$0xf]
        %v2486 = vld [vmem:[#allocation7 + $0x384] sm:$0xff]
        %v2487 = vld [vmem:[#allocation7 + $0x38c] sm:$0xf]
        %v2488 = vld [vmem:[#allocation7 + $0x390] sm:$0xff]
        %v2489 = vld [vmem:[#allocation7 + $0x398] sm:$0xf]
        %v2490 = vld [vmem:[#allocation7 + $0x39c] sm:$0xff]
        %v2491 = vld [vmem:[#allocation7 + $0x3a4] sm:$0xf]
        %v2492 = vld [vmem:[#allocation7 + $0x3a8] sm:$0xff]
        %v2493 = vld [vmem:[#allocation7 + $0x3b0] sm:$0xf]
        %v2494 = vld [vmem:[#allocation7 + $0x3b4] sm:$0xff]
        %v2495 = vld [vmem:[#allocation7 + $0x3bc] sm:$0xf]
        %v2496 = vld [vmem:[%s4] sm:$0x7]
        %v2498 = vlaneseq
        %v2499 = vshrl.u32 %v2498, 7
        %v2500 = vsub.s32 0, %v2499
        %v2501 = vrot.slane %v2496, %v2500
        %v2502 = vlaneseq
        %v2503 = vshrl.u32 %v2502, 7
        %v2504 = vsub.s32 1, %v2503
        %v2505 = vrot.slane %v2496, %v2504
        %v2506 = vlaneseq
        %v2507 = vshrl.u32 %v2506, 7
        %v2508 = vsub.s32 2, %v2507
        %v2509 = vrot.slane %v2496, %v2508
        %v2673 = vunpack.c.l.b16 %v2336
        %v2674 = vunpack.c.h.b16 %v2336
        %v2675 = vunpack.c.l.b16 %v2337
        %v2676 = vunpack.c.l.b16 %v2338
        %v2677 = vunpack.c.h.b16 %v2338
        %v2678 = vunpack.c.l.b16 %v2339
        %v2679 = vunpack.c.l.b16 %v2340
        %v2680 = vunpack.c.h.b16 %v2340
        %v2681 = vunpack.c.l.b16 %v2341
        %v2682 = vunpack.c.l.b16 %v2342
        %v2683 = vunpack.c.h.b16 %v2342
        %v2684 = vunpack.c.l.b16 %v2343
        %v2685 = vunpack.c.l.b16 %v2344
        %v2686 = vunpack.c.h.b16 %v2344
        %v2687 = vunpack.c.l.b16 %v2345
        %v2688 = vunpack.c.l.b16 %v2346
        %v2689 = vunpack.c.h.b16 %v2346
        %v2690 = vunpack.c.l.b16 %v2347
        %v2691 = vunpack.c.l.b16 %v2348
        %v2692 = vunpack.c.h.b16 %v2348
        %v2693 = vunpack.c.l.b16 %v2349
        %v2694 = vunpack.c.l.b16 %v2350
        %v2695 = vunpack.c.h.b16 %v2350
        %v2696 = vunpack.c.l.b16 %v2351
        %v2697 = vunpack.c.l.b16 %v2352
        %v2698 = vunpack.c.h.b16 %v2352
        %v2699 = vunpack.c.l.b16 %v2353
        %v2700 = vunpack.c.l.b16 %v2354
        %v2701 = vunpack.c.h.b16 %v2354
        %v2702 = vunpack.c.l.b16 %v2355
        %v2703 = vunpack.c.l.b16 %v2356
        %v2704 = vunpack.c.h.b16 %v2356
        %v2705 = vunpack.c.l.b16 %v2357
        %v2706 = vunpack.c.l.b16 %v2358
        %v2707 = vunpack.c.h.b16 %v2358
        %v2708 = vunpack.c.l.b16 %v2359
        %v2709 = vunpack.c.l.b16 %v2360
        %v2710 = vunpack.c.h.b16 %v2360
        %v2711 = vunpack.c.l.b16 %v2361
        %v2712 = vunpack.c.l.b16 %v2362
        %v2713 = vunpack.c.h.b16 %v2362
        %v2714 = vunpack.c.l.b16 %v2363
        %v2715 = vunpack.c.l.b16 %v2364
        %v2716 = vunpack.c.h.b16 %v2364
        %v2717 = vunpack.c.l.b16 %v2365
        %v2718 = vunpack.c.l.b16 %v2366
        %v2719 = vunpack.c.h.b16 %v2366
        %v2720 = vunpack.c.l.b16 %v2367
        %v2721 = vunpack.c.l.b16 %v2368
        %v2722 = vunpack.c.h.b16 %v2368
        %v2723 = vunpack.c.l.b16 %v2369
        %v2724 = vunpack.c.l.b16 %v2370
        %v2725 = vunpack.c.h.b16 %v2370
        %v2726 = vunpack.c.l.b16 %v2371
        %v2727 = vunpack.c.l.b16 %v2372
        %v2728 = vunpack.c.h.b16 %v2372
        %v2729 = vunpack.c.l.b16 %v2373
        %v2730 = vunpack.c.l.b16 %v2374
        %v2731 = vunpack.c.h.b16 %v2374
        %v2732 = vunpack.c.l.b16 %v2375
        %v2733 = vunpack.c.l.b16 %v2376
        %v2734 = vunpack.c.h.b16 %v2376
        %v2735 = vunpack.c.l.b16 %v2377
        %v2736 = vunpack.c.l.b16 %v2378
        %v2737 = vunpack.c.h.b16 %v2378
        %v2738 = vunpack.c.l.b16 %v2379
        %v2739 = vunpack.c.l.b16 %v2380
        %v2740 = vunpack.c.h.b16 %v2380
        %v2741 = vunpack.c.l.b16 %v2381
        %v2742 = vunpack.c.l.b16 %v2382
        %v2743 = vunpack.c.h.b16 %v2382
        %v2744 = vunpack.c.l.b16 %v2383
        %v2745 = vunpack.c.l.b16 %v2384
        %v2746 = vunpack.c.h.b16 %v2384
        %v2747 = vunpack.c.l.b16 %v2385
        %v2748 = vunpack.c.l.b16 %v2386
        %v2749 = vunpack.c.h.b16 %v2386
        %v2750 = vunpack.c.l.b16 %v2387
        %v2751 = vunpack.c.l.b16 %v2388
        %v2752 = vunpack.c.h.b16 %v2388
        %v2753 = vunpack.c.l.b16 %v2389
        %v2754 = vunpack.c.l.b16 %v2390
        %v2755 = vunpack.c.h.b16 %v2390
        %v2756 = vunpack.c.l.b16 %v2391
        %v2757 = vunpack.c.l.b16 %v2392
        %v2758 = vunpack.c.h.b16 %v2392
        %v2759 = vunpack.c.l.b16 %v2393
        %v2760 = vunpack.c.l.b16 %v2394
        %v2761 = vunpack.c.h.b16 %v2394
        %v2762 = vunpack.c.l.b16 %v2395
        %v2763 = vunpack.c.l.b16 %v2396
        %v2764 = vunpack.c.h.b16 %v2396
        %v2765 = vunpack.c.l.b16 %v2397
        %v2766 = vunpack.c.l.b16 %v2398
        %v2767 = vunpack.c.h.b16 %v2398
        %v2768 = vunpack.c.l.b16 %v2399
        %v2769 = vunpack.c.l.b16 %v2400
        %v2770 = vunpack.c.h.b16 %v2400
        %v2771 = vunpack.c.l.b16 %v2401
        %v2772 = vunpack.c.l.b16 %v2402
        %v2773 = vunpack.c.h.b16 %v2402
        %v2774 = vunpack.c.l.b16 %v2403
        %v2775 = vunpack.c.l.b16 %v2404
        %v2776 = vunpack.c.h.b16 %v2404
        %v2777 = vunpack.c.l.b16 %v2405
        %v2778 = vunpack.c.l.b16 %v2406
        %v2779 = vunpack.c.h.b16 %v2406
        %v2780 = vunpack.c.l.b16 %v2407
        %v2781 = vunpack.c.l.b16 %v2408
        %v2782 = vunpack.c.h.b16 %v2408
        %v2783 = vunpack.c.l.b16 %v2409
        %v2784 = vunpack.c.l.b16 %v2410
        %v2785 = vunpack.c.h.b16 %v2410
        %v2786 = vunpack.c.l.b16 %v2411
        %v2787 = vunpack.c.l.b16 %v2412
        %v2788 = vunpack.c.h.b16 %v2412
        %v2789 = vunpack.c.l.b16 %v2413
        %v2790 = vunpack.c.l.b16 %v2414
        %v2791 = vunpack.c.h.b16 %v2414
        %v2792 = vunpack.c.l.b16 %v2415
        %v2793 = vunpack.c.l.b16 %v2416
        %v2794 = vunpack.c.h.b16 %v2416
        %v2795 = vunpack.c.l.b16 %v2417
        %v2796 = vunpack.c.l.b16 %v2418
        %v2797 = vunpack.c.h.b16 %v2418
        %v2798 = vunpack.c.l.b16 %v2419
        %v2799 = vunpack.c.l.b16 %v2420
        %v2800 = vunpack.c.h.b16 %v2420
        %v2801 = vunpack.c.l.b16 %v2421
        %v2802 = vunpack.c.l.b16 %v2422
        %v2803 = vunpack.c.h.b16 %v2422
        %v2804 = vunpack.c.l.b16 %v2423
        %v2805 = vunpack.c.l.b16 %v2424
        %v2806 = vunpack.c.h.b16 %v2424
        %v2807 = vunpack.c.l.b16 %v2425
        %v2808 = vunpack.c.l.b16 %v2426
        %v2809 = vunpack.c.h.b16 %v2426
        %v2810 = vunpack.c.l.b16 %v2427
        %v2811 = vunpack.c.l.b16 %v2428
        %v2812 = vunpack.c.h.b16 %v2428
        %v2813 = vunpack.c.l.b16 %v2429
        %v2814 = vunpack.c.l.b16 %v2430
        %v2815 = vunpack.c.h.b16 %v2430
        %v2816 = vunpack.c.l.b16 %v2431
        %v2817 = vunpack.c.l.b16 %v2432
        %v2818 = vunpack.c.h.b16 %v2432
        %v2819 = vunpack.c.l.b16 %v2433
        %v2820 = vunpack.c.l.b16 %v2434
        %v2821 = vunpack.c.h.b16 %v2434
        %v2822 = vunpack.c.l.b16 %v2435
        %v2823 = vunpack.c.l.b16 %v2436
        %v2824 = vunpack.c.h.b16 %v2436
        %v2825 = vunpack.c.l.b16 %v2437
        %v2826 = vunpack.c.l.b16 %v2438
        %v2827 = vunpack.c.h.b16 %v2438
        %v2828 = vunpack.c.l.b16 %v2439
        %v2829 = vunpack.c.l.b16 %v2440
        %v2830 = vunpack.c.h.b16 %v2440
        %v2831 = vunpack.c.l.b16 %v2441
        %v2832 = vunpack.c.l.b16 %v2442
        %v2833 = vunpack.c.h.b16 %v2442
        %v2834 = vunpack.c.l.b16 %v2443
        %v2835 = vunpack.c.l.b16 %v2444
        %v2836 = vunpack.c.h.b16 %v2444
        %v2837 = vunpack.c.l.b16 %v2445
        %v2838 = vunpack.c.l.b16 %v2446
        %v2839 = vunpack.c.h.b16 %v2446
        %v2840 = vunpack.c.l.b16 %v2447
        %v2841 = vunpack.c.l.b16 %v2448
        %v2842 = vunpack.c.h.b16 %v2448
        %v2843 = vunpack.c.l.b16 %v2449
        %v2844 = vunpack.c.l.b16 %v2450
        %v2845 = vunpack.c.h.b16 %v2450
        %v2846 = vunpack.c.l.b16 %v2451
        %v2847 = vunpack.c.l.b16 %v2452
        %v2848 = vunpack.c.h.b16 %v2452
        %v2849 = vunpack.c.l.b16 %v2453
        %v2850 = vunpack.c.l.b16 %v2454
        %v2851 = vunpack.c.h.b16 %v2454
        %v2852 = vunpack.c.l.b16 %v2455
        %v2853 = vunpack.c.l.b16 %v2456
        %v2854 = vunpack.c.h.b16 %v2456
        %v2855 = vunpack.c.l.b16 %v2457
        %v2856 = vunpack.c.l.b16 %v2458
        %v2857 = vunpack.c.h.b16 %v2458
        %v2858 = vunpack.c.l.b16 %v2459
        %v2859 = vunpack.c.l.b16 %v2460
        %v2860 = vunpack.c.h.b16 %v2460
        %v2861 = vunpack.c.l.b16 %v2461
        %v2862 = vunpack.c.l.b16 %v2462
        %v2863 = vunpack.c.h.b16 %v2462
        %v2864 = vunpack.c.l.b16 %v2463
        %v2865 = vunpack.c.l.b16 %v2464
        %v2866 = vunpack.c.h.b16 %v2464
        %v2867 = vunpack.c.l.b16 %v2465
        %v2868 = vunpack.c.l.b16 %v2466
        %v2869 = vunpack.c.h.b16 %v2466
        %v2870 = vunpack.c.l.b16 %v2467
        %v2871 = vunpack.c.l.b16 %v2468
        %v2872 = vunpack.c.h.b16 %v2468
        %v2873 = vunpack.c.l.b16 %v2469
        %v2874 = vunpack.c.l.b16 %v2470
        %v2875 = vunpack.c.h.b16 %v2470
        %v2876 = vunpack.c.l.b16 %v2471
        %v2877 = vunpack.c.l.b16 %v2472
        %v2878 = vunpack.c.h.b16 %v2472
        %v2879 = vunpack.c.l.b16 %v2473
        %v2880 = vunpack.c.l.b16 %v2474
        %v2881 = vunpack.c.h.b16 %v2474
        %v2882 = vunpack.c.l.b16 %v2475
        %v2883 = vunpack.c.l.b16 %v2476
        %v2884 = vunpack.c.h.b16 %v2476
        %v2885 = vunpack.c.l.b16 %v2477
        %v2886 = vunpack.c.l.b16 %v2478
        %v2887 = vunpack.c.h.b16 %v2478
        %v2888 = vunpack.c.l.b16 %v2479
        %v2889 = vunpack.c.l.b16 %v2480
        %v2890 = vunpack.c.h.b16 %v2480
        %v2891 = vunpack.c.l.b16 %v2481
        %v2892 = vunpack.c.l.b16 %v2482
        %v2893 = vunpack.c.h.b16 %v2482
        %v2894 = vunpack.c.l.b16 %v2483
        %v2895 = vunpack.c.l.b16 %v2484
        %v2896 = vunpack.c.h.b16 %v2484
        %v2897 = vunpack.c.l.b16 %v2485
        %v2898 = vunpack.c.l.b16 %v2486
        %v2899 = vunpack.c.h.b16 %v2486
        %v2900 = vunpack.c.l.b16 %v2487
        %v2901 = vunpack.c.l.b16 %v2488
        %v2902 = vunpack.c.h.b16 %v2488
        %v2903 = vunpack.c.l.b16 %v2489
        %v2904 = vunpack.c.l.b16 %v2490
        %v2905 = vunpack.c.h.b16 %v2490
        %v2906 = vunpack.c.l.b16 %v2491
        %v2907 = vunpack.c.l.b16 %v2492
        %v2908 = vunpack.c.h.b16 %v2492
        %v2909 = vunpack.c.l.b16 %v2493
        %v2910 = vunpack.c.l.b16 %v2494
        %v2911 = vunpack.c.h.b16 %v2494
        %v2912 = vunpack.c.l.b16 %v2495
        %v2913 = vpack.c.b16 %v2676, %v2673
        %v2914 = vpack.c.b16 %v2677, %v2674
        %v2915 = vpack.c.b16 %v2678, %v2675
        %v2916 = vpack.c.b16 %v2682, %v2679
        %v2917 = vpack.c.b16 %v2683, %v2680
        %v2918 = vpack.c.b16 %v2684, %v2681
        %v2919 = vpack.c.b16 %v2688, %v2685
        %v2920 = vpack.c.b16 %v2689, %v2686
        %v2921 = vpack.c.b16 %v2690, %v2687
        %v2922 = vpack.c.b16 %v2694, %v2691
        %v2923 = vpack.c.b16 %v2695, %v2692
        %v2924 = vpack.c.b16 %v2696, %v2693
        %v2925 = vpack.c.b16 %v2700, %v2697
        %v2926 = vpack.c.b16 %v2701, %v2698
        %v2927 = vpack.c.b16 %v2702, %v2699
        %v2928 = vpack.c.b16 %v2706, %v2703
        %v2929 = vpack.c.b16 %v2707, %v2704
        %v2930 = vpack.c.b16 %v2708, %v2705
        %v2931 = vpack.c.b16 %v2712, %v2709
        %v2932 = vpack.c.b16 %v2713, %v2710
        %v2933 = vpack.c.b16 %v2714, %v2711
        %v2934 = vpack.c.b16 %v2718, %v2715
        %v2935 = vpack.c.b16 %v2719, %v2716
        %v2936 = vpack.c.b16 %v2720, %v2717
        %v2937 = vpack.c.b16 %v2724, %v2721
        %v2938 = vpack.c.b16 %v2725, %v2722
        %v2939 = vpack.c.b16 %v2726, %v2723
        %v2940 = vpack.c.b16 %v2730, %v2727
        %v2941 = vpack.c.b16 %v2731, %v2728
        %v2942 = vpack.c.b16 %v2732, %v2729
        %v2943 = vpack.c.b16 %v2736, %v2733
        %v2944 = vpack.c.b16 %v2737, %v2734
        %v2945 = vpack.c.b16 %v2738, %v2735
        %v2946 = vpack.c.b16 %v2742, %v2739
        %v2947 = vpack.c.b16 %v2743, %v2740
        %v2948 = vpack.c.b16 %v2744, %v2741
        %v2949 = vpack.c.b16 %v2748, %v2745
        %v2950 = vpack.c.b16 %v2749, %v2746
        %v2951 = vpack.c.b16 %v2750, %v2747
        %v2952 = vpack.c.b16 %v2754, %v2751
        %v2953 = vpack.c.b16 %v2755, %v2752
        %v2954 = vpack.c.b16 %v2756, %v2753
        %v2955 = vpack.c.b16 %v2760, %v2757
        %v2956 = vpack.c.b16 %v2761, %v2758
        %v2957 = vpack.c.b16 %v2762, %v2759
        %v2958 = vpack.c.b16 %v2766, %v2763
        %v2959 = vpack.c.b16 %v2767, %v2764
        %v2960 = vpack.c.b16 %v2768, %v2765
        %v2961 = vpack.c.b16 %v2772, %v2769
        %v2962 = vpack.c.b16 %v2773, %v2770
        %v2963 = vpack.c.b16 %v2774, %v2771
        %v2964 = vpack.c.b16 %v2778, %v2775
        %v2965 = vpack.c.b16 %v2779, %v2776
        %v2966 = vpack.c.b16 %v2780, %v2777
        %v2967 = vpack.c.b16 %v2784, %v2781
        %v2968 = vpack.c.b16 %v2785, %v2782
        %v2969 = vpack.c.b16 %v2786, %v2783
        %v2970 = vpack.c.b16 %v2790, %v2787
        %v2971 = vpack.c.b16 %v2791, %v2788
        %v2972 = vpack.c.b16 %v2792, %v2789
        %v2973 = vpack.c.b16 %v2796, %v2793
        %v2974 = vpack.c.b16 %v2797, %v2794
        %v2975 = vpack.c.b16 %v2798, %v2795
        %v2976 = vpack.c.b16 %v2802, %v2799
        %v2977 = vpack.c.b16 %v2803, %v2800
        %v2978 = vpack.c.b16 %v2804, %v2801
        %v2979 = vpack.c.b16 %v2808, %v2805
        %v2980 = vpack.c.b16 %v2809, %v2806
        %v2981 = vpack.c.b16 %v2810, %v2807
        %v2982 = vpack.c.b16 %v2814, %v2811
        %v2983 = vpack.c.b16 %v2815, %v2812
        %v2984 = vpack.c.b16 %v2816, %v2813
        %v2985 = vpack.c.b16 %v2820, %v2817
        %v2986 = vpack.c.b16 %v2821, %v2818
        %v2987 = vpack.c.b16 %v2822, %v2819
        %v2988 = vpack.c.b16 %v2826, %v2823
        %v2989 = vpack.c.b16 %v2827, %v2824
        %v2990 = vpack.c.b16 %v2828, %v2825
        %v2991 = vpack.c.b16 %v2832, %v2829
        %v2992 = vpack.c.b16 %v2833, %v2830
        %v2993 = vpack.c.b16 %v2834, %v2831
        %v2994 = vpack.c.b16 %v2838, %v2835
        %v2995 = vpack.c.b16 %v2839, %v2836
        %v2996 = vpack.c.b16 %v2840, %v2837
        %v2997 = vpack.c.b16 %v2844, %v2841
        %v2998 = vpack.c.b16 %v2845, %v2842
        %v2999 = vpack.c.b16 %v2846, %v2843
        %v3000 = vpack.c.b16 %v2850, %v2847
        %v3001 = vpack.c.b16 %v2851, %v2848
        %v3002 = vpack.c.b16 %v2852, %v2849
        %v3003 = vpack.c.b16 %v2856, %v2853
        %v3004 = vpack.c.b16 %v2857, %v2854
        %v3005 = vpack.c.b16 %v2858, %v2855
        %v3006 = vpack.c.b16 %v2862, %v2859
        %v3007 = vpack.c.b16 %v2863, %v2860
        %v3008 = vpack.c.b16 %v2864, %v2861
        %v3009 = vpack.c.b16 %v2868, %v2865
        %v3010 = vpack.c.b16 %v2869, %v2866
        %v3011 = vpack.c.b16 %v2870, %v2867
        %v3012 = vpack.c.b16 %v2874, %v2871
        %v3013 = vpack.c.b16 %v2875, %v2872
        %v3014 = vpack.c.b16 %v2876, %v2873
        %v3015 = vpack.c.b16 %v2880, %v2877
        %v3016 = vpack.c.b16 %v2881, %v2878
        %v3017 = vpack.c.b16 %v2882, %v2879
        %v3018 = vpack.c.b16 %v2886, %v2883
        %v3019 = vpack.c.b16 %v2887, %v2884
        %v3020 = vpack.c.b16 %v2888, %v2885
        %v3021 = vpack.c.b16 %v2892, %v2889
        %v3022 = vpack.c.b16 %v2893, %v2890
        %v3023 = vpack.c.b16 %v2894, %v2891
        %v3024 = vpack.c.b16 %v2898, %v2895
        %v3025 = vpack.c.b16 %v2899, %v2896
        %v3026 = vpack.c.b16 %v2900, %v2897
        %v3027 = vpack.c.b16 %v2904, %v2901
        %v3028 = vpack.c.b16 %v2905, %v2902
        %v3029 = vpack.c.b16 %v2906, %v2903
        %v3030 = vpack.c.b16 %v2910, %v2907
        %v3031 = vpack.c.b16 %v2911, %v2908
        %v3032 = vpack.c.b16 %v2912, %v2909
        %3153 = vmatprep.subr.bf16.mxu0 %v2914
        %3154 = vmatpush1.bf16.msra.mxu0 %v2913
        %3155 = vmatprep.subr.bf16.mxu0 %v2917
        %3156 = vmatpush1.bf16.msra.mxu0 %v2916
        %3157 = vmatprep.subr.bf16.mxu0 %v2920
        %3158 = vmatpush1.bf16.msra.mxu0 %v2919
        %3159 = vmatprep.subr.bf16.mxu0 %v2923
        %3160 = vmatpush1.bf16.msra.mxu0 %v2922
        %3161 = vmatprep.subr.bf16.mxu0 %v2926
        %3162 = vmatpush1.bf16.msra.mxu0 %v2925
        %3163 = vmatprep.subr.bf16.mxu0 %v2929
        %3164 = vmatpush1.bf16.msra.mxu0 %v2928
        %3165 = vmatprep.subr.bf16.mxu0 %v2932
        %3166 = vmatpush1.bf16.msra.mxu0 %v2931
        %3167 = vmatprep.subr.bf16.mxu0 %v2935
        %3168 = vmatpush1.bf16.msra.mxu0 %v2934
        %3169 = vmatprep.subr.bf16.mxu0 %v2938
        %3170 = vmatpush1.bf16.msra.mxu0 %v2937
        %3171 = vmatprep.subr.bf16.mxu0 %v2941
        %3172 = vmatpush1.bf16.msra.mxu0 %v2940
        %3173 = vmatprep.subr.bf16.mxu0 %v2944
        %3174 = vmatpush1.bf16.msra.mxu0 %v2943
        %3175 = vmatprep.subr.bf16.mxu0 %v2947
        %3176 = vmatpush1.bf16.msra.mxu0 %v2946
        %3177 = vmatprep.subr.bf16.mxu0 %v2950
        %3178 = vmatpush1.bf16.msra.mxu0 %v2949
        %3179 = vmatprep.subr.bf16.mxu0 %v2953
        %3180 = vmatpush1.bf16.msra.mxu0 %v2952
        %3181 = vmatprep.subr.bf16.mxu0 %v2956
        %3182 = vmatpush1.bf16.msra.mxu0 %v2955
        %3183 = vmatprep.subr.bf16.mxu0 %v2959
        %3184 = vmatpush1.bf16.msra.mxu0 %v2958
        %3185 = vmatprep.mubr.bf16.mxu0 %v2332
        %3186 = vmatmul.mubr.bf16.gmra.mrb[0].mxu0 %v2331
        %v3187 = vpop.f32.mrb[0].mxu0
        %v3188 = vadd.f32 %v2501, %v3187
        %v3189 = vpop.f32.mrb[0].mxu0
        %v3190 = vadd.f32 %v2505, %v3189
        %v3191 = vpop.f32.mrb[0].mxu0
        %v3192 = vadd.f32 %v2501, %v3191
        %v3193 = vpop.f32.mrb[0].mxu0
        %v3194 = vadd.f32 %v2505, %v3193
        %3195 = vdwg.mxu0
        %3196 = vmatprep.subr.bf16.mxu0 %v2962
        %3197 = vmatpush1.bf16.msra.mxu0 %v2961
        %3198 = vmatprep.subr.bf16.mxu0 %v2965
        %3199 = vmatpush1.bf16.msra.mxu0 %v2964
        %3200 = vmatprep.subr.bf16.mxu0 %v2968
        %3201 = vmatpush1.bf16.msra.mxu0 %v2967
        %3202 = vmatprep.subr.bf16.mxu0 %v2971
        %3203 = vmatpush1.bf16.msra.mxu0 %v2970
        %3204 = vmatprep.subr.bf16.mxu0 %v2974
        %3205 = vmatpush1.bf16.msra.mxu0 %v2973
        %3206 = vmatprep.subr.bf16.mxu0 %v2977
        %3207 = vmatpush1.bf16.msra.mxu0 %v2976
        %3208 = vmatprep.subr.bf16.mxu0 %v2980
        %3209 = vmatpush1.bf16.msra.mxu0 %v2979
        %3210 = vmatprep.subr.bf16.mxu0 %v2983
        %3211 = vmatpush1.bf16.msra.mxu0 %v2982
        %3212 = vmatprep.subr.bf16.mxu0 %v2986
        %3213 = vmatpush1.bf16.msra.mxu0 %v2985
        %3214 = vmatprep.subr.bf16.mxu0 %v2989
        %3215 = vmatpush1.bf16.msra.mxu0 %v2988
        %3216 = vmatprep.subr.bf16.mxu0 %v2992
        %3217 = vmatpush1.bf16.msra.mxu0 %v2991
        %3218 = vmatprep.subr.bf16.mxu0 %v2995
        %3219 = vmatpush1.bf16.msra.mxu0 %v2994
        %3220 = vmatprep.subr.bf16.mxu0 %v2998
        %3221 = vmatpush1.bf16.msra.mxu0 %v2997
        %3222 = vmatprep.subr.bf16.mxu0 %v3001
        %3223 = vmatpush1.bf16.msra.mxu0 %v3000
        %3224 = vmatprep.subr.bf16.mxu0 %v3004
        %3225 = vmatpush1.bf16.msra.mxu0 %v3003
        %3226 = vmatprep.subr.bf16.mxu0 %v3007
        %3227 = vmatpush1.bf16.msra.mxu0 %v3006
        %3228 = vmatprep.mubr.bf16.mxu0 %v2334
        %3229 = vmatmul.mubr.bf16.gmra.mrb[0].mxu0 %v2333
        %v3230 = vpop.f32.mrb[0].mxu0
        %v3231 = vadd.f32 %v3188, %v3230
        %v3232 = vpop.f32.mrb[0].mxu0
        %v3233 = vadd.f32 %v3190, %v3232
        %v3234 = vpop.f32.mrb[0].mxu0
        %v3235 = vadd.f32 %v3192, %v3234
        %v3236 = vpop.f32.mrb[0].mxu0
        %v3237 = vadd.f32 %v3194, %v3236
        %3238 = vdwg.mxu0
        %3239 = vmatprep.subr.bf16.mxu0 %v3010
        %3240 = vmatpush1.bf16.msra.mxu0 %v3009
        %3241 = vmatprep.subr.bf16.mxu0 %v3013
        %3242 = vmatpush1.bf16.msra.mxu0 %v3012
        %3243 = vmatprep.subr.bf16.mxu0 %v3016
        %3244 = vmatpush1.bf16.msra.mxu0 %v3015
        %3245 = vmatprep.subr.bf16.mxu0 %v3019
        %3246 = vmatpush1.bf16.msra.mxu0 %v3018
        %3247 = vmatprep.subr.bf16.mxu0 %v3022
        %3248 = vmatpush1.bf16.msra.mxu0 %v3021
        %3249 = vmatprep.subr.bf16.mxu0 %v3025
        %3250 = vmatpush1.bf16.msra.mxu0 %v3024
        %3251 = vmatprep.subr.bf16.mxu0 %v3028
        %3252 = vmatpush1.bf16.msra.mxu0 %v3027
        %3253 = vmatprep.subr.bf16.mxu0 %v3031
        %3254 = vmatpush1.bf16.msra.mxu0 %v3030
        %3255 = vmatprep.subr.bf16.mxu0 0
        %3256 = vmatpush1.bf16.msra.mxu0 0
        %3257 = vmatprep.subr.bf16.mxu0 0
        %3258 = vmatpush1.bf16.msra.mxu0 0
        %3259 = vmatprep.subr.bf16.mxu0 0
        %3260 = vmatpush1.bf16.msra.mxu0 0
        %3261 = vmatprep.subr.bf16.mxu0 0
        %3262 = vmatpush1.bf16.msra.mxu0 0
        %3263 = vmatprep.subr.bf16.mxu0 0
        %3264 = vmatpush1.bf16.msra.mxu0 0
        %3265 = vmatprep.subr.bf16.mxu0 0
        %3266 = vmatpush1.bf16.msra.mxu0 0
        %3267 = vmatprep.subr.bf16.mxu0 0
        %3268 = vmatpush1.bf16.msra.mxu0 0
        %3269 = vmatprep.subr.bf16.mxu0 0
        %3270 = vmatpush1.bf16.msra.mxu0 0
        %3271 = vmatprep.mubr.bf16.mxu0 0
        %3272 = vmatmul.mubr.bf16.gmra.mrb[0].mxu0 %v2335
        %v3273 = vpop.f32.mrb[0].mxu0
        %v3274 = vadd.f32 %v3231, %v3273
        %v3275 = vpop.f32.mrb[0].mxu0
        %v3276 = vadd.f32 %v3233, %v3275
        %v3277 = vpop.f32.mrb[0].mxu0
        %v3278 = vadd.f32 %v3235, %v3277
        %v3279 = vpop.f32.mrb[0].mxu0
        %v3280 = vadd.f32 %v3237, %v3279
        %3281 = vdwg.mxu0
        %3282 = vmatprep.subr.bf16.mxu0 0
        %3283 = vmatpush1.bf16.msra.mxu0 %v2915
        %3284 = vmatprep.subr.bf16.mxu0 0
        %3285 = vmatpush1.bf16.msra.mxu0 %v2918
        %3286 = vmatprep.subr.bf16.mxu0 0
        %3287 = vmatpush1.bf16.msra.mxu0 %v2921
        %3288 = vmatprep.subr.bf16.mxu0 0
        %3289 = vmatpush1.bf16.msra.mxu0 %v2924
        %3290 = vmatprep.subr.bf16.mxu0 0
        %3291 = vmatpush1.bf16.msra.mxu0 %v2927
        %3292 = vmatprep.subr.bf16.mxu0 0
        %3293 = vmatpush1.bf16.msra.mxu0 %v2930
        %3294 = vmatprep.subr.bf16.mxu0 0
        %3295 = vmatpush1.bf16.msra.mxu0 %v2933
        %3296 = vmatprep.subr.bf16.mxu0 0
        %3297 = vmatpush1.bf16.msra.mxu0 %v2936
        %3298 = vmatprep.subr.bf16.mxu0 0
        %3299 = vmatpush1.bf16.msra.mxu0 %v2939
        %3300 = vmatprep.subr.bf16.mxu0 0
        %3301 = vmatpush1.bf16.msra.mxu0 %v2942
        %3302 = vmatprep.subr.bf16.mxu0 0
        %3303 = vmatpush1.bf16.msra.mxu0 %v2945
        %3304 = vmatprep.subr.bf16.mxu0 0
        %3305 = vmatpush1.bf16.msra.mxu0 %v2948
        %3306 = vmatprep.subr.bf16.mxu0 0
        %3307 = vmatpush1.bf16.msra.mxu0 %v2951
        %3308 = vmatprep.subr.bf16.mxu0 0
        %3309 = vmatpush1.bf16.msra.mxu0 %v2954
        %3310 = vmatprep.subr.bf16.mxu0 0
        %3311 = vmatpush1.bf16.msra.mxu0 %v2957
        %3312 = vmatprep.subr.bf16.mxu0 0
        %3313 = vmatpush1.bf16.msra.mxu0 %v2960
        %3314 = vmatprep.mubr.bf16.mxu0 %v2332
        %3315 = vmatmul.mubr.bf16.gmra.mrb[0].mxu0 %v2331
        %v3316 = vpop.f32.mrb[0].mxu0
        %v3317 = vadd.f32 %v2509, %v3316
        %v3318 = vpop.f32.mrb[0].mxu0
        %v3319 = vpop.f32.mrb[0].mxu0
        %v3320 = vadd.f32 %v2509, %v3319
        %v3321 = vpop.f32.mrb[0].mxu0
        %3322 = vdwg.mxu0
        %3323 = vmatprep.subr.bf16.mxu0 0
        %3324 = vmatpush1.bf16.msra.mxu0 %v2963
        %3325 = vmatprep.subr.bf16.mxu0 0
        %3326 = vmatpush1.bf16.msra.mxu0 %v2966
        %3327 = vmatprep.subr.bf16.mxu0 0
        %3328 = vmatpush1.bf16.msra.mxu0 %v2969
        %3329 = vmatprep.subr.bf16.mxu0 0
        %3330 = vmatpush1.bf16.msra.mxu0 %v2972
        %3331 = vmatprep.subr.bf16.mxu0 0
        %3332 = vmatpush1.bf16.msra.mxu0 %v2975
        %3333 = vmatprep.subr.bf16.mxu0 0
        %3334 = vmatpush1.bf16.msra.mxu0 %v2978
        %3335 = vmatprep.subr.bf16.mxu0 0
        %3336 = vmatpush1.bf16.msra.mxu0 %v2981
        %3337 = vmatprep.subr.bf16.mxu0 0
        %3338 = vmatpush1.bf16.msra.mxu0 %v2984
        %3339 = vmatprep.subr.bf16.mxu0 0
        %3340 = vmatpush1.bf16.msra.mxu0 %v2987
        %3341 = vmatprep.subr.bf16.mxu0 0
        %3342 = vmatpush1.bf16.msra.mxu0 %v2990
        %3343 = vmatprep.subr.bf16.mxu0 0
        %3344 = vmatpush1.bf16.msra.mxu0 %v2993
        %3345 = vmatprep.subr.bf16.mxu0 0
        %3346 = vmatpush1.bf16.msra.mxu0 %v2996
        %3347 = vmatprep.subr.bf16.mxu0 0
        %3348 = vmatpush1.bf16.msra.mxu0 %v2999
        %3349 = vmatprep.subr.bf16.mxu0 0
        %3350 = vmatpush1.bf16.msra.mxu0 %v3002
        %3351 = vmatprep.subr.bf16.mxu0 0
        %3352 = vmatpush1.bf16.msra.mxu0 %v3005
        %3353 = vmatprep.subr.bf16.mxu0 0
        %3354 = vmatpush1.bf16.msra.mxu0 %v3008
        %3355 = vmatprep.mubr.bf16.mxu0 %v2334
        %3356 = vmatmul.mubr.bf16.gmra.mrb[0].mxu0 %v2333
        %v3357 = vpop.f32.mrb[0].mxu0
        %v3358 = vadd.f32 %v3317, %v3357
        %v3359 = vpop.f32.mrb[0].mxu0
        %v3360 = vpop.f32.mrb[0].mxu0
        %v3361 = vadd.f32 %v3320, %v3360
        %v3362 = vpop.f32.mrb[0].mxu0
        %3363 = vdwg.mxu0
        %3364 = vmatprep.subr.bf16.mxu0 0
        %3365 = vmatpush1.bf16.msra.mxu0 %v3011
        %3366 = vmatprep.subr.bf16.mxu0 0
        %3367 = vmatpush1.bf16.msra.mxu0 %v3014
        %3368 = vmatprep.subr.bf16.mxu0 0
        %3369 = vmatpush1.bf16.msra.mxu0 %v3017
        %3370 = vmatprep.subr.bf16.mxu0 0
        %3371 = vmatpush1.bf16.msra.mxu0 %v3020
        %3372 = vmatprep.subr.bf16.mxu0 0
        %3373 = vmatpush1.bf16.msra.mxu0 %v3023
        %3374 = vmatprep.subr.bf16.mxu0 0
        %3375 = vmatpush1.bf16.msra.mxu0 %v3026
        %3376 = vmatprep.subr.bf16.mxu0 0
        %3377 = vmatpush1.bf16.msra.mxu0 %v3029
        %3378 = vmatprep.subr.bf16.mxu0 0
        %3379 = vmatpush1.bf16.msra.mxu0 %v3032
        %3380 = vmatprep.subr.bf16.mxu0 0
        %3381 = vmatpush1.bf16.msra.mxu0 0
        %3382 = vmatprep.subr.bf16.mxu0 0
        %3383 = vmatpush1.bf16.msra.mxu0 0
        %3384 = vmatprep.subr.bf16.mxu0 0
        %3385 = vmatpush1.bf16.msra.mxu0 0
        %3386 = vmatprep.subr.bf16.mxu0 0
        %3387 = vmatpush1.bf16.msra.mxu0 0
        %3388 = vmatprep.subr.bf16.mxu0 0
        %3389 = vmatpush1.bf16.msra.mxu0 0
        %3390 = vmatprep.subr.bf16.mxu0 0
        %3391 = vmatpush1.bf16.msra.mxu0 0
        %3392 = vmatprep.subr.bf16.mxu0 0
        %3393 = vmatpush1.bf16.msra.mxu0 0
        %3394 = vmatprep.subr.bf16.mxu0 0
        %3395 = vmatpush1.bf16.msra.mxu0 0
        %3396 = vmatprep.mubr.bf16.mxu0 0
        %3397 = vmatmul.mubr.bf16.gmra.mrb[0].mxu0 %v2335
        %v3398 = vpop.f32.mrb[0].mxu0
        %v3399 = vadd.f32 %v3358, %v3398
        %v3400 = vpop.f32.mrb[0].mxu0
        %v3401 = vpop.f32.mrb[0].mxu0
        %v3402 = vadd.f32 %v3361, %v3401
        %v3403 = vpop.f32.mrb[0].mxu0
        %3404 = vdwg.mxu0
        %vm3405 = vcmp.ge.f32.partialorder %v3274, 0.0
        %vm3406 = vcmp.ge.f32.partialorder %v3276, 0.0
        %vm3407 = vcmp.ge.f32.partialorder %v3399, 0.0
        %vm3408 = vcmp.ge.f32.partialorder %v3278, 0.0
        %vm3409 = vcmp.ge.f32.partialorder %v3280, 0.0
        %vm3410 = vcmp.ge.f32.partialorder %v3402, 0.0
        %v3411 = vmul.f32 %v3274, 0.01
        %v3412 = vmul.f32 %v3276, 0.01
        %v3413 = vmul.f32 %v3399, 0.01
        %v3414 = vmul.f32 %v3278, 0.01
        %v3415 = vmul.f32 %v3280, 0.01
        %v3416 = vmul.f32 %v3402, 0.01
        %v3417 = vsel %vm3405, %v3274, %v3411
        %v3418 = vsel %vm3406, %v3276, %v3412
        %v3419 = vsel %vm3407, %v3399, %v3413
        %v3420 = vsel %vm3408, %v3278, %v3414
        %v3421 = vsel %vm3409, %v3280, %v3415
        %v3422 = vsel %vm3410, %v3402, %v3416
        %v3423 = vpack.c.bf16 %v3420, %v3417
        %v3424 = vpack.c.bf16 %v3421, %v3418
        %v3425 = vpack.c.bf16 %v3422, %v3419
        %v3426 = vld [vmem:[#allocation8] sm:$0xf]
        %v3427 = vld [vmem:[#allocation8 + $0x4] sm:$0xf]
        %v3428 = vld [vmem:[#allocation8 + $0x8] sm:$0xf]
        %v3429 = vld [vmem:[#allocation8 + $0xc] sm:$0xf]
        %v3430 = vld [vmem:[#allocation8 + $0x10] sm:$0xf]
        %v3431 = vld [vmem:[#allocation8 + $0x14] sm:$0xf]
        %v3432 = vld [vmem:[#allocation8 + $0x18] sm:$0xf]
        %v3433 = vld [vmem:[#allocation8 + $0x1c] sm:$0xf]
        %v3434 = vld [vmem:[#allocation8 + $0x20] sm:$0xf]
        %v3435 = vld [vmem:[#allocation8 + $0x24] sm:$0xf]
        %v3436 = vld [vmem:[#allocation8 + $0x28] sm:$0xf]
        %v3437 = vld [vmem:[#allocation8 + $0x2c] sm:$0xf]
        %v3438 = vld [vmem:[#allocation8 + $0x30] sm:$0xf]
        %v3439 = vld [vmem:[#allocation8 + $0x34] sm:$0xf]
        %v3440 = vld [vmem:[#allocation8 + $0x38] sm:$0xf]
        %v3441 = vld [vmem:[#allocation8 + $0x3c] sm:$0xf]
        %v3442 = vld [vmem:[#allocation8 + $0x40] sm:$0xf]
        %v3443 = vld [vmem:[#allocation8 + $0x44] sm:$0xf]
        %v3444 = vld [vmem:[#allocation8 + $0x48] sm:$0xf]
        %v3445 = vld [vmem:[#allocation8 + $0x4c] sm:$0xf]
        %v3446 = vld [vmem:[#allocation8 + $0x50] sm:$0xf]
        %v3447 = vld [vmem:[#allocation8 + $0x54] sm:$0xf]
        %v3448 = vld [vmem:[#allocation8 + $0x58] sm:$0xf]
        %v3449 = vld [vmem:[#allocation8 + $0x5c] sm:$0xf]
        %v3450 = vld [vmem:[#allocation8 + $0x60] sm:$0xf]
        %v3451 = vld [vmem:[#allocation8 + $0x64] sm:$0xf]
        %v3452 = vld [vmem:[#allocation8 + $0x68] sm:$0xf]
        %v3453 = vld [vmem:[#allocation8 + $0x6c] sm:$0xf]
        %v3454 = vld [vmem:[#allocation8 + $0x70] sm:$0xf]
        %v3455 = vld [vmem:[#allocation8 + $0x74] sm:$0xf]
        %v3456 = vld [vmem:[#allocation8 + $0x78] sm:$0xf]
        %v3457 = vld [vmem:[#allocation8 + $0x7c] sm:$0xf]
        %v3458 = vld [vmem:[#allocation8 + $0x80] sm:$0xf]
        %v3459 = vld [vmem:[#allocation8 + $0x84] sm:$0xf]
        %v3460 = vld [vmem:[#allocation8 + $0x88] sm:$0xf]
        %v3461 = vld [vmem:[#allocation8 + $0x8c] sm:$0xf]
        %v3462 = vld [vmem:[#allocation8 + $0x90] sm:$0xf]
        %v3463 = vld [vmem:[#allocation8 + $0x94] sm:$0xf]
        %v3464 = vld [vmem:[#allocation8 + $0x98] sm:$0xf]
        %v3465 = vld [vmem:[#allocation8 + $0x9c] sm:$0xf]
        %v3466 = vld [vmem:[#allocation8 + $0xa0] sm:$0xf]
        %v3467 = vld [vmem:[#allocation8 + $0xa4] sm:$0xf]
        %v3468 = vld [vmem:[#allocation8 + $0xa8] sm:$0xf]
        %v3469 = vld [vmem:[#allocation8 + $0xac] sm:$0xf]
        %v3470 = vld [vmem:[#allocation8 + $0xb0] sm:$0xf]
        %v3471 = vld [vmem:[#allocation8 + $0xb4] sm:$0xf]
        %v3472 = vld [vmem:[#allocation8 + $0xb8] sm:$0xf]
        %v3473 = vld [vmem:[#allocation8 + $0xbc] sm:$0xf]
        %v3474 = vld [vmem:[%s6] sm:$0x1]
        %v3476 = vlaneseq
        %v3477 = vshrl.u32 %v3476, 7
        %v3478 = vsub.s32 0, %v3477
        %v3479 = vrot.slane %v3474, %v3478
        %v3529 = vunpack.c.l.b16 %v3426
        %v3530 = vunpack.c.l.b16 %v3427
        %v3531 = vunpack.c.l.b16 %v3428
        %v3532 = vunpack.c.l.b16 %v3429
        %v3533 = vunpack.c.l.b16 %v3430
        %v3534 = vunpack.c.l.b16 %v3431
        %v3535 = vunpack.c.l.b16 %v3432
        %v3536 = vunpack.c.l.b16 %v3433
        %v3537 = vunpack.c.l.b16 %v3434
        %v3538 = vunpack.c.l.b16 %v3435
        %v3539 = vunpack.c.l.b16 %v3436
        %v3540 = vunpack.c.l.b16 %v3437
        %v3541 = vunpack.c.l.b16 %v3438
        %v3542 = vunpack.c.l.b16 %v3439
        %v3543 = vunpack.c.l.b16 %v3440
        %v3544 = vunpack.c.l.b16 %v3441
        %v3545 = vunpack.c.l.b16 %v3442
        %v3546 = vunpack.c.l.b16 %v3443
        %v3547 = vunpack.c.l.b16 %v3444
        %v3548 = vunpack.c.l.b16 %v3445
        %v3549 = vunpack.c.l.b16 %v3446
        %v3550 = vunpack.c.l.b16 %v3447
        %v3551 = vunpack.c.l.b16 %v3448
        %v3552 = vunpack.c.l.b16 %v3449
        %v3553 = vunpack.c.l.b16 %v3450
        %v3554 = vunpack.c.l.b16 %v3451
        %v3555 = vunpack.c.l.b16 %v3452
        %v3556 = vunpack.c.l.b16 %v3453
        %v3557 = vunpack.c.l.b16 %v3454
        %v3558 = vunpack.c.l.b16 %v3455
        %v3559 = vunpack.c.l.b16 %v3456
        %v3560 = vunpack.c.l.b16 %v3457
        %v3561 = vunpack.c.l.b16 %v3458
        %v3562 = vunpack.c.l.b16 %v3459
        %v3563 = vunpack.c.l.b16 %v3460
        %v3564 = vunpack.c.l.b16 %v3461
        %v3565 = vunpack.c.l.b16 %v3462
        %v3566 = vunpack.c.l.b16 %v3463
        %v3567 = vunpack.c.l.b16 %v3464
        %v3568 = vunpack.c.l.b16 %v3465
        %v3569 = vunpack.c.l.b16 %v3466
        %v3570 = vunpack.c.l.b16 %v3467
        %v3571 = vunpack.c.l.b16 %v3468
        %v3572 = vunpack.c.l.b16 %v3469
        %v3573 = vunpack.c.l.b16 %v3470
        %v3574 = vunpack.c.l.b16 %v3471
        %v3575 = vunpack.c.l.b16 %v3472
        %v3576 = vunpack.c.l.b16 %v3473
        %v3577 = vpack.c.b16 %v3530, %v3529
        %v3578 = vpack.c.b16 %v3532, %v3531
        %v3579 = vpack.c.b16 %v3534, %v3533
        %v3580 = vpack.c.b16 %v3536, %v3535
        %v3581 = vpack.c.b16 %v3538, %v3537
        %v3582 = vpack.c.b16 %v3540, %v3539
        %v3583 = vpack.c.b16 %v3542, %v3541
        %v3584 = vpack.c.b16 %v3544, %v3543
        %v3585 = vpack.c.b16 %v3546, %v3545
        %v3586 = vpack.c.b16 %v3548, %v3547
        %v3587 = vpack.c.b16 %v3550, %v3549
        %v3588 = vpack.c.b16 %v3552, %v3551
        %v3589 = vpack.c.b16 %v3554, %v3553
        %v3590 = vpack.c.b16 %v3556, %v3555
        %v3591 = vpack.c.b16 %v3558, %v3557
        %v3592 = vpack.c.b16 %v3560, %v3559
        %v3593 = vpack.c.b16 %v3562, %v3561
        %v3594 = vpack.c.b16 %v3564, %v3563
        %v3595 = vpack.c.b16 %v3566, %v3565
        %v3596 = vpack.c.b16 %v3568, %v3567
        %v3597 = vpack.c.b16 %v3570, %v3569
        %v3598 = vpack.c.b16 %v3572, %v3571
        %v3599 = vpack.c.b16 %v3574, %v3573
        %v3600 = vpack.c.b16 %v3576, %v3575
        %3625 = vmatprep.subr.bf16.mxu0 0
        %3626 = vmatpush1.bf16.msra.mxu0 %v3577
        %3627 = vmatprep.subr.bf16.mxu0 0
        %3628 = vmatpush1.bf16.msra.mxu0 %v3578
        %3629 = vmatprep.subr.bf16.mxu0 0
        %3630 = vmatpush1.bf16.msra.mxu0 %v3579
        %3631 = vmatprep.subr.bf16.mxu0 0
        %3632 = vmatpush1.bf16.msra.mxu0 %v3580
        %3633 = vmatprep.subr.bf16.mxu0 0
        %3634 = vmatpush1.bf16.msra.mxu0 %v3581
        %3635 = vmatprep.subr.bf16.mxu0 0
        %3636 = vmatpush1.bf16.msra.mxu0 %v3582
        %3637 = vmatprep.subr.bf16.mxu0 0
        %3638 = vmatpush1.bf16.msra.mxu0 %v3583
        %3639 = vmatprep.subr.bf16.mxu0 0
        %3640 = vmatpush1.bf16.msra.mxu0 %v3584
        %3641 = vmatprep.subr.bf16.mxu0 0
        %3642 = vmatpush1.bf16.msra.mxu0 %v3585
        %3643 = vmatprep.subr.bf16.mxu0 0
        %3644 = vmatpush1.bf16.msra.mxu0 %v3586
        %3645 = vmatprep.subr.bf16.mxu0 0
        %3646 = vmatpush1.bf16.msra.mxu0 %v3587
        %3647 = vmatprep.subr.bf16.mxu0 0
        %3648 = vmatpush1.bf16.msra.mxu0 %v3588
        %3649 = vmatprep.subr.bf16.mxu0 0
        %3650 = vmatpush1.bf16.msra.mxu0 %v3589
        %3651 = vmatprep.subr.bf16.mxu0 0
        %3652 = vmatpush1.bf16.msra.mxu0 %v3590
        %3653 = vmatprep.subr.bf16.mxu0 0
        %3654 = vmatpush1.bf16.msra.mxu0 %v3591
        %3655 = vmatprep.subr.bf16.mxu0 0
        %3656 = vmatpush1.bf16.msra.mxu0 %v3592
        %3657 = vmatprep.mubr.bf16.mxu0 %v3424
        %3658 = vmatmul.mubr.bf16.gmra.mrb[0].mxu0 %v3423
        %v3659 = vpop.f32.mrb[0].mxu0
        %v3660 = vadd.f32 %v3479, %v3659
        %v3661 = vpop.f32.mrb[0].mxu0
        %v3662 = vpop.f32.mrb[0].mxu0
        %v3663 = vadd.f32 %v3479, %v3662
        %v3664 = vpop.f32.mrb[0].mxu0
        %3665 = vdwg.mxu0
        %3666 = vmatprep.subr.bf16.mxu0 0
        %3667 = vmatpush1.bf16.msra.mxu0 %v3593
        %3668 = vmatprep.subr.bf16.mxu0 0
        %3669 = vmatpush1.bf16.msra.mxu0 %v3594
        %3670 = vmatprep.subr.bf16.mxu0 0
        %3671 = vmatpush1.bf16.msra.mxu0 %v3595
        %3672 = vmatprep.subr.bf16.mxu0 0
        %3673 = vmatpush1.bf16.msra.mxu0 %v3596
        %3674 = vmatprep.subr.bf16.mxu0 0
        %3675 = vmatpush1.bf16.msra.mxu0 %v3597
        %3676 = vmatprep.subr.bf16.mxu0 0
        %3677 = vmatpush1.bf16.msra.mxu0 %v3598
        %3678 = vmatprep.subr.bf16.mxu0 0
        %3679 = vmatpush1.bf16.msra.mxu0 %v3599
        %3680 = vmatprep.subr.bf16.mxu0 0
        %3681 = vmatpush1.bf16.msra.mxu0 %v3600
        %3682 = vmatprep.subr.bf16.mxu0 0
        %3683 = vmatpush1.bf16.msra.mxu0 0
        %3684 = vmatprep.subr.bf16.mxu0 0
        %3685 = vmatpush1.bf16.msra.mxu0 0
        %3686 = vmatprep.subr.bf16.mxu0 0
        %3687 = vmatpush1.bf16.msra.mxu0 0
        %3688 = vmatprep.subr.bf16.mxu0 0
        %3689 = vmatpush1.bf16.msra.mxu0 0
        %3690 = vmatprep.subr.bf16.mxu0 0
        %3691 = vmatpush1.bf16.msra.mxu0 0
        %3692 = vmatprep.subr.bf16.mxu0 0
        %3693 = vmatpush1.bf16.msra.mxu0 0
        %3694 = vmatprep.subr.bf16.mxu0 0
        %3695 = vmatpush1.bf16.msra.mxu0 0
        %3696 = vmatprep.subr.bf16.mxu0 0
        %3697 = vmatpush1.bf16.msra.mxu0 0
        %3698 = vmatprep.mubr.bf16.mxu0 0
        %3699 = vmatmul.mubr.bf16.gmra.mrb[0].mxu0 %v3425
        %v3700 = vpop.f32.mrb[0].mxu0
        %v3701 = vadd.f32 %v3660, %v3700
        %v3702 = vpop.f32.mrb[0].mxu0
        %v3703 = vpop.f32.mrb[0].mxu0
        %v3704 = vadd.f32 %v3663, %v3703
        %v3705 = vpop.f32.mrb[0].mxu0
        %3706 = vdwg.mxu0
        %vm3707 = vcmp.ge.f32.partialorder %v3701, 0.0
        %vm3708 = vcmp.ge.f32.partialorder %v3704, 0.0
        %v3709 = vmul.f32 %v3701, 0.01
        %v3710 = vmul.f32 %v3704, 0.01
        %v3711 = vsel %vm3707, %v3701, %v3709
        %v3712 = vsel %vm3708, %v3704, %v3710
        %v3713 = vpack.c.bf16 %v3712, %v3711
        %v3714 = vld [vmem:[#allocation10] sm:$0xff]
        %v3715 = vld [vmem:[#allocation10 + $0x8] sm:$0xff]
        %v3716 = vld [vmem:[#allocation10 + $0x10] sm:$0xff]
        %v3717 = vld [vmem:[#allocation10 + $0x18] sm:$0xff]
        %v3718 = vld [vmem:[#allocation10 + $0x20] sm:$0xff]
        %v3719 = vld [vmem:[#allocation10 + $0x28] sm:$0xff]
        %v3720 = vld [vmem:[#allocation10 + $0x30] sm:$0xff]
        %v3721 = vld [vmem:[#allocation10 + $0x38] sm:$0xff]
        %v3722 = vld [vmem:[#allocation10 + $0x40] sm:$0xff]
        %v3723 = vld [vmem:[#allocation10 + $0x48] sm:$0xff]
        %v3724 = vld [vmem:[#allocation10 + $0x50] sm:$0xff]
        %v3725 = vld [vmem:[#allocation10 + $0x58] sm:$0xff]
        %v3726 = vld [vmem:[#allocation10 + $0x60] sm:$0xff]
        %v3727 = vld [vmem:[#allocation10 + $0x68] sm:$0xff]
        %v3728 = vld [vmem:[#allocation10 + $0x70] sm:$0xff]
        %v3729 = vld [vmem:[#allocation10 + $0x78] sm:$0xff]
        %v3730 = vld [vmem:[%s8] sm:$0x3]
        %v3732 = vlaneseq
        %v3733 = vshrl.u32 %v3732, 7
        %v3734 = vsub.s32 0, %v3733
        %v3735 = vrot.slane %v3730, %v3734
        %v3736 = vlaneseq
        %v3737 = vshrl.u32 %v3736, 7
        %v3738 = vsub.s32 1, %v3737
        %v3739 = vrot.slane %v3730, %v3738
        %v3758 = vunpack.c.l.b16 %v3714
        %v3759 = vunpack.c.h.b16 %v3714
        %v3760 = vunpack.c.l.b16 %v3715
        %v3761 = vunpack.c.h.b16 %v3715
        %v3762 = vunpack.c.l.b16 %v3716
        %v3763 = vunpack.c.h.b16 %v3716
        %v3764 = vunpack.c.l.b16 %v3717
        %v3765 = vunpack.c.h.b16 %v3717
        %v3766 = vunpack.c.l.b16 %v3718
        %v3767 = vunpack.c.h.b16 %v3718
        %v3768 = vunpack.c.l.b16 %v3719
        %v3769 = vunpack.c.h.b16 %v3719
        %v3770 = vunpack.c.l.b16 %v3720
        %v3771 = vunpack.c.h.b16 %v3720
        %v3772 = vunpack.c.l.b16 %v3721
        %v3773 = vunpack.c.h.b16 %v3721
        %v3774 = vunpack.c.l.b16 %v3722
        %v3775 = vunpack.c.h.b16 %v3722
        %v3776 = vunpack.c.l.b16 %v3723
        %v3777 = vunpack.c.h.b16 %v3723
        %v3778 = vunpack.c.l.b16 %v3724
        %v3779 = vunpack.c.h.b16 %v3724
        %v3780 = vunpack.c.l.b16 %v3725
        %v3781 = vunpack.c.h.b16 %v3725
        %v3782 = vunpack.c.l.b16 %v3726
        %v3783 = vunpack.c.h.b16 %v3726
        %v3784 = vunpack.c.l.b16 %v3727
        %v3785 = vunpack.c.h.b16 %v3727
        %v3786 = vunpack.c.l.b16 %v3728
        %v3787 = vunpack.c.h.b16 %v3728
        %v3788 = vunpack.c.l.b16 %v3729
        %v3789 = vunpack.c.h.b16 %v3729
        %v3790 = vpack.c.b16 %v3760, %v3758
        %v3791 = vpack.c.b16 %v3761, %v3759
        %v3792 = vpack.c.b16 %v3764, %v3762
        %v3793 = vpack.c.b16 %v3765, %v3763
        %v3794 = vpack.c.b16 %v3768, %v3766
        %v3795 = vpack.c.b16 %v3769, %v3767
        %v3796 = vpack.c.b16 %v3772, %v3770
        %v3797 = vpack.c.b16 %v3773, %v3771
        %v3798 = vpack.c.b16 %v3776, %v3774
        %v3799 = vpack.c.b16 %v3777, %v3775
        %v3800 = vpack.c.b16 %v3780, %v3778
        %v3801 = vpack.c.b16 %v3781, %v3779
        %v3802 = vpack.c.b16 %v3784, %v3782
        %v3803 = vpack.c.b16 %v3785, %v3783
        %v3804 = vpack.c.b16 %v3788, %v3786
        %v3805 = vpack.c.b16 %v3789, %v3787
        %3822 = vmatprep.subr.bf16.mxu0 %v3791
        %3823 = vmatpush1.bf16.msra.mxu0 %v3790
        %3824 = vmatprep.subr.bf16.mxu0 %v3793
        %3825 = vmatpush1.bf16.msra.mxu0 %v3792
        %3826 = vmatprep.subr.bf16.mxu0 %v3795
        %3827 = vmatpush1.bf16.msra.mxu0 %v3794
        %3828 = vmatprep.subr.bf16.mxu0 %v3797
        %3829 = vmatpush1.bf16.msra.mxu0 %v3796
        %3830 = vmatprep.subr.bf16.mxu0 %v3799
        %3831 = vmatpush1.bf16.msra.mxu0 %v3798
        %3832 = vmatprep.subr.bf16.mxu0 %v3801
        %3833 = vmatpush1.bf16.msra.mxu0 %v3800
        %3834 = vmatprep.subr.bf16.mxu0 %v3803
        %3835 = vmatpush1.bf16.msra.mxu0 %v3802
        %3836 = vmatprep.subr.bf16.mxu0 %v3805
        %3837 = vmatpush1.bf16.msra.mxu0 %v3804
        %3838 = vmatprep.subr.bf16.mxu0 0
        %3839 = vmatpush1.bf16.msra.mxu0 0
        %3840 = vmatprep.subr.bf16.mxu0 0
        %3841 = vmatpush1.bf16.msra.mxu0 0
        %3842 = vmatprep.subr.bf16.mxu0 0
        %3843 = vmatpush1.bf16.msra.mxu0 0
        %3844 = vmatprep.subr.bf16.mxu0 0
        %3845 = vmatpush1.bf16.msra.mxu0 0
        %3846 = vmatprep.subr.bf16.mxu0 0
        %3847 = vmatpush1.bf16.msra.mxu0 0
        %3848 = vmatprep.subr.bf16.mxu0 0
        %3849 = vmatpush1.bf16.msra.mxu0 0
        %3850 = vmatprep.subr.bf16.mxu0 0
        %3851 = vmatpush1.bf16.msra.mxu0 0
        %3852 = vmatprep.subr.bf16.mxu0 0
        %3853 = vmatpush1.bf16.msra.mxu0 0
        %3854 = vmatprep.mubr.bf16.mxu0 0
        %3855 = vmatmul.mubr.bf16.gmra.mrb[0].mxu0 %v3713
        %v3856 = vpop.f32.mrb[0].mxu0
        %v3857 = vadd.f32 %v3735, %v3856
        %v3858 = vpop.f32.mrb[0].mxu0
        %v3859 = vadd.f32 %v3739, %v3858
        %v3860 = vpop.f32.mrb[0].mxu0
        %v3861 = vadd.f32 %v3735, %v3860
        %v3862 = vpop.f32.mrb[0].mxu0
        %v3863 = vadd.f32 %v3739, %v3862
        %3864 = vdwg.mxu0
        %v3865 = vmul.f32 %v3859, 1.442695
        %v3866 = vpow.pop %v3865
        %v3867 = vmul.f32 %v3863, 1.442695
        %v3868 = vpow.pop %v3867
        %v3869 = vld [vmem:[%s9] sm:$0x1]
        %v3871 = vlaneseq
        %v3872 = vshrl.u32 %v3871, 7
        %v3873 = vsub.s32 0, %v3872
        %v3874 = vrot.slane %v3869, %v3873
        %v3876 = vmul.f32 %v3866, %v3874
        %v3877 = vmul.f32 %v3868, %v3874
        %v3878 = vadd.f32 %v3857, %v3876
        %v3879 = vadd.f32 %v3861, %v3877
        %3880 = vst [vmem:[%s467] sm:$0xff] %v3878
        %3881 = vst [vmem:[%s467 + $0x8] sm:$0xff] %v3879
        %s3882 = smul.u32 %s34, 16
        %v3883 = vlaneseq
        %v3884 = vshrl.u32 %v3883, 7
        %v3885 = vadd.s32 %v3884, 8
        %v3886 = vstv %s3882
        %v3887 = vadd.s32 %v3886, %v3884
        %v3888 = vadd.s32 %v3886, %v3885
        %vm3889 = vcmp.lt.s32.totalorder %v3887, 48
        %vm3890 = vcmp.lt.s32.totalorder %v3888, 48
        %v3891 = vsel %vm3889, 1, 0
        %v3892 = vsel %vm3890, 1, 0
        %v3893 = vcvt.s32.f32 %v3891
        %v3894 = vcvt.s32.f32 %v3892
        %v3895 = vadd.f32 %v3859, 1.0
        %v3896 = vadd.f32 %v3863, 1.0
        %v3897 = vmul.f32 %v3857, %v3857
        %v3898 = vmul.f32 %v3861, %v3861
        %v3899 = vsub.f32 %v3895, %v3897
        %v3900 = vsub.f32 %v3896, %v3898
        %v3901 = vsub.f32 %v3899, %v3866
        %v3902 = vsub.f32 %v3900, %v3868
        %v3903 = vmul.f32 %v3901, %v3893
        %v3904 = vmul.f32 %v3902, %v3894
        %v3905 = vadd.f32 %v3903, %v3904
        %v3906 = vrot.slane %v3905, 4
        %v3907 = vadd.f32 %v3905, %v3906
        %v3908 = vrot.slane %v3907, 2
        %v3909 = vadd.f32 %v3907, %v3908
        %v3910 = vrot.slane %v3909, 1
        %v3911 = vadd.f32 %v3909, %v3910
        %3912 = vst [vmem:[%s474] sm:$0xff] %v3911
        %s3913 = sand.u32 %s257, 1
        %s3914 = scalar_lea.sflag [#allocation4], %s3913
        %s3915 = sand.u32 %s257, 1
        %s3916 = smul.addr %s3915, 16
        %s3917 = scalar_lea.vmem [#allocation11], %s3916
        %s3918 = sand.u32 %s283, 1
        %s3919 = scalar_lea.sflag [#allocation13], %s3918
        %s3920 = sand.u32 %s283, 1
        %s3921 = smul.addr %s3920, 8
        %s3922 = scalar_lea.vmem [#allocation12], %s3921
        // Predicated region
        $region81: #{tpu_custom_call.1} parent=59 // pred_check
          %p3923 = pneg %p267
        $region82: #{tpu_custom_call.1} parent=59 // pred_check_branch
          %3925 = sbr.rel (%p3923) target = $region84
        $region83: #{tpu_custom_call.1} parent=59 // pred_region
          %s3926 = smul.u32 2, %s34
          %s3928 = ssub.s32 256, 256
          %3929 = vsyncadd %s3914, %s3928
          %s3930 = smul.addr %s3926, 128
          %s3931 = scalar_lea.hbm %s10, %s3930
          %s3932 = sshll.u32 %s3917, 4
          %s3933 = int_to_ptr.vmem [resolvable:$true] %s3932
          %3938 = dma.vmem_to_hbm [thread:$0]  %s3933, 256, %s3931, %s3914, 128, 128, 8
        $region84: #{tpu_custom_call.1} parent=59 // pred_fallthru
          _
        // Predicated region
        $region85: #{tpu_custom_call.1} parent=59 // pred_check
          %p3939 = pneg %p293
        $region86: #{tpu_custom_call.1} parent=59 // pred_check_branch
          %3941 = sbr.rel (%p3939) target = $region88
        $region87: #{tpu_custom_call.1} parent=59 // pred_region
          %s3943 = ssub.s32 128, 128
          %3944 = vsyncadd %s3919, %s3943
          %s3945 = smul.addr %s34, 128
          %s3946 = scalar_lea.hbm %s11, %s3945
          %s3948 = sshll.u32 %s3922, 4
          %s3949 = int_to_ptr.vmem [resolvable:$true] %s3948
          %3951 = dma.vmem_to_hbm [thread:$0]  %s3949, 128, %s3946, %s3919
        $region88: #{tpu_custom_call.1} parent=59 // pred_fallthru
          _
      $region60: #{tpu_custom_call.1} parent=5 // pred_fallthru
        _
      %p3952 = scmp.le.s32.totalorder 2, %s29
      // Predicated region
      $region89: #{tpu_custom_call.1} parent=5 // pred_check
        %p3953 = pneg %p3952
      $region90: #{tpu_custom_call.1} parent=5 // pred_check_branch
        %3955 = sbr.rel (%p3953) target = $region92
      $region91: #{tpu_custom_call.1} parent=5 // pred_region
        %s3956 = ssub.s32 %s29, 2
        // Predicated region
        $region93: #{tpu_custom_call.1} parent=91 // pred_check
          %p3957 = pneg %p273
        $region94: #{tpu_custom_call.1} parent=91 // pred_check_branch
          %3959 = sbr.rel (%p3957) target = $region96
        $region95: #{tpu_custom_call.1} parent=91 // pred_region
          %s3960 = sand.u32 %s258, 1
          %s3961 = scalar_lea.sflag [#allocation4], %s3960
          %s3962 = sand.u32 %s258, 1
          %s3963 = smul.addr %s3962, 16
          %s3964 = scalar_lea.vmem [#allocation11], %s3963
          %3965 = dma.done %s3961, 256
        $region96: #{tpu_custom_call.1} parent=91 // pred_fallthru
          _
        // Predicated region
        $region97: #{tpu_custom_call.1} parent=91 // pred_check
          %p3966 = pneg %p299
        $region98: #{tpu_custom_call.1} parent=91 // pred_check_branch
          %3968 = sbr.rel (%p3966) target = $region100
        $region99: #{tpu_custom_call.1} parent=91 // pred_region
          %s3969 = sand.u32 %s284, 1
          %s3970 = scalar_lea.sflag [#allocation13], %s3969
          %s3971 = sand.u32 %s284, 1
          %s3972 = smul.addr %s3971, 8
          %s3973 = scalar_lea.vmem [#allocation12], %s3972
          %3974 = dma.done %s3970, 128
        $region100: #{tpu_custom_call.1} parent=91 // pred_fallthru
          _
      $region92: #{tpu_custom_call.1} parent=5 // pred_fallthru
        _
    $region6: #{tpu_custom_call.1} parent=1 // loop_footer
      %s33 = sadd.s32 1, %s29
    $region7: #{tpu_custom_call.1} parent=1 // loop_footer_branch
      %28 = sbr.rel target = $region3
    $region8: #{tpu_custom_call.1} parent=1 // loop_exit
      _
    %3975 = vsyncpa [#allocation3], 1
    %s3976 = scalar_lea.sflag [#allocation3], 1
    %3977 = vsyncpa %s3976, 1
    %3978 = vsyncpa [#allocation6], 1
    %3979 = vsyncpa [#allocation9], 1
    %3980 = vsyncpa [#allocation4], 1
    %s3981 = scalar_lea.sflag [#allocation4], 1
    %3982 = vsyncpa %s3981, 1
    %3983 = vsyncpa [#allocation13], 1
    %s3984 = scalar_lea.sflag [#allocation13], 1
    %3985 = vsyncpa %s3984, 1

</llo_original>
